<compile_context>
chip_gen: v7x
topology: tpu7x:2x2x1
jax: 0.10.0
libtpu: 0.0.40
codegen_flags: <defaults>
</compile_context>

<pallas_src>
import jax
import jax.numpy as jnp
from jax.experimental import pallas as pl
from jax.experimental.pallas import tpu as pltpu

INPUT_DIM = 3072
HIDDEN_DIMS = [512, 128]
OUTPUT_DIM = 21
OUT_PAD = 128          # lane-dense padded output width (multiple of 128)
BN_EPS = 1e-5


def _round_up(n, m):
    return ((n + m - 1) // m) * m


def _mlp_kernel(x_ref, w1_ref, w2_ref, w3_ref, bias_ref, o_ref):
    # bias_ref: [3, 512] f32 packed shifts/biases:
    #   row 0: t1 (folded BN shift, layer 1)           [512 used]
    #   row 1: t2 (folded BN shift, layer 2, zero-pad) [128 used]
    #   row 2: b3 (output bias, zero-pad)              [128 used; cols >= 21 are 0]
    t1 = bias_ref[0:1, :]                              # (1, 512)
    t2 = bias_ref[1:2, :HIDDEN_DIMS[1]]                # (1, 128)
    b3 = bias_ref[2:3, :OUT_PAD]                       # (1, 128)

    # Layer 1: Linear(3072 -> 512) with BN scale pre-folded into W, + shift, ReLU.
    h1 = jnp.dot(x_ref[...], w1_ref[...], preferred_element_type=jnp.float32)
    h1 = jnp.maximum(h1 + t1, 0.0).astype(jnp.bfloat16)
    # Dropout(0.3): identity in eval mode.

    # Layer 2: Linear(512 -> 128) with folded BN, + shift, ReLU.
    h2 = jnp.dot(h1, w2_ref[...], preferred_element_type=jnp.float32)
    h2 = jnp.maximum(h2 + t2, 0.0).astype(jnp.bfloat16)
    # Dropout(0.3): identity in eval mode.

    # Layer 3: Linear(128 -> 21), N padded to 128 for lane-dense stores.
    o_ref[...] = (jnp.dot(h2, w3_ref[...], preferred_element_type=jnp.float32)
                  + b3)


def committee_classifier_forward(x, params, *, tb_cap=256):
    """x: [B, 3072] float32. params: dict from make_params(). Returns [B, 21] f32."""
    B = x.shape[0]
    x = x.astype(jnp.bfloat16)

    # Batch tile: multiple of 16 (bf16 sublane packing), capped for VMEM headroom
    # on v7x (64 MiB/TC).  2 * (TB*3072*2B) + ~3.2 MiB weights stays well under 32 MiB.
    TB = min(tb_cap, _round_up(B, 16))
    B_pad = _round_up(B, TB)
    if B_pad != B:
        x = jnp.pad(x, ((0, B_pad - B), (0, 0)))
    grid = (B_pad // TB,)

    w1, w2, w3, biases = params["w1"], params["w2"], params["w3"], params["biases"]

    flops = 2 * B_pad * (INPUT_DIM * HIDDEN_DIMS[0]
                         + HIDDEN_DIMS[0] * HIDDEN_DIMS[1]
                         + HIDDEN_DIMS[1] * OUT_PAD)
    bytes_accessed = (x.size * x.dtype.itemsize
                      + w1.size * w1.dtype.itemsize
                      + w2.size * w2.dtype.itemsize
                      + w3.size * w3.dtype.itemsize
                      + biases.size * biases.dtype.itemsize
                      + B_pad * OUT_PAD * 4)

    out = pl.pallas_call(
        _mlp_kernel,
        out_shape=jax.ShapeDtypeStruct((B_pad, OUT_PAD), jnp.float32),
        grid=grid,
        in_specs=[
            # x: tiled on batch (auto double-buffered across grid steps).
            pl.BlockSpec((TB, INPUT_DIM), lambda i: (i, 0)),
            # Weights & packed biases: constant block index -> VMEM-resident.
            pl.BlockSpec((INPUT_DIM, HIDDEN_DIMS[0]), lambda i: (0, 0)),
            pl.BlockSpec((HIDDEN_DIMS[0], HIDDEN_DIMS[1]), lambda i: (0, 0)),
            pl.BlockSpec((HIDDEN_DIMS[1], OUT_PAD), lambda i: (0, 0)),
            pl.BlockSpec((3, HIDDEN_DIMS[0]), lambda i: (0, 0)),
        ],
        out_specs=pl.BlockSpec((TB, OUT_PAD), lambda i: (i, 0)),
        compiler_params=pltpu.CompilerParams(
            dimension_semantics=("parallel",),
            vmem_limit_bytes=32 << 20,
        ),
        cost_estimate=pl.CostEstimate(
            flops=flops, transcendentals=0, bytes_accessed=bytes_accessed),
    )(x, w1, w2, w3, biases)

    return out[:B, :OUTPUT_DIM]


def _fold_linear_bn(w, b, gamma, beta, mean, var, eps=BN_EPS):
    """Fold eval-mode BatchNorm1d into the preceding Linear.

    w: [F_in, F_out] (already transposed from PyTorch's [F_out, F_in]).
    Returns (w * scale, shift) with shift shaped [F_out].
    """
    scale = gamma / jnp.sqrt(var + eps)
    w_folded = w * scale[None, :]
    shift = (b - mean) * scale + beta
    return w_folded, shift


def make_params(key):
    """Deterministic synthetic parameters (same shapes as the PyTorch module)."""
    ks = jax.random.split(key, 12)
    f = jnp.float32
    H1, H2 = HIDDEN_DIMS

    # Linear weights (stored as [F_in, F_out]) and biases.
    w1 = jax.random.normal(ks[0], (INPUT_DIM, H1), f) * 0.02
    b1 = jax.random.normal(ks[1], (H1,), f) * 0.1
    w2 = jax.random.normal(ks[2], (H1, H2), f) * 0.05
    b2 = jax.random.normal(ks[3], (H2,), f) * 0.1
    w3 = jax.random.normal(ks[4], (H2, OUTPUT_DIM), f) * 0.1
    b3 = jax.random.normal(ks[5], (OUTPUT_DIM,), f) * 0.1

    # BatchNorm1d parameters / running stats (non-trivial, deterministic).
    g1 = 1.0 + 0.1 * jax.random.normal(ks[6], (H1,), f)
    be1 = 0.05 * jax.random.normal(ks[7], (H1,), f)
    m1 = 0.1 * jax.random.normal(ks[8], (H1,), f)
    v1 = jnp.abs(1.0 + 0.1 * jax.random.normal(ks[9], (H1,), f))

    g2 = 1.0 + 0.1 * jax.random.normal(ks[10], (H2,), f)
    be2 = 0.05 * jax.random.normal(ks[11], (H2,), f)
    m2 = 0.1 * jnp.sin(jnp.arange(H2, dtype=f))
    v2 = 1.0 + 0.1 * jnp.cos(jnp.arange(H2, dtype=f)) ** 2

    w1f, t1 = _fold_linear_bn(w1, b1, g1, be1, m1, v1)
    w2f, t2 = _fold_linear_bn(w2, b2, g2, be2, m2, v2)

    # Pad last layer to 128 output lanes (zero columns beyond 21).
    w3p = jnp.zeros((H2, OUT_PAD), f).at[:, :OUTPUT_DIM].set(w3)
    b3p = jnp.zeros((OUT_PAD,), f).at[:OUTPUT_DIM].set(b3)

    # Pack all small per-feature vectors into one lane-padded f32 array.
    biases = jnp.zeros((3, H1), f)
    biases = biases.at[0, :H1].set(t1)
    biases = biases.at[1, :H2].set(t2)
    biases = biases.at[2, :OUT_PAD].set(b3p)

    # bf16 weights (f32 accumulation happens in the kernel / MXU).
    return {
        "w1": w1f.astype(jnp.bfloat16),
        "w2": w2f.astype(jnp.bfloat16),
        "w3": w3p.astype(jnp.bfloat16),
        "biases": biases,
    }


def reference_forward(x, params):
    """Pure-JAX reference mirroring the kernel's bf16/f32-acc arithmetic."""
    t1 = params["biases"][0, :HIDDEN_DIMS[0]]
    t2 = params["biases"][1, :HIDDEN_DIMS[1]]
    b3 = params["biases"][2, :OUT_PAD]
    xb = x.astype(jnp.bfloat16)
    h1 = jnp.dot(xb, params["w1"], preferred_element_type=jnp.float32) + t1
    h1 = jnp.maximum(h1, 0.0).astype(jnp.bfloat16)
    h2 = jnp.dot(h1, params["w2"], preferred_element_type=jnp.float32) + t2
    h2 = jnp.maximum(h2, 0.0).astype(jnp.bfloat16)
    out = jnp.dot(h2, params["w3"], preferred_element_type=jnp.float32) + b3
    return out[:, :OUTPUT_DIM]


if __name__ == "__main__":
    key = jax.random.PRNGKey(0)
    k_x, k_p = jax.random.split(key)

    batch = 8
    x = jax.random.normal(k_x, (batch, INPUT_DIM), jnp.float32)
    params = make_params(k_p)

    out = committee_classifier_forward(x, params)
    out = jax.block_until_ready(out)

    ref = reference_forward(x, params)
    assert out.shape == (batch, OUTPUT_DIM), out.shape
    assert jnp.allclose(out, ref, atol=1e-3, rtol=1e-3), "mismatch vs reference"

    print("KERNEL_OK")
</pallas_src>

<mosaic_0001>
module attributes {stable_mosaic.version = 11 : i64} {
  func.func @_mlp_kernel(%arg0: i32, %arg1: memref<16x3072xbf16, #tpu.memory_space<vmem>>, %arg2: memref<3072x512xbf16, #tpu.memory_space<vmem>>, %arg3: memref<512x128xbf16, #tpu.memory_space<vmem>>, %arg4: memref<128x128xbf16, #tpu.memory_space<vmem>>, %arg5: memref<3x512xf32, #tpu.memory_space<vmem>>, %arg6: memref<16x128xf32, #tpu.memory_space<vmem>>) attributes {dimension_semantics = [#tpu.dimension_semantics<parallel>], iteration_bounds = array<i64: 1>, scalar_prefetch = 0 : i64, scratch_operands = 0 : i64, tpu.core_type = #tpu.core_type<tc>, window_params = [{transform_indices = @transform_0, window_bounds = array<i64: 16, 3072>}, {pipeline_mode = #tpu.pipeline_mode<synchronous>, transform_indices = @transform_1, window_bounds = array<i64: 3072, 512>}, {pipeline_mode = #tpu.pipeline_mode<synchronous>, transform_indices = @transform_2, window_bounds = array<i64: 512, 128>}, {pipeline_mode = #tpu.pipeline_mode<synchronous>, transform_indices = @transform_3, window_bounds = array<i64: 128, 128>}, {pipeline_mode = #tpu.pipeline_mode<synchronous>, transform_indices = @transform_4, window_bounds = array<i64: 3, 512>}, {transform_indices = @transform_5, window_bounds = array<i64: 16, 128>}]} {
    %c0 = arith.constant 0 : index
    %c0_0 = arith.constant 0 : index
    %0 = vector.load %arg5[%c0, %c0_0] : memref<3x512xf32, #tpu.memory_space<vmem>>, vector<1x512xf32>
    %c1 = arith.constant 1 : index
    %c0_1 = arith.constant 0 : index
    %1 = vector.load %arg5[%c1, %c0_1] : memref<3x512xf32, #tpu.memory_space<vmem>>, vector<1x128xf32>
    %c2 = arith.constant 2 : index
    %c0_2 = arith.constant 0 : index
    %2 = vector.load %arg5[%c2, %c0_2] : memref<3x512xf32, #tpu.memory_space<vmem>>, vector<1x128xf32>
    %c0_3 = arith.constant 0 : index
    %c0_4 = arith.constant 0 : index
    %3 = vector.load %arg1[%c0_3, %c0_4] : memref<16x3072xbf16, #tpu.memory_space<vmem>>, vector<16x3072xbf16>
    %c0_5 = arith.constant 0 : index
    %c0_6 = arith.constant 0 : index
    %4 = vector.load %arg2[%c0_5, %c0_6] : memref<3072x512xbf16, #tpu.memory_space<vmem>>, vector<3072x512xbf16>
    %cst = arith.constant dense<0.000000e+00> : vector<16x512xf32>
    %5 = tpu.matmul %3, %4, %cst {dimension_numbers = #tpu.dot_dimension_numbers<[1], [0], [0], [1], [0, 0, 1, 1], [], []>} : vector<16x3072xbf16>, vector<3072x512xbf16>, vector<16x512xf32> -> vector<16x512xf32>
    %6 = vector.broadcast %0 : vector<1x512xf32> to vector<16x512xf32>
    %7 = arith.addf %5, %6 : vector<16x512xf32>
    %cst_7 = arith.constant 0.000000e+00 : f32
    %8 = vector.broadcast %cst_7 : f32 to vector<16x512xf32>
    %9 = arith.maximumf %7, %8 : vector<16x512xf32>
    %10 = arith.truncf %9 : vector<16x512xf32> to vector<16x512xbf16>
    %c0_8 = arith.constant 0 : index
    %c0_9 = arith.constant 0 : index
    %11 = vector.load %arg3[%c0_8, %c0_9] : memref<512x128xbf16, #tpu.memory_space<vmem>>, vector<512x128xbf16>
    %cst_10 = arith.constant dense<0.000000e+00> : vector<16x128xf32>
    %12 = tpu.matmul %10, %11, %cst_10 {dimension_numbers = #tpu.dot_dimension_numbers<[1], [0], [0], [1], [0, 0, 1, 1], [], []>} : vector<16x512xbf16>, vector<512x128xbf16>, vector<16x128xf32> -> vector<16x128xf32>
    %13 = vector.broadcast %1 : vector<1x128xf32> to vector<16x128xf32>
    %14 = arith.addf %12, %13 : vector<16x128xf32>
    %cst_11 = arith.constant 0.000000e+00 : f32
    %15 = vector.broadcast %cst_11 : f32 to vector<16x128xf32>
    %16 = arith.maximumf %14, %15 : vector<16x128xf32>
    %17 = arith.truncf %16 : vector<16x128xf32> to vector<16x128xbf16>
    %c0_12 = arith.constant 0 : index
    %c0_13 = arith.constant 0 : index
    %18 = vector.load %arg4[%c0_12, %c0_13] : memref<128x128xbf16, #tpu.memory_space<vmem>>, vector<128x128xbf16>
    %cst_14 = arith.constant dense<0.000000e+00> : vector<16x128xf32>
    %19 = tpu.matmul %17, %18, %cst_14 {dimension_numbers = #tpu.dot_dimension_numbers<[1], [0], [0], [1], [0, 0, 1, 1], [], []>} : vector<16x128xbf16>, vector<128x128xbf16>, vector<16x128xf32> -> vector<16x128xf32>
    %20 = vector.broadcast %2 : vector<1x128xf32> to vector<16x128xf32>
    %21 = arith.addf %19, %20 : vector<16x128xf32>
    %c0_15 = arith.constant 0 : index
    %c0_16 = arith.constant 0 : index
    %22 = vector.load %arg6[%c0_15, %c0_16] : memref<16x128xf32, #tpu.memory_space<vmem>>, vector<16x128xf32>
    tpu.vector_store %arg6[%c0_15, %c0_16], %21 {strides = array<i32>} : memref<16x128xf32, #tpu.memory_space<vmem>>, vector<16x128xf32>,
    return
  }
  func.func @transform_0(%arg0: i32) -> (i32, i32) {
    %c0_i32 = arith.constant 0 : i32
    %c0_i32_0 = arith.constant 0 : i32
    return %arg0, %c0_i32 : i32, i32
  }
  func.func @transform_1(%arg0: i32) -> (i32, i32) {
    %c0_i32 = arith.constant 0 : i32
    %c0_i32_0 = arith.constant 0 : i32
    %c0_i32_1 = arith.constant 0 : i32
    return %c0_i32, %c0_i32_0 : i32, i32
  }
  func.func @transform_2(%arg0: i32) -> (i32, i32) {
    %c0_i32 = arith.constant 0 : i32
    %c0_i32_0 = arith.constant 0 : i32
    %c0_i32_1 = arith.constant 0 : i32
    return %c0_i32, %c0_i32_0 : i32, i32
  }
  func.func @transform_3(%arg0: i32) -> (i32, i32) {
    %c0_i32 = arith.constant 0 : i32
    %c0_i32_0 = arith.constant 0 : i32
    %c0_i32_1 = arith.constant 0 : i32
    return %c0_i32, %c0_i32_0 : i32, i32
  }
  func.func @transform_4(%arg0: i32) -> (i32, i32) {
    %c0_i32 = arith.constant 0 : i32
    %c0_i32_0 = arith.constant 0 : i32
    %c0_i32_1 = arith.constant 0 : i32
    return %c0_i32, %c0_i32_0 : i32, i32
  }
  func.func @transform_5(%arg0: i32) -> (i32, i32) {
    %c0_i32 = arith.constant 0 : i32
    %c0_i32_0 = arith.constant 0 : i32
    return %arg0, %c0_i32 : i32, i32
  }
}

</mosaic_0001>

<llo_original>
// kernel: tpu_custom_call.1
$region0: #{tpu_custom_call.1}
  #allocation0 [shape = 'u32[]', space=smem, size = 0x4, offset = 0x4, fixed_abs, tag = 'smem constant byte address 0x4 - core index']
  #allocation1 [shape = 'u32[144,128]{1,0:T(1,128)}', space=vmem, size = 0x12000, scoped, tag = 'internal scratch']
  %s0 = inlined_call_operand.hbm [shape: bf16[16,3072], index: 0, kind: input, shape index: {}]
  %s1 = inlined_call_operand.hbm [shape: bf16[3072,512], index: 1, kind: input, shape index: {}]
  %s2 = inlined_call_operand.hbm [shape: bf16[512,128], index: 2, kind: input, shape index: {}]
  %s3 = inlined_call_operand.hbm [shape: bf16[128,128], index: 3, kind: input, shape index: {}]
  %s4 = inlined_call_operand.hbm [shape: f32[3,512], index: 4, kind: input, shape index: {}]
  %s5 = inlined_call_operand.hbm [shape: f32[16,128], index: 5, kind: output, shape index: {}]
  %s6 = sld [smem:[#allocation0]]
  $region50: #{tpu_custom_call.1} parent=0
    _
  %s8 = ssub.s32 1, %s6
  %s9 = scalar_select 0, %s8, %s6
  $region1: #{tpu_custom_call.1} parent=0
    #allocation2 [shape = 'u8[98304]{0}', space=vmem, size = 0x18000, scoped, tag = 'input window, operand 0, single buffered']
    #allocation3 [shape = 's32[1]{0}', space=sflag, size = 0x4, scoped, tag = 'scoped memory for tpu_custom_call.1']
    #allocation4 [shape = 's32[1]{0}', space=sflag, size = 0x4, scoped, tag = 'scoped memory for tpu_custom_call.1']
    #allocation5 [shape = 'u8[3145728]{0}', space=vmem, size = 0x300000, scoped, tag = 'input window, operand 1, single buffered']
    #allocation6 [shape = 's32[1]{0}', space=sflag, size = 0x4, scoped, tag = 'scoped memory for tpu_custom_call.1']
    #allocation7 [shape = 'u8[131072]{0}', space=vmem, size = 0x20000, scoped, tag = 'input window, operand 2, single buffered']
    #allocation8 [shape = 'u8[32768]{0}', space=vmem, size = 0x8000, scoped, tag = 'input window, operand 3, single buffered']
    #allocation9 [shape = 's32[1]{0}', space=sflag, size = 0x4, scoped, tag = 'scoped memory for tpu_custom_call.1']
    #allocation10 [shape = 'u8[8192]{0}', space=vmem, size = 0x2000, scoped, tag = 'input window, operand 4, single buffered']
    #allocation11 [shape = 'u8[8192]{0}', space=vmem, size = 0x2000, scoped, tag = 'output window, operand 0, single buffered']
    %10 = vsyncpa [#allocation3], 0
    %11 = vsyncpa [#allocation6], 0
    %12 = vsyncpa [#allocation9], 0
    %13 = vsyncpa [#allocation4], 0
    // Predicated region
    $region2: #{tpu_custom_call.1} parent=1 // pred_check
      _
    $region3: #{tpu_custom_call.1} parent=1 // pred_check_branch
      %15 = sbr.rel (0) target = $region5
    $region4: #{tpu_custom_call.1} parent=1 // pred_region
      %s17 = ssub.s32 3072, 3072
      %18 = vsyncadd [#allocation3], %s17
      %s19 = sshll.u32 [#allocation2], 4
      %s20 = int_to_ptr.vmem [resolvable:$true] %s19
      %25 = dma.hbm_to_vmem [thread:$0]  %s0, 3072, %s20, [#allocation3], 1536, 1536, 96
    $region5: #{tpu_custom_call.1} parent=1 // pred_fallthru
      _
    // Predicated region
    $region6: #{tpu_custom_call.1} parent=1 // pred_check
      _
    $region7: #{tpu_custom_call.1} parent=1 // pred_check_branch
      %27 = sbr.rel (0) target = $region9
    $region8: #{tpu_custom_call.1} parent=1 // pred_region
      %s29 = ssub.s32 98304, 98304
      %30 = vsyncadd [#allocation6], %s29
      %s31 = sshll.u32 [#allocation5], 4
      %s32 = int_to_ptr.vmem [resolvable:$true] %s31
      %37 = dma.hbm_to_vmem [thread:$0]  %s1, 98304, %s32, [#allocation6], 256, 256, 16
    $region9: #{tpu_custom_call.1} parent=1 // pred_fallthru
      _
    // Predicated region
    $region10: #{tpu_custom_call.1} parent=1 // pred_check
      _
    $region11: #{tpu_custom_call.1} parent=1 // pred_check_branch
      %39 = sbr.rel (0) target = $region13
    $region12: #{tpu_custom_call.1} parent=1 // pred_region
      %s41 = ssub.s32 4096, 4096
      %42 = vsyncadd [#allocation6], %s41
      %s43 = sshll.u32 [#allocation7], 4
      %s44 = int_to_ptr.vmem [resolvable:$true] %s43
      %49 = dma.hbm_to_vmem [thread:$0]  %s2, 4096, %s44, [#allocation6], 64, 64, 4
    $region13: #{tpu_custom_call.1} parent=1 // pred_fallthru
      _
    // Predicated region
    $region14: #{tpu_custom_call.1} parent=1 // pred_check
      _
    $region15: #{tpu_custom_call.1} parent=1 // pred_check_branch
      %51 = sbr.rel (0) target = $region17
    $region16: #{tpu_custom_call.1} parent=1 // pred_region
      %s53 = ssub.s32 1024, 1024
      %54 = vsyncadd [#allocation9], %s53
      %s55 = sshll.u32 [#allocation8], 4
      %s56 = int_to_ptr.vmem [resolvable:$true] %s55
      %61 = dma.hbm_to_vmem [thread:$0]  %s3, 1024, %s56, [#allocation9], 64, 64, 4
    $region17: #{tpu_custom_call.1} parent=1 // pred_fallthru
      _
    // Predicated region
    $region18: #{tpu_custom_call.1} parent=1 // pred_check
      _
    $region19: #{tpu_custom_call.1} parent=1 // pred_check_branch
      %63 = sbr.rel (0) target = $region21
    $region20: #{tpu_custom_call.1} parent=1 // pred_region
      %s65 = ssub.s32 256, 256
      %66 = vsyncadd [#allocation9], %s65
      %s68 = sshll.u32 [#allocation10], 4
      %s69 = int_to_ptr.vmem [resolvable:$true] %s68
      %71 = dma.hbm_to_vmem [thread:$0]  %s4, 256, %s69, [#allocation9]
    $region21: #{tpu_custom_call.1} parent=1 // pred_fallthru
      _
    // Predicated region
    $region22: #{tpu_custom_call.1} parent=1 // pred_check
      _
    $region23: #{tpu_custom_call.1} parent=1 // pred_check_branch
      %73 = sbr.rel (0) target = $region25
    $region24: #{tpu_custom_call.1} parent=1 // pred_region
      %74 = dma.done [#allocation3], 3072
    $region25: #{tpu_custom_call.1} parent=1 // pred_fallthru
      _
    // Predicated region
    $region26: #{tpu_custom_call.1} parent=1 // pred_check
      _
    $region27: #{tpu_custom_call.1} parent=1 // pred_check_branch
      %76 = sbr.rel (0) target = $region29
    $region28: #{tpu_custom_call.1} parent=1 // pred_region
      %77 = dma.done [#allocation6], 98304
    $region29: #{tpu_custom_call.1} parent=1 // pred_fallthru
      _
    // Predicated region
    $region30: #{tpu_custom_call.1} parent=1 // pred_check
      _
    $region31: #{tpu_custom_call.1} parent=1 // pred_check_branch
      %79 = sbr.rel (0) target = $region33
    $region32: #{tpu_custom_call.1} parent=1 // pred_region
      %80 = dma.done [#allocation6], 4096
    $region33: #{tpu_custom_call.1} parent=1 // pred_fallthru
      _
    // Predicated region
    $region34: #{tpu_custom_call.1} parent=1 // pred_check
      _
    $region35: #{tpu_custom_call.1} parent=1 // pred_check_branch
      %82 = sbr.rel (0) target = $region37
    $region36: #{tpu_custom_call.1} parent=1 // pred_region
      %83 = dma.done [#allocation9], 1024
    $region37: #{tpu_custom_call.1} parent=1 // pred_fallthru
      _
    // Predicated region
    $region38: #{tpu_custom_call.1} parent=1 // pred_check
      _
    $region39: #{tpu_custom_call.1} parent=1 // pred_check_branch
      %85 = sbr.rel (0) target = $region41
    $region40: #{tpu_custom_call.1} parent=1 // pred_region
      %86 = dma.done [#allocation9], 256
    $region41: #{tpu_custom_call.1} parent=1 // pred_fallthru
      _
    %v88 = vld [vmem:[#allocation10] ss:$4 sm:$0xf]
    %v89 = vld [vmem:[#allocation10 + $0x1] sm:$0x1]
    %v90 = vld [vmem:[#allocation10 + $0x2] sm:$0x1]
    %v91 = vld [vmem:[#allocation2] sm:$0xff]
    %v92 = vld [vmem:[#allocation2 + $0x8] sm:$0xff]
    %v93 = vld [vmem:[#allocation2 + $0x10] sm:$0xff]
    %v94 = vld [vmem:[#allocation2 + $0x18] sm:$0xff]
    %v95 = vld [vmem:[#allocation2 + $0x20] sm:$0xff]
    %v96 = vld [vmem:[#allocation2 + $0x28] sm:$0xff]
    %v97 = vld [vmem:[#allocation2 + $0x30] sm:$0xff]
    %v98 = vld [vmem:[#allocation2 + $0x38] sm:$0xff]
    %v99 = vld [vmem:[#allocation2 + $0x40] sm:$0xff]
    %v100 = vld [vmem:[#allocation2 + $0x48] sm:$0xff]
    %v101 = vld [vmem:[#allocation2 + $0x50] sm:$0xff]
    %v102 = vld [vmem:[#allocation2 + $0x58] sm:$0xff]
    %v103 = vld [vmem:[#allocation2 + $0x60] sm:$0xff]
    %v104 = vld [vmem:[#allocation2 + $0x68] sm:$0xff]
    %v105 = vld [vmem:[#allocation2 + $0x70] sm:$0xff]
    %v106 = vld [vmem:[#allocation2 + $0x78] sm:$0xff]
    %v107 = vld [vmem:[#allocation2 + $0x80] sm:$0xff]
    %v108 = vld [vmem:[#allocation2 + $0x88] sm:$0xff]
    %v109 = vld [vmem:[#allocation2 + $0x90] sm:$0xff]
    %v110 = vld [vmem:[#allocation2 + $0x98] sm:$0xff]
    %v111 = vld [vmem:[#allocation2 + $0xa0] sm:$0xff]
    %v112 = vld [vmem:[#allocation2 + $0xa8] sm:$0xff]
    %v113 = vld [vmem:[#allocation2 + $0xb0] sm:$0xff]
    %v114 = vld [vmem:[#allocation2 + $0xb8] sm:$0xff]
    %v115 = vld [vmem:[#allocation5] sm:$0xff]
    %v116 = vld [vmem:[#allocation5 + $0x8] sm:$0xff]
    %v117 = vld [vmem:[#allocation5 + $0x10] sm:$0xff]
    %v118 = vld [vmem:[#allocation5 + $0x18] sm:$0xff]
    %v119 = vld [vmem:[#allocation5 + $0x20] sm:$0xff]
    %v120 = vld [vmem:[#allocation5 + $0x28] sm:$0xff]
    %v121 = vld [vmem:[#allocation5 + $0x30] sm:$0xff]
    %v122 = vld [vmem:[#allocation5 + $0x38] sm:$0xff]
    %v123 = vld [vmem:[#allocation5 + $0x40] sm:$0xff]
    %v124 = vld [vmem:[#allocation5 + $0x48] sm:$0xff]
    %v125 = vld [vmem:[#allocation5 + $0x50] sm:$0xff]
    %v126 = vld [vmem:[#allocation5 + $0x58] sm:$0xff]
    %v127 = vld [vmem:[#allocation5 + $0x60] sm:$0xff]
    %v128 = vld [vmem:[#allocation5 + $0x68] sm:$0xff]
    %v129 = vld [vmem:[#allocation5 + $0x70] sm:$0xff]
    %v130 = vld [vmem:[#allocation5 + $0x78] sm:$0xff]
    %v131 = vld [vmem:[#allocation5 + $0x80] sm:$0xff]
    %v132 = vld [vmem:[#allocation5 + $0x88] sm:$0xff]
    %v133 = vld [vmem:[#allocation5 + $0x90] sm:$0xff]
    %v134 = vld [vmem:[#allocation5 + $0x98] sm:$0xff]
    %v135 = vld [vmem:[#allocation5 + $0xa0] sm:$0xff]
    %v136 = vld [vmem:[#allocation5 + $0xa8] sm:$0xff]
    %v137 = vld [vmem:[#allocation5 + $0xb0] sm:$0xff]
    %v138 = vld [vmem:[#allocation5 + $0xb8] sm:$0xff]
    %v139 = vld [vmem:[#allocation5 + $0xc0] sm:$0xff]
    %v140 = vld [vmem:[#allocation5 + $0xc8] sm:$0xff]
    %v141 = vld [vmem:[#allocation5 + $0xd0] sm:$0xff]
    %v142 = vld [vmem:[#allocation5 + $0xd8] sm:$0xff]
    %v143 = vld [vmem:[#allocation5 + $0xe0] sm:$0xff]
    %v144 = vld [vmem:[#allocation5 + $0xe8] sm:$0xff]
    %v145 = vld [vmem:[#allocation5 + $0xf0] sm:$0xff]
    %v146 = vld [vmem:[#allocation5 + $0xf8] sm:$0xff]
    %v147 = vld [vmem:[#allocation5 + $0x100] sm:$0xff]
    %v148 = vld [vmem:[#allocation5 + $0x108] sm:$0xff]
    %v149 = vld [vmem:[#allocation5 + $0x110] sm:$0xff]
    %v150 = vld [vmem:[#allocation5 + $0x118] sm:$0xff]
    %v151 = vld [vmem:[#allocation5 + $0x120] sm:$0xff]
    %v152 = vld [vmem:[#allocation5 + $0x128] sm:$0xff]
    %v153 = vld [vmem:[#allocation5 + $0x130] sm:$0xff]
    %v154 = vld [vmem:[#allocation5 + $0x138] sm:$0xff]
    %v155 = vld [vmem:[#allocation5 + $0x140] sm:$0xff]
    %v156 = vld [vmem:[#allocation5 + $0x148] sm:$0xff]
    %v157 = vld [vmem:[#allocation5 + $0x150] sm:$0xff]
    %v158 = vld [vmem:[#allocation5 + $0x158] sm:$0xff]
    %v159 = vld [vmem:[#allocation5 + $0x160] sm:$0xff]
    %v160 = vld [vmem:[#allocation5 + $0x168] sm:$0xff]
    %v161 = vld [vmem:[#allocation5 + $0x170] sm:$0xff]
    %v162 = vld [vmem:[#allocation5 + $0x178] sm:$0xff]
    %v163 = vld [vmem:[#allocation5 + $0x180] sm:$0xff]
    %v164 = vld [vmem:[#allocation5 + $0x188] sm:$0xff]
    %v165 = vld [vmem:[#allocation5 + $0x190] sm:$0xff]
    %v166 = vld [vmem:[#allocation5 + $0x198] sm:$0xff]
    %v167 = vld [vmem:[#allocation5 + $0x1a0] sm:$0xff]
    %v168 = vld [vmem:[#allocation5 + $0x1a8] sm:$0xff]
    %v169 = vld [vmem:[#allocation5 + $0x1b0] sm:$0xff]
    %v170 = vld [vmem:[#allocation5 + $0x1b8] sm:$0xff]
    %v171 = vld [vmem:[#allocation5 + $0x1c0] sm:$0xff]
    %v172 = vld [vmem:[#allocation5 + $0x1c8] sm:$0xff]
    %v173 = vld [vmem:[#allocation5 + $0x1d0] sm:$0xff]
    %v174 = vld [vmem:[#allocation5 + $0x1d8] sm:$0xff]
    %v175 = vld [vmem:[#allocation5 + $0x1e0] sm:$0xff]
    %v176 = vld [vmem:[#allocation5 + $0x1e8] sm:$0xff]
    %v177 = vld [vmem:[#allocation5 + $0x1f0] sm:$0xff]
    %v178 = vld [vmem:[#allocation5 + $0x1f8] sm:$0xff]
    %v179 = vld [vmem:[#allocation5 + $0x200] sm:$0xff]
    %v180 = vld [vmem:[#allocation5 + $0x208] sm:$0xff]
    %v181 = vld [vmem:[#allocation5 + $0x210] sm:$0xff]
    %v182 = vld [vmem:[#allocation5 + $0x218] sm:$0xff]
    %v183 = vld [vmem:[#allocation5 + $0x220] sm:$0xff]
    %v184 = vld [vmem:[#allocation5 + $0x228] sm:$0xff]
    %v185 = vld [vmem:[#allocation5 + $0x230] sm:$0xff]
    %v186 = vld [vmem:[#allocation5 + $0x238] sm:$0xff]
    %v187 = vld [vmem:[#allocation5 + $0x240] sm:$0xff]
    %v188 = vld [vmem:[#allocation5 + $0x248] sm:$0xff]
    %v189 = vld [vmem:[#allocation5 + $0x250] sm:$0xff]
    %v190 = vld [vmem:[#allocation5 + $0x258] sm:$0xff]
    %v191 = vld [vmem:[#allocation5 + $0x260] sm:$0xff]
    %v192 = vld [vmem:[#allocation5 + $0x268] sm:$0xff]
    %v193 = vld [vmem:[#allocation5 + $0x270] sm:$0xff]
    %v194 = vld [vmem:[#allocation5 + $0x278] sm:$0xff]
    %v195 = vld [vmem:[#allocation5 + $0x280] sm:$0xff]
    %v196 = vld [vmem:[#allocation5 + $0x288] sm:$0xff]
    %v197 = vld [vmem:[#allocation5 + $0x290] sm:$0xff]
    %v198 = vld [vmem:[#allocation5 + $0x298] sm:$0xff]
    %v199 = vld [vmem:[#allocation5 + $0x2a0] sm:$0xff]
    %v200 = vld [vmem:[#allocation5 + $0x2a8] sm:$0xff]
    %v201 = vld [vmem:[#allocation5 + $0x2b0] sm:$0xff]
    %v202 = vld [vmem:[#allocation5 + $0x2b8] sm:$0xff]
    %v203 = vld [vmem:[#allocation5 + $0x2c0] sm:$0xff]
    %v204 = vld [vmem:[#allocation5 + $0x2c8] sm:$0xff]
    %v205 = vld [vmem:[#allocation5 + $0x2d0] sm:$0xff]
    %v206 = vld [vmem:[#allocation5 + $0x2d8] sm:$0xff]
    %v207 = vld [vmem:[#allocation5 + $0x2e0] sm:$0xff]
    %v208 = vld [vmem:[#allocation5 + $0x2e8] sm:$0xff]
    %v209 = vld [vmem:[#allocation5 + $0x2f0] sm:$0xff]
    %v210 = vld [vmem:[#allocation5 + $0x2f8] sm:$0xff]
    %v211 = vld [vmem:[#allocation5 + $0x300] sm:$0xff]
    %v212 = vld [vmem:[#allocation5 + $0x308] sm:$0xff]
    %v213 = vld [vmem:[#allocation5 + $0x310] sm:$0xff]
    %v214 = vld [vmem:[#allocation5 + $0x318] sm:$0xff]
    %v215 = vld [vmem:[#allocation5 + $0x320] sm:$0xff]
    %v216 = vld [vmem:[#allocation5 + $0x328] sm:$0xff]
    %v217 = vld [vmem:[#allocation5 + $0x330] sm:$0xff]
    %v218 = vld [vmem:[#allocation5 + $0x338] sm:$0xff]
    %v219 = vld [vmem:[#allocation5 + $0x340] sm:$0xff]
    %v220 = vld [vmem:[#allocation5 + $0x348] sm:$0xff]
    %v221 = vld [vmem:[#allocation5 + $0x350] sm:$0xff]
    %v222 = vld [vmem:[#allocation5 + $0x358] sm:$0xff]
    %v223 = vld [vmem:[#allocation5 + $0x360] sm:$0xff]
    %v224 = vld [vmem:[#allocation5 + $0x368] sm:$0xff]
    %v225 = vld [vmem:[#allocation5 + $0x370] sm:$0xff]
    %v226 = vld [vmem:[#allocation5 + $0x378] sm:$0xff]
    %v227 = vld [vmem:[#allocation5 + $0x380] sm:$0xff]
    %v228 = vld [vmem:[#allocation5 + $0x388] sm:$0xff]
    %v229 = vld [vmem:[#allocation5 + $0x390] sm:$0xff]
    %v230 = vld [vmem:[#allocation5 + $0x398] sm:$0xff]
    %v231 = vld [vmem:[#allocation5 + $0x3a0] sm:$0xff]
    %v232 = vld [vmem:[#allocation5 + $0x3a8] sm:$0xff]
    %v233 = vld [vmem:[#allocation5 + $0x3b0] sm:$0xff]
    %v234 = vld [vmem:[#allocation5 + $0x3b8] sm:$0xff]
    %v235 = vld [vmem:[#allocation5 + $0x3c0] sm:$0xff]
    %v236 = vld [vmem:[#allocation5 + $0x3c8] sm:$0xff]
    %v237 = vld [vmem:[#allocation5 + $0x3d0] sm:$0xff]
    %v238 = vld [vmem:[#allocation5 + $0x3d8] sm:$0xff]
    %v239 = vld [vmem:[#allocation5 + $0x3e0] sm:$0xff]
    %v240 = vld [vmem:[#allocation5 + $0x3e8] sm:$0xff]
    %v241 = vld [vmem:[#allocation5 + $0x3f0] sm:$0xff]
    %v242 = vld [vmem:[#allocation5 + $0x3f8] sm:$0xff]
    %v243 = vld [vmem:[#allocation5 + $0x400] sm:$0xff]
    %v244 = vld [vmem:[#allocation5 + $0x408] sm:$0xff]
    %v245 = vld [vmem:[#allocation5 + $0x410] sm:$0xff]
    %v246 = vld [vmem:[#allocation5 + $0x418] sm:$0xff]
    %v247 = vld [vmem:[#allocation5 + $0x420] sm:$0xff]
    %v248 = vld [vmem:[#allocation5 + $0x428] sm:$0xff]
    %v249 = vld [vmem:[#allocation5 + $0x430] sm:$0xff]
    %v250 = vld [vmem:[#allocation5 + $0x438] sm:$0xff]
    %v251 = vld [vmem:[#allocation5 + $0x440] sm:$0xff]
    %v252 = vld [vmem:[#allocation5 + $0x448] sm:$0xff]
    %v253 = vld [vmem:[#allocation5 + $0x450] sm:$0xff]
    %v254 = vld [vmem:[#allocation5 + $0x458] sm:$0xff]
    %v255 = vld [vmem:[#allocation5 + $0x460] sm:$0xff]
    %v256 = vld [vmem:[#allocation5 + $0x468] sm:$0xff]
    %v257 = vld [vmem:[#allocation5 + $0x470] sm:$0xff]
    %v258 = vld [vmem:[#allocation5 + $0x478] sm:$0xff]
    %v259 = vld [vmem:[#allocation5 + $0x480] sm:$0xff]
    %v260 = vld [vmem:[#allocation5 + $0x488] sm:$0xff]
    %v261 = vld [vmem:[#allocation5 + $0x490] sm:$0xff]
    %v262 = vld [vmem:[#allocation5 + $0x498] sm:$0xff]
    %v263 = vld [vmem:[#allocation5 + $0x4a0] sm:$0xff]
    %v264 = vld [vmem:[#allocation5 + $0x4a8] sm:$0xff]
    %v265 = vld [vmem:[#allocation5 + $0x4b0] sm:$0xff]
    %v266 = vld [vmem:[#allocation5 + $0x4b8] sm:$0xff]
    %v267 = vld [vmem:[#allocation5 + $0x4c0] sm:$0xff]
    %v268 = vld [vmem:[#allocation5 + $0x4c8] sm:$0xff]
    %v269 = vld [vmem:[#allocation5 + $0x4d0] sm:$0xff]
    %v270 = vld [vmem:[#allocation5 + $0x4d8] sm:$0xff]
    %v271 = vld [vmem:[#allocation5 + $0x4e0] sm:$0xff]
    %v272 = vld [vmem:[#allocation5 + $0x4e8] sm:$0xff]
    %v273 = vld [vmem:[#allocation5 + $0x4f0] sm:$0xff]
    %v274 = vld [vmem:[#allocation5 + $0x4f8] sm:$0xff]
    %v275 = vld [vmem:[#allocation5 + $0x500] sm:$0xff]
    %v276 = vld [vmem:[#allocation5 + $0x508] sm:$0xff]
    %v277 = vld [vmem:[#allocation5 + $0x510] sm:$0xff]
    %v278 = vld [vmem:[#allocation5 + $0x518] sm:$0xff]
    %v279 = vld [vmem:[#allocation5 + $0x520] sm:$0xff]
    %v280 = vld [vmem:[#allocation5 + $0x528] sm:$0xff]
    %v281 = vld [vmem:[#allocation5 + $0x530] sm:$0xff]
    %v282 = vld [vmem:[#allocation5 + $0x538] sm:$0xff]
    %v283 = vld [vmem:[#allocation5 + $0x540] sm:$0xff]
    %v284 = vld [vmem:[#allocation5 + $0x548] sm:$0xff]
    %v285 = vld [vmem:[#allocation5 + $0x550] sm:$0xff]
    %v286 = vld [vmem:[#allocation5 + $0x558] sm:$0xff]
    %v287 = vld [vmem:[#allocation5 + $0x560] sm:$0xff]
    %v288 = vld [vmem:[#allocation5 + $0x568] sm:$0xff]
    %v289 = vld [vmem:[#allocation5 + $0x570] sm:$0xff]
    %v290 = vld [vmem:[#allocation5 + $0x578] sm:$0xff]
    %v291 = vld [vmem:[#allocation5 + $0x580] sm:$0xff]
    %v292 = vld [vmem:[#allocation5 + $0x588] sm:$0xff]
    %v293 = vld [vmem:[#allocation5 + $0x590] sm:$0xff]
    %v294 = vld [vmem:[#allocation5 + $0x598] sm:$0xff]
    %v295 = vld [vmem:[#allocation5 + $0x5a0] sm:$0xff]
    %v296 = vld [vmem:[#allocation5 + $0x5a8] sm:$0xff]
    %v297 = vld [vmem:[#allocation5 + $0x5b0] sm:$0xff]
    %v298 = vld [vmem:[#allocation5 + $0x5b8] sm:$0xff]
    %v299 = vld [vmem:[#allocation5 + $0x5c0] sm:$0xff]
    %v300 = vld [vmem:[#allocation5 + $0x5c8] sm:$0xff]
    %v301 = vld [vmem:[#allocation5 + $0x5d0] sm:$0xff]
    %v302 = vld [vmem:[#allocation5 + $0x5d8] sm:$0xff]
    %v303 = vld [vmem:[#allocation5 + $0x5e0] sm:$0xff]
    %v304 = vld [vmem:[#allocation5 + $0x5e8] sm:$0xff]
    %v305 = vld [vmem:[#allocation5 + $0x5f0] sm:$0xff]
    %v306 = vld [vmem:[#allocation5 + $0x5f8] sm:$0xff]
    %v307 = vld [vmem:[#allocation5 + $0x600] sm:$0xff]
    %v308 = vld [vmem:[#allocation5 + $0x608] sm:$0xff]
    %v309 = vld [vmem:[#allocation5 + $0x610] sm:$0xff]
    %v310 = vld [vmem:[#allocation5 + $0x618] sm:$0xff]
    %v311 = vld [vmem:[#allocation5 + $0x620] sm:$0xff]
    %v312 = vld [vmem:[#allocation5 + $0x628] sm:$0xff]
    %v313 = vld [vmem:[#allocation5 + $0x630] sm:$0xff]
    %v314 = vld [vmem:[#allocation5 + $0x638] sm:$0xff]
    %v315 = vld [vmem:[#allocation5 + $0x640] sm:$0xff]
    %v316 = vld [vmem:[#allocation5 + $0x648] sm:$0xff]
    %v317 = vld [vmem:[#allocation5 + $0x650] sm:$0xff]
    %v318 = vld [vmem:[#allocation5 + $0x658] sm:$0xff]
    %v319 = vld [vmem:[#allocation5 + $0x660] sm:$0xff]
    %v320 = vld [vmem:[#allocation5 + $0x668] sm:$0xff]
    %v321 = vld [vmem:[#allocation5 + $0x670] sm:$0xff]
    %v322 = vld [vmem:[#allocation5 + $0x678] sm:$0xff]
    %v323 = vld [vmem:[#allocation5 + $0x680] sm:$0xff]
    %v324 = vld [vmem:[#allocation5 + $0x688] sm:$0xff]
    %v325 = vld [vmem:[#allocation5 + $0x690] sm:$0xff]
    %v326 = vld [vmem:[#allocation5 + $0x698] sm:$0xff]
    %v327 = vld [vmem:[#allocation5 + $0x6a0] sm:$0xff]
    %v328 = vld [vmem:[#allocation5 + $0x6a8] sm:$0xff]
    %v329 = vld [vmem:[#allocation5 + $0x6b0] sm:$0xff]
    %v330 = vld [vmem:[#allocation5 + $0x6b8] sm:$0xff]
    %v331 = vld [vmem:[#allocation5 + $0x6c0] sm:$0xff]
    %v332 = vld [vmem:[#allocation5 + $0x6c8] sm:$0xff]
    %v333 = vld [vmem:[#allocation5 + $0x6d0] sm:$0xff]
    %v334 = vld [vmem:[#allocation5 + $0x6d8] sm:$0xff]
    %v335 = vld [vmem:[#allocation5 + $0x6e0] sm:$0xff]
    %v336 = vld [vmem:[#allocation5 + $0x6e8] sm:$0xff]
    %v337 = vld [vmem:[#allocation5 + $0x6f0] sm:$0xff]
    %v338 = vld [vmem:[#allocation5 + $0x6f8] sm:$0xff]
    %v339 = vld [vmem:[#allocation5 + $0x700] sm:$0xff]
    %v340 = vld [vmem:[#allocation5 + $0x708] sm:$0xff]
    %v341 = vld [vmem:[#allocation5 + $0x710] sm:$0xff]
    %v342 = vld [vmem:[#allocation5 + $0x718] sm:$0xff]
    %v343 = vld [vmem:[#allocation5 + $0x720] sm:$0xff]
    %v344 = vld [vmem:[#allocation5 + $0x728] sm:$0xff]
    %v345 = vld [vmem:[#allocation5 + $0x730] sm:$0xff]
    %v346 = vld [vmem:[#allocation5 + $0x738] sm:$0xff]
    %v347 = vld [vmem:[#allocation5 + $0x740] sm:$0xff]
    %v348 = vld [vmem:[#allocation5 + $0x748] sm:$0xff]
    %v349 = vld [vmem:[#allocation5 + $0x750] sm:$0xff]
    %v350 = vld [vmem:[#allocation5 + $0x758] sm:$0xff]
    %v351 = vld [vmem:[#allocation5 + $0x760] sm:$0xff]
    %v352 = vld [vmem:[#allocation5 + $0x768] sm:$0xff]
    %v353 = vld [vmem:[#allocation5 + $0x770] sm:$0xff]
    %v354 = vld [vmem:[#allocation5 + $0x778] sm:$0xff]
    %v355 = vld [vmem:[#allocation5 + $0x780] sm:$0xff]
    %v356 = vld [vmem:[#allocation5 + $0x788] sm:$0xff]
    %v357 = vld [vmem:[#allocation5 + $0x790] sm:$0xff]
    %v358 = vld [vmem:[#allocation5 + $0x798] sm:$0xff]
    %v359 = vld [vmem:[#allocation5 + $0x7a0] sm:$0xff]
    %v360 = vld [vmem:[#allocation5 + $0x7a8] sm:$0xff]
    %v361 = vld [vmem:[#allocation5 + $0x7b0] sm:$0xff]
    %v362 = vld [vmem:[#allocation5 + $0x7b8] sm:$0xff]
    %v363 = vld [vmem:[#allocation5 + $0x7c0] sm:$0xff]
    %v364 = vld [vmem:[#allocation5 + $0x7c8] sm:$0xff]
    %v365 = vld [vmem:[#allocation5 + $0x7d0] sm:$0xff]
    %v366 = vld [vmem:[#allocation5 + $0x7d8] sm:$0xff]
    %v367 = vld [vmem:[#allocation5 + $0x7e0] sm:$0xff]
    %v368 = vld [vmem:[#allocation5 + $0x7e8] sm:$0xff]
    %v369 = vld [vmem:[#allocation5 + $0x7f0] sm:$0xff]
    %v370 = vld [vmem:[#allocation5 + $0x7f8] sm:$0xff]
    %v371 = vld [vmem:[#allocation5 + $0x800] sm:$0xff]
    %v372 = vld [vmem:[#allocation5 + $0x808] sm:$0xff]
    %v373 = vld [vmem:[#allocation5 + $0x810] sm:$0xff]
    %v374 = vld [vmem:[#allocation5 + $0x818] sm:$0xff]
    %v375 = vld [vmem:[#allocation5 + $0x820] sm:$0xff]
    %v376 = vld [vmem:[#allocation5 + $0x828] sm:$0xff]
    %v377 = vld [vmem:[#allocation5 + $0x830] sm:$0xff]
    %v378 = vld [vmem:[#allocation5 + $0x838] sm:$0xff]
    %v379 = vld [vmem:[#allocation5 + $0x840] sm:$0xff]
    %v380 = vld [vmem:[#allocation5 + $0x848] sm:$0xff]
    %v381 = vld [vmem:[#allocation5 + $0x850] sm:$0xff]
    %v382 = vld [vmem:[#allocation5 + $0x858] sm:$0xff]
    %v383 = vld [vmem:[#allocation5 + $0x860] sm:$0xff]
    %v384 = vld [vmem:[#allocation5 + $0x868] sm:$0xff]
    %v385 = vld [vmem:[#allocation5 + $0x870] sm:$0xff]
    %v386 = vld [vmem:[#allocation5 + $0x878] sm:$0xff]
    %v387 = vld [vmem:[#allocation5 + $0x880] sm:$0xff]
    %v388 = vld [vmem:[#allocation5 + $0x888] sm:$0xff]
    %v389 = vld [vmem:[#allocation5 + $0x890] sm:$0xff]
    %v390 = vld [vmem:[#allocation5 + $0x898] sm:$0xff]
    %v391 = vld [vmem:[#allocation5 + $0x8a0] sm:$0xff]
    %v392 = vld [vmem:[#allocation5 + $0x8a8] sm:$0xff]
    %v393 = vld [vmem:[#allocation5 + $0x8b0] sm:$0xff]
    %v394 = vld [vmem:[#allocation5 + $0x8b8] sm:$0xff]
    %v395 = vld [vmem:[#allocation5 + $0x8c0] sm:$0xff]
    %v396 = vld [vmem:[#allocation5 + $0x8c8] sm:$0xff]
    %v397 = vld [vmem:[#allocation5 + $0x8d0] sm:$0xff]
    %v398 = vld [vmem:[#allocation5 + $0x8d8] sm:$0xff]
    %v399 = vld [vmem:[#allocation5 + $0x8e0] sm:$0xff]
    %v400 = vld [vmem:[#allocation5 + $0x8e8] sm:$0xff]
    %v401 = vld [vmem:[#allocation5 + $0x8f0] sm:$0xff]
    %v402 = vld [vmem:[#allocation5 + $0x8f8] sm:$0xff]
    %v403 = vld [vmem:[#allocation5 + $0x900] sm:$0xff]
    %v404 = vld [vmem:[#allocation5 + $0x908] sm:$0xff]
    %v405 = vld [vmem:[#allocation5 + $0x910] sm:$0xff]
    %v406 = vld [vmem:[#allocation5 + $0x918] sm:$0xff]
    %v407 = vld [vmem:[#allocation5 + $0x920] sm:$0xff]
    %v408 = vld [vmem:[#allocation5 + $0x928] sm:$0xff]
    %v409 = vld [vmem:[#allocation5 + $0x930] sm:$0xff]
    %v410 = vld [vmem:[#allocation5 + $0x938] sm:$0xff]
    %v411 = vld [vmem:[#allocation5 + $0x940] sm:$0xff]
    %v412 = vld [vmem:[#allocation5 + $0x948] sm:$0xff]
    %v413 = vld [vmem:[#allocation5 + $0x950] sm:$0xff]
    %v414 = vld [vmem:[#allocation5 + $0x958] sm:$0xff]
    %v415 = vld [vmem:[#allocation5 + $0x960] sm:$0xff]
    %v416 = vld [vmem:[#allocation5 + $0x968] sm:$0xff]
    %v417 = vld [vmem:[#allocation5 + $0x970] sm:$0xff]
    %v418 = vld [vmem:[#allocation5 + $0x978] sm:$0xff]
    %v419 = vld [vmem:[#allocation5 + $0x980] sm:$0xff]
    %v420 = vld [vmem:[#allocation5 + $0x988] sm:$0xff]
    %v421 = vld [vmem:[#allocation5 + $0x990] sm:$0xff]
    %v422 = vld [vmem:[#allocation5 + $0x998] sm:$0xff]
    %v423 = vld [vmem:[#allocation5 + $0x9a0] sm:$0xff]
    %v424 = vld [vmem:[#allocation5 + $0x9a8] sm:$0xff]
    %v425 = vld [vmem:[#allocation5 + $0x9b0] sm:$0xff]
    %v426 = vld [vmem:[#allocation5 + $0x9b8] sm:$0xff]
    %v427 = vld [vmem:[#allocation5 + $0x9c0] sm:$0xff]
    %v428 = vld [vmem:[#allocation5 + $0x9c8] sm:$0xff]
    %v429 = vld [vmem:[#allocation5 + $0x9d0] sm:$0xff]
    %v430 = vld [vmem:[#allocation5 + $0x9d8] sm:$0xff]
    %v431 = vld [vmem:[#allocation5 + $0x9e0] sm:$0xff]
    %v432 = vld [vmem:[#allocation5 + $0x9e8] sm:$0xff]
    %v433 = vld [vmem:[#allocation5 + $0x9f0] sm:$0xff]
    %v434 = vld [vmem:[#allocation5 + $0x9f8] sm:$0xff]
    %v435 = vld [vmem:[#allocation5 + $0xa00] sm:$0xff]
    %v436 = vld [vmem:[#allocation5 + $0xa08] sm:$0xff]
    %v437 = vld [vmem:[#allocation5 + $0xa10] sm:$0xff]
    %v438 = vld [vmem:[#allocation5 + $0xa18] sm:$0xff]
    %v439 = vld [vmem:[#allocation5 + $0xa20] sm:$0xff]
    %v440 = vld [vmem:[#allocation5 + $0xa28] sm:$0xff]
    %v441 = vld [vmem:[#allocation5 + $0xa30] sm:$0xff]
    %v442 = vld [vmem:[#allocation5 + $0xa38] sm:$0xff]
    %v443 = vld [vmem:[#allocation5 + $0xa40] sm:$0xff]
    %v444 = vld [vmem:[#allocation5 + $0xa48] sm:$0xff]
    %v445 = vld [vmem:[#allocation5 + $0xa50] sm:$0xff]
    %v446 = vld [vmem:[#allocation5 + $0xa58] sm:$0xff]
    %v447 = vld [vmem:[#allocation5 + $0xa60] sm:$0xff]
    %v448 = vld [vmem:[#allocation5 + $0xa68] sm:$0xff]
    %v449 = vld [vmem:[#allocation5 + $0xa70] sm:$0xff]
    %v450 = vld [vmem:[#allocation5 + $0xa78] sm:$0xff]
    %v451 = vld [vmem:[#allocation5 + $0xa80] sm:$0xff]
    %v452 = vld [vmem:[#allocation5 + $0xa88] sm:$0xff]
    %v453 = vld [vmem:[#allocation5 + $0xa90] sm:$0xff]
    %v454 = vld [vmem:[#allocation5 + $0xa98] sm:$0xff]
    %v455 = vld [vmem:[#allocation5 + $0xaa0] sm:$0xff]
    %v456 = vld [vmem:[#allocation5 + $0xaa8] sm:$0xff]
    %v457 = vld [vmem:[#allocation5 + $0xab0] sm:$0xff]
    %v458 = vld [vmem:[#allocation5 + $0xab8] sm:$0xff]
    %v459 = vld [vmem:[#allocation5 + $0xac0] sm:$0xff]
    %v460 = vld [vmem:[#allocation5 + $0xac8] sm:$0xff]
    %v461 = vld [vmem:[#allocation5 + $0xad0] sm:$0xff]
    %v462 = vld [vmem:[#allocation5 + $0xad8] sm:$0xff]
    %v463 = vld [vmem:[#allocation5 + $0xae0] sm:$0xff]
    %v464 = vld [vmem:[#allocation5 + $0xae8] sm:$0xff]
    %v465 = vld [vmem:[#allocation5 + $0xaf0] sm:$0xff]
    %v466 = vld [vmem:[#allocation5 + $0xaf8] sm:$0xff]
    %v467 = vld [vmem:[#allocation5 + $0xb00] sm:$0xff]
    %v468 = vld [vmem:[#allocation5 + $0xb08] sm:$0xff]
    %v469 = vld [vmem:[#allocation5 + $0xb10] sm:$0xff]
    %v470 = vld [vmem:[#allocation5 + $0xb18] sm:$0xff]
    %v471 = vld [vmem:[#allocation5 + $0xb20] sm:$0xff]
    %v472 = vld [vmem:[#allocation5 + $0xb28] sm:$0xff]
    %v473 = vld [vmem:[#allocation5 + $0xb30] sm:$0xff]
    %v474 = vld [vmem:[#allocation5 + $0xb38] sm:$0xff]
    %v475 = vld [vmem:[#allocation5 + $0xb40] sm:$0xff]
    %v476 = vld [vmem:[#allocation5 + $0xb48] sm:$0xff]
    %v477 = vld [vmem:[#allocation5 + $0xb50] sm:$0xff]
    %v478 = vld [vmem:[#allocation5 + $0xb58] sm:$0xff]
    %v479 = vld [vmem:[#allocation5 + $0xb60] sm:$0xff]
    %v480 = vld [vmem:[#allocation5 + $0xb68] sm:$0xff]
    %v481 = vld [vmem:[#allocation5 + $0xb70] sm:$0xff]
    %v482 = vld [vmem:[#allocation5 + $0xb78] sm:$0xff]
    %v483 = vld [vmem:[#allocation5 + $0xb80] sm:$0xff]
    %v484 = vld [vmem:[#allocation5 + $0xb88] sm:$0xff]
    %v485 = vld [vmem:[#allocation5 + $0xb90] sm:$0xff]
    %v486 = vld [vmem:[#allocation5 + $0xb98] sm:$0xff]
    %v487 = vld [vmem:[#allocation5 + $0xba0] sm:$0xff]
    %v488 = vld [vmem:[#allocation5 + $0xba8] sm:$0xff]
    %v489 = vld [vmem:[#allocation5 + $0xbb0] sm:$0xff]
    %v490 = vld [vmem:[#allocation5 + $0xbb8] sm:$0xff]
    %v491 = vld [vmem:[#allocation5 + $0xbc0] sm:$0xff]
    %v492 = vld [vmem:[#allocation5 + $0xbc8] sm:$0xff]
    %v493 = vld [vmem:[#allocation5 + $0xbd0] sm:$0xff]
    %v494 = vld [vmem:[#allocation5 + $0xbd8] sm:$0xff]
    %v495 = vld [vmem:[#allocation5 + $0xbe0] sm:$0xff]
    %v496 = vld [vmem:[#allocation5 + $0xbe8] sm:$0xff]
    %v497 = vld [vmem:[#allocation5 + $0xbf0] sm:$0xff]
    %v498 = vld [vmem:[#allocation5 + $0xbf8] sm:$0xff]
    %v499 = vld [vmem:[#allocation5 + $0xc00] sm:$0xff]
    %v500 = vld [vmem:[#allocation5 + $0xc08] sm:$0xff]
    %v501 = vld [vmem:[#allocation5 + $0xc10] sm:$0xff]
    %v502 = vld [vmem:[#allocation5 + $0xc18] sm:$0xff]
    %v503 = vld [vmem:[#allocation5 + $0xc20] sm:$0xff]
    %v504 = vld [vmem:[#allocation5 + $0xc28] sm:$0xff]
    %v505 = vld [vmem:[#allocation5 + $0xc30] sm:$0xff]
    %v506 = vld [vmem:[#allocation5 + $0xc38] sm:$0xff]
    %v507 = vld [vmem:[#allocation5 + $0xc40] sm:$0xff]
    %v508 = vld [vmem:[#allocation5 + $0xc48] sm:$0xff]
    %v509 = vld [vmem:[#allocation5 + $0xc50] sm:$0xff]
    %v510 = vld [vmem:[#allocation5 + $0xc58] sm:$0xff]
    %v511 = vld [vmem:[#allocation5 + $0xc60] sm:$0xff]
    %v512 = vld [vmem:[#allocation5 + $0xc68] sm:$0xff]
    %v513 = vld [vmem:[#allocation5 + $0xc70] sm:$0xff]
    %v514 = vld [vmem:[#allocation5 + $0xc78] sm:$0xff]
    %v515 = vld [vmem:[#allocation5 + $0xc80] sm:$0xff]
    %v516 = vld [vmem:[#allocation5 + $0xc88] sm:$0xff]
    %v517 = vld [vmem:[#allocation5 + $0xc90] sm:$0xff]
    %v518 = vld [vmem:[#allocation5 + $0xc98] sm:$0xff]
    %v519 = vld [vmem:[#allocation5 + $0xca0] sm:$0xff]
    %v520 = vld [vmem:[#allocation5 + $0xca8] sm:$0xff]
    %v521 = vld [vmem:[#allocation5 + $0xcb0] sm:$0xff]
    %v522 = vld [vmem:[#allocation5 + $0xcb8] sm:$0xff]
    %v523 = vld [vmem:[#allocation5 + $0xcc0] sm:$0xff]
    %v524 = vld [vmem:[#allocation5 + $0xcc8] sm:$0xff]
    %v525 = vld [vmem:[#allocation5 + $0xcd0] sm:$0xff]
    %v526 = vld [vmem:[#allocation5 + $0xcd8] sm:$0xff]
    %v527 = vld [vmem:[#allocation5 + $0xce0] sm:$0xff]
    %v528 = vld [vmem:[#allocation5 + $0xce8] sm:$0xff]
    %v529 = vld [vmem:[#allocation5 + $0xcf0] sm:$0xff]
    %v530 = vld [vmem:[#allocation5 + $0xcf8] sm:$0xff]
    %v531 = vld [vmem:[#allocation5 + $0xd00] sm:$0xff]
    %v532 = vld [vmem:[#allocation5 + $0xd08] sm:$0xff]
    %v533 = vld [vmem:[#allocation5 + $0xd10] sm:$0xff]
    %v534 = vld [vmem:[#allocation5 + $0xd18] sm:$0xff]
    %v535 = vld [vmem:[#allocation5 + $0xd20] sm:$0xff]
    %v536 = vld [vmem:[#allocation5 + $0xd28] sm:$0xff]
    %v537 = vld [vmem:[#allocation5 + $0xd30] sm:$0xff]
    %v538 = vld [vmem:[#allocation5 + $0xd38] sm:$0xff]
    %v539 = vld [vmem:[#allocation5 + $0xd40] sm:$0xff]
    %v540 = vld [vmem:[#allocation5 + $0xd48] sm:$0xff]
    %v541 = vld [vmem:[#allocation5 + $0xd50] sm:$0xff]
    %v542 = vld [vmem:[#allocation5 + $0xd58] sm:$0xff]
    %v543 = vld [vmem:[#allocation5 + $0xd60] sm:$0xff]
    %v544 = vld [vmem:[#allocation5 + $0xd68] sm:$0xff]
    %v545 = vld [vmem:[#allocation5 + $0xd70] sm:$0xff]
    %v546 = vld [vmem:[#allocation5 + $0xd78] sm:$0xff]
    %v547 = vld [vmem:[#allocation5 + $0xd80] sm:$0xff]
    %v548 = vld [vmem:[#allocation5 + $0xd88] sm:$0xff]
    %v549 = vld [vmem:[#allocation5 + $0xd90] sm:$0xff]
    %v550 = vld [vmem:[#allocation5 + $0xd98] sm:$0xff]
    %v551 = vld [vmem:[#allocation5 + $0xda0] sm:$0xff]
    %v552 = vld [vmem:[#allocation5 + $0xda8] sm:$0xff]
    %v553 = vld [vmem:[#allocation5 + $0xdb0] sm:$0xff]
    %v554 = vld [vmem:[#allocation5 + $0xdb8] sm:$0xff]
    %v555 = vld [vmem:[#allocation5 + $0xdc0] sm:$0xff]
    %v556 = vld [vmem:[#allocation5 + $0xdc8] sm:$0xff]
    %v557 = vld [vmem:[#allocation5 + $0xdd0] sm:$0xff]
    %v558 = vld [vmem:[#allocation5 + $0xdd8] sm:$0xff]
    %v559 = vld [vmem:[#allocation5 + $0xde0] sm:$0xff]
    %v560 = vld [vmem:[#allocation5 + $0xde8] sm:$0xff]
    %v561 = vld [vmem:[#allocation5 + $0xdf0] sm:$0xff]
    %v562 = vld [vmem:[#allocation5 + $0xdf8] sm:$0xff]
    %v563 = vld [vmem:[#allocation5 + $0xe00] sm:$0xff]
    %v564 = vld [vmem:[#allocation5 + $0xe08] sm:$0xff]
    %v565 = vld [vmem:[#allocation5 + $0xe10] sm:$0xff]
    %v566 = vld [vmem:[#allocation5 + $0xe18] sm:$0xff]
    %v567 = vld [vmem:[#allocation5 + $0xe20] sm:$0xff]
    %v568 = vld [vmem:[#allocation5 + $0xe28] sm:$0xff]
    %v569 = vld [vmem:[#allocation5 + $0xe30] sm:$0xff]
    %v570 = vld [vmem:[#allocation5 + $0xe38] sm:$0xff]
    %v571 = vld [vmem:[#allocation5 + $0xe40] sm:$0xff]
    %v572 = vld [vmem:[#allocation5 + $0xe48] sm:$0xff]
    %v573 = vld [vmem:[#allocation5 + $0xe50] sm:$0xff]
    %v574 = vld [vmem:[#allocation5 + $0xe58] sm:$0xff]
    %v575 = vld [vmem:[#allocation5 + $0xe60] sm:$0xff]
    %v576 = vld [vmem:[#allocation5 + $0xe68] sm:$0xff]
    %v577 = vld [vmem:[#allocation5 + $0xe70] sm:$0xff]
    %v578 = vld [vmem:[#allocation5 + $0xe78] sm:$0xff]
    %v579 = vld [vmem:[#allocation5 + $0xe80] sm:$0xff]
    %v580 = vld [vmem:[#allocation5 + $0xe88] sm:$0xff]
    %v581 = vld [vmem:[#allocation5 + $0xe90] sm:$0xff]
    %v582 = vld [vmem:[#allocation5 + $0xe98] sm:$0xff]
    %v583 = vld [vmem:[#allocation5 + $0xea0] sm:$0xff]
    %v584 = vld [vmem:[#allocation5 + $0xea8] sm:$0xff]
    %v585 = vld [vmem:[#allocation5 + $0xeb0] sm:$0xff]
    %v586 = vld [vmem:[#allocation5 + $0xeb8] sm:$0xff]
    %v587 = vld [vmem:[#allocation5 + $0xec0] sm:$0xff]
    %v588 = vld [vmem:[#allocation5 + $0xec8] sm:$0xff]
    %v589 = vld [vmem:[#allocation5 + $0xed0] sm:$0xff]
    %v590 = vld [vmem:[#allocation5 + $0xed8] sm:$0xff]
    %v591 = vld [vmem:[#allocation5 + $0xee0] sm:$0xff]
    %v592 = vld [vmem:[#allocation5 + $0xee8] sm:$0xff]
    %v593 = vld [vmem:[#allocation5 + $0xef0] sm:$0xff]
    %v594 = vld [vmem:[#allocation5 + $0xef8] sm:$0xff]
    %v595 = vld [vmem:[#allocation5 + $0xf00] sm:$0xff]
    %v596 = vld [vmem:[#allocation5 + $0xf08] sm:$0xff]
    %v597 = vld [vmem:[#allocation5 + $0xf10] sm:$0xff]
    %v598 = vld [vmem:[#allocation5 + $0xf18] sm:$0xff]
    %v599 = vld [vmem:[#allocation5 + $0xf20] sm:$0xff]
    %v600 = vld [vmem:[#allocation5 + $0xf28] sm:$0xff]
    %v601 = vld [vmem:[#allocation5 + $0xf30] sm:$0xff]
    %v602 = vld [vmem:[#allocation5 + $0xf38] sm:$0xff]
    %v603 = vld [vmem:[#allocation5 + $0xf40] sm:$0xff]
    %v604 = vld [vmem:[#allocation5 + $0xf48] sm:$0xff]
    %v605 = vld [vmem:[#allocation5 + $0xf50] sm:$0xff]
    %v606 = vld [vmem:[#allocation5 + $0xf58] sm:$0xff]
    %v607 = vld [vmem:[#allocation5 + $0xf60] sm:$0xff]
    %v608 = vld [vmem:[#allocation5 + $0xf68] sm:$0xff]
    %v609 = vld [vmem:[#allocation5 + $0xf70] sm:$0xff]
    %v610 = vld [vmem:[#allocation5 + $0xf78] sm:$0xff]
    %v611 = vld [vmem:[#allocation5 + $0xf80] sm:$0xff]
    %v612 = vld [vmem:[#allocation5 + $0xf88] sm:$0xff]
    %v613 = vld [vmem:[#allocation5 + $0xf90] sm:$0xff]
    %v614 = vld [vmem:[#allocation5 + $0xf98] sm:$0xff]
    %v615 = vld [vmem:[#allocation5 + $0xfa0] sm:$0xff]
    %v616 = vld [vmem:[#allocation5 + $0xfa8] sm:$0xff]
    %v617 = vld [vmem:[#allocation5 + $0xfb0] sm:$0xff]
    %v618 = vld [vmem:[#allocation5 + $0xfb8] sm:$0xff]
    %v619 = vld [vmem:[#allocation5 + $0xfc0] sm:$0xff]
    %v620 = vld [vmem:[#allocation5 + $0xfc8] sm:$0xff]
    %v621 = vld [vmem:[#allocation5 + $0xfd0] sm:$0xff]
    %v622 = vld [vmem:[#allocation5 + $0xfd8] sm:$0xff]
    %v623 = vld [vmem:[#allocation5 + $0xfe0] sm:$0xff]
    %v624 = vld [vmem:[#allocation5 + $0xfe8] sm:$0xff]
    %v625 = vld [vmem:[#allocation5 + $0xff0] sm:$0xff]
    %v626 = vld [vmem:[#allocation5 + $0xff8] sm:$0xff]
    %v627 = vld [vmem:[#allocation5 + $0x1000] sm:$0xff]
    %v628 = vld [vmem:[#allocation5 + $0x1008] sm:$0xff]
    %v629 = vld [vmem:[#allocation5 + $0x1010] sm:$0xff]
    %v630 = vld [vmem:[#allocation5 + $0x1018] sm:$0xff]
    %v631 = vld [vmem:[#allocation5 + $0x1020] sm:$0xff]
    %v632 = vld [vmem:[#allocation5 + $0x1028] sm:$0xff]
    %v633 = vld [vmem:[#allocation5 + $0x1030] sm:$0xff]
    %v634 = vld [vmem:[#allocation5 + $0x1038] sm:$0xff]
    %v635 = vld [vmem:[#allocation5 + $0x1040] sm:$0xff]
    %v636 = vld [vmem:[#allocation5 + $0x1048] sm:$0xff]
    %v637 = vld [vmem:[#allocation5 + $0x1050] sm:$0xff]
    %v638 = vld [vmem:[#allocation5 + $0x1058] sm:$0xff]
    %v639 = vld [vmem:[#allocation5 + $0x1060] sm:$0xff]
    %v640 = vld [vmem:[#allocation5 + $0x1068] sm:$0xff]
    %v641 = vld [vmem:[#allocation5 + $0x1070] sm:$0xff]
    %v642 = vld [vmem:[#allocation5 + $0x1078] sm:$0xff]
    %v643 = vld [vmem:[#allocation5 + $0x1080] sm:$0xff]
    %v644 = vld [vmem:[#allocation5 + $0x1088] sm:$0xff]
    %v645 = vld [vmem:[#allocation5 + $0x1090] sm:$0xff]
    %v646 = vld [vmem:[#allocation5 + $0x1098] sm:$0xff]
    %v647 = vld [vmem:[#allocation5 + $0x10a0] sm:$0xff]
    %v648 = vld [vmem:[#allocation5 + $0x10a8] sm:$0xff]
    %v649 = vld [vmem:[#allocation5 + $0x10b0] sm:$0xff]
    %v650 = vld [vmem:[#allocation5 + $0x10b8] sm:$0xff]
    %v651 = vld [vmem:[#allocation5 + $0x10c0] sm:$0xff]
    %v652 = vld [vmem:[#allocation5 + $0x10c8] sm:$0xff]
    %v653 = vld [vmem:[#allocation5 + $0x10d0] sm:$0xff]
    %v654 = vld [vmem:[#allocation5 + $0x10d8] sm:$0xff]
    %v655 = vld [vmem:[#allocation5 + $0x10e0] sm:$0xff]
    %v656 = vld [vmem:[#allocation5 + $0x10e8] sm:$0xff]
    %v657 = vld [vmem:[#allocation5 + $0x10f0] sm:$0xff]
    %v658 = vld [vmem:[#allocation5 + $0x10f8] sm:$0xff]
    %v659 = vld [vmem:[#allocation5 + $0x1100] sm:$0xff]
    %v660 = vld [vmem:[#allocation5 + $0x1108] sm:$0xff]
    %v661 = vld [vmem:[#allocation5 + $0x1110] sm:$0xff]
    %v662 = vld [vmem:[#allocation5 + $0x1118] sm:$0xff]
    %v663 = vld [vmem:[#allocation5 + $0x1120] sm:$0xff]
    %v664 = vld [vmem:[#allocation5 + $0x1128] sm:$0xff]
    %v665 = vld [vmem:[#allocation5 + $0x1130] sm:$0xff]
    %v666 = vld [vmem:[#allocation5 + $0x1138] sm:$0xff]
    %v667 = vld [vmem:[#allocation5 + $0x1140] sm:$0xff]
    %v668 = vld [vmem:[#allocation5 + $0x1148] sm:$0xff]
    %v669 = vld [vmem:[#allocation5 + $0x1150] sm:$0xff]
    %v670 = vld [vmem:[#allocation5 + $0x1158] sm:$0xff]
    %v671 = vld [vmem:[#allocation5 + $0x1160] sm:$0xff]
    %v672 = vld [vmem:[#allocation5 + $0x1168] sm:$0xff]
    %v673 = vld [vmem:[#allocation5 + $0x1170] sm:$0xff]
    %v674 = vld [vmem:[#allocation5 + $0x1178] sm:$0xff]
    %v675 = vld [vmem:[#allocation5 + $0x1180] sm:$0xff]
    %v676 = vld [vmem:[#allocation5 + $0x1188] sm:$0xff]
    %v677 = vld [vmem:[#allocation5 + $0x1190] sm:$0xff]
    %v678 = vld [vmem:[#allocation5 + $0x1198] sm:$0xff]
    %v679 = vld [vmem:[#allocation5 + $0x11a0] sm:$0xff]
    %v680 = vld [vmem:[#allocation5 + $0x11a8] sm:$0xff]
    %v681 = vld [vmem:[#allocation5 + $0x11b0] sm:$0xff]
    %v682 = vld [vmem:[#allocation5 + $0x11b8] sm:$0xff]
    %v683 = vld [vmem:[#allocation5 + $0x11c0] sm:$0xff]
    %v684 = vld [vmem:[#allocation5 + $0x11c8] sm:$0xff]
    %v685 = vld [vmem:[#allocation5 + $0x11d0] sm:$0xff]
    %v686 = vld [vmem:[#allocation5 + $0x11d8] sm:$0xff]
    %v687 = vld [vmem:[#allocation5 + $0x11e0] sm:$0xff]
    %v688 = vld [vmem:[#allocation5 + $0x11e8] sm:$0xff]
    %v689 = vld [vmem:[#allocation5 + $0x11f0] sm:$0xff]
    %v690 = vld [vmem:[#allocation5 + $0x11f8] sm:$0xff]
    %v691 = vld [vmem:[#allocation5 + $0x1200] sm:$0xff]
    %v692 = vld [vmem:[#allocation5 + $0x1208] sm:$0xff]
    %v693 = vld [vmem:[#allocation5 + $0x1210] sm:$0xff]
    %v694 = vld [vmem:[#allocation5 + $0x1218] sm:$0xff]
    %v695 = vld [vmem:[#allocation5 + $0x1220] sm:$0xff]
    %v696 = vld [vmem:[#allocation5 + $0x1228] sm:$0xff]
    %v697 = vld [vmem:[#allocation5 + $0x1230] sm:$0xff]
    %v698 = vld [vmem:[#allocation5 + $0x1238] sm:$0xff]
    %v699 = vld [vmem:[#allocation5 + $0x1240] sm:$0xff]
    %v700 = vld [vmem:[#allocation5 + $0x1248] sm:$0xff]
    %v701 = vld [vmem:[#allocation5 + $0x1250] sm:$0xff]
    %v702 = vld [vmem:[#allocation5 + $0x1258] sm:$0xff]
    %v703 = vld [vmem:[#allocation5 + $0x1260] sm:$0xff]
    %v704 = vld [vmem:[#allocation5 + $0x1268] sm:$0xff]
    %v705 = vld [vmem:[#allocation5 + $0x1270] sm:$0xff]
    %v706 = vld [vmem:[#allocation5 + $0x1278] sm:$0xff]
    %v707 = vld [vmem:[#allocation5 + $0x1280] sm:$0xff]
    %v708 = vld [vmem:[#allocation5 + $0x1288] sm:$0xff]
    %v709 = vld [vmem:[#allocation5 + $0x1290] sm:$0xff]
    %v710 = vld [vmem:[#allocation5 + $0x1298] sm:$0xff]
    %v711 = vld [vmem:[#allocation5 + $0x12a0] sm:$0xff]
    %v712 = vld [vmem:[#allocation5 + $0x12a8] sm:$0xff]
    %v713 = vld [vmem:[#allocation5 + $0x12b0] sm:$0xff]
    %v714 = vld [vmem:[#allocation5 + $0x12b8] sm:$0xff]
    %v715 = vld [vmem:[#allocation5 + $0x12c0] sm:$0xff]
    %v716 = vld [vmem:[#allocation5 + $0x12c8] sm:$0xff]
    %v717 = vld [vmem:[#allocation5 + $0x12d0] sm:$0xff]
    %v718 = vld [vmem:[#allocation5 + $0x12d8] sm:$0xff]
    %v719 = vld [vmem:[#allocation5 + $0x12e0] sm:$0xff]
    %v720 = vld [vmem:[#allocation5 + $0x12e8] sm:$0xff]
    %v721 = vld [vmem:[#allocation5 + $0x12f0] sm:$0xff]
    %v722 = vld [vmem:[#allocation5 + $0x12f8] sm:$0xff]
    %v723 = vld [vmem:[#allocation5 + $0x1300] sm:$0xff]
    %v724 = vld [vmem:[#allocation5 + $0x1308] sm:$0xff]
    %v725 = vld [vmem:[#allocation5 + $0x1310] sm:$0xff]
    %v726 = vld [vmem:[#allocation5 + $0x1318] sm:$0xff]
    %v727 = vld [vmem:[#allocation5 + $0x1320] sm:$0xff]
    %v728 = vld [vmem:[#allocation5 + $0x1328] sm:$0xff]
    %v729 = vld [vmem:[#allocation5 + $0x1330] sm:$0xff]
    %v730 = vld [vmem:[#allocation5 + $0x1338] sm:$0xff]
    %v731 = vld [vmem:[#allocation5 + $0x1340] sm:$0xff]
    %v732 = vld [vmem:[#allocation5 + $0x1348] sm:$0xff]
    %v733 = vld [vmem:[#allocation5 + $0x1350] sm:$0xff]
    %v734 = vld [vmem:[#allocation5 + $0x1358] sm:$0xff]
    %v735 = vld [vmem:[#allocation5 + $0x1360] sm:$0xff]
    %v736 = vld [vmem:[#allocation5 + $0x1368] sm:$0xff]
    %v737 = vld [vmem:[#allocation5 + $0x1370] sm:$0xff]
    %v738 = vld [vmem:[#allocation5 + $0x1378] sm:$0xff]
    %v739 = vld [vmem:[#allocation5 + $0x1380] sm:$0xff]
    %v740 = vld [vmem:[#allocation5 + $0x1388] sm:$0xff]
    %v741 = vld [vmem:[#allocation5 + $0x1390] sm:$0xff]
    %v742 = vld [vmem:[#allocation5 + $0x1398] sm:$0xff]
    %v743 = vld [vmem:[#allocation5 + $0x13a0] sm:$0xff]
    %v744 = vld [vmem:[#allocation5 + $0x13a8] sm:$0xff]
    %v745 = vld [vmem:[#allocation5 + $0x13b0] sm:$0xff]
    %v746 = vld [vmem:[#allocation5 + $0x13b8] sm:$0xff]
    %v747 = vld [vmem:[#allocation5 + $0x13c0] sm:$0xff]
    %v748 = vld [vmem:[#allocation5 + $0x13c8] sm:$0xff]
    %v749 = vld [vmem:[#allocation5 + $0x13d0] sm:$0xff]
    %v750 = vld [vmem:[#allocation5 + $0x13d8] sm:$0xff]
    %v751 = vld [vmem:[#allocation5 + $0x13e0] sm:$0xff]
    %v752 = vld [vmem:[#allocation5 + $0x13e8] sm:$0xff]
    %v753 = vld [vmem:[#allocation5 + $0x13f0] sm:$0xff]
    %v754 = vld [vmem:[#allocation5 + $0x13f8] sm:$0xff]
    %v755 = vld [vmem:[#allocation5 + $0x1400] sm:$0xff]
    %v756 = vld [vmem:[#allocation5 + $0x1408] sm:$0xff]
    %v757 = vld [vmem:[#allocation5 + $0x1410] sm:$0xff]
    %v758 = vld [vmem:[#allocation5 + $0x1418] sm:$0xff]
    %v759 = vld [vmem:[#allocation5 + $0x1420] sm:$0xff]
    %v760 = vld [vmem:[#allocation5 + $0x1428] sm:$0xff]
    %v761 = vld [vmem:[#allocation5 + $0x1430] sm:$0xff]
    %v762 = vld [vmem:[#allocation5 + $0x1438] sm:$0xff]
    %v763 = vld [vmem:[#allocation5 + $0x1440] sm:$0xff]
    %v764 = vld [vmem:[#allocation5 + $0x1448] sm:$0xff]
    %v765 = vld [vmem:[#allocation5 + $0x1450] sm:$0xff]
    %v766 = vld [vmem:[#allocation5 + $0x1458] sm:$0xff]
    %v767 = vld [vmem:[#allocation5 + $0x1460] sm:$0xff]
    %v768 = vld [vmem:[#allocation5 + $0x1468] sm:$0xff]
    %v769 = vld [vmem:[#allocation5 + $0x1470] sm:$0xff]
    %v770 = vld [vmem:[#allocation5 + $0x1478] sm:$0xff]
    %v771 = vld [vmem:[#allocation5 + $0x1480] sm:$0xff]
    %v772 = vld [vmem:[#allocation5 + $0x1488] sm:$0xff]
    %v773 = vld [vmem:[#allocation5 + $0x1490] sm:$0xff]
    %v774 = vld [vmem:[#allocation5 + $0x1498] sm:$0xff]
    %v775 = vld [vmem:[#allocation5 + $0x14a0] sm:$0xff]
    %v776 = vld [vmem:[#allocation5 + $0x14a8] sm:$0xff]
    %v777 = vld [vmem:[#allocation5 + $0x14b0] sm:$0xff]
    %v778 = vld [vmem:[#allocation5 + $0x14b8] sm:$0xff]
    %v779 = vld [vmem:[#allocation5 + $0x14c0] sm:$0xff]
    %v780 = vld [vmem:[#allocation5 + $0x14c8] sm:$0xff]
    %v781 = vld [vmem:[#allocation5 + $0x14d0] sm:$0xff]
    %v782 = vld [vmem:[#allocation5 + $0x14d8] sm:$0xff]
    %v783 = vld [vmem:[#allocation5 + $0x14e0] sm:$0xff]
    %v784 = vld [vmem:[#allocation5 + $0x14e8] sm:$0xff]
    %v785 = vld [vmem:[#allocation5 + $0x14f0] sm:$0xff]
    %v786 = vld [vmem:[#allocation5 + $0x14f8] sm:$0xff]
    %v787 = vld [vmem:[#allocation5 + $0x1500] sm:$0xff]
    %v788 = vld [vmem:[#allocation5 + $0x1508] sm:$0xff]
    %v789 = vld [vmem:[#allocation5 + $0x1510] sm:$0xff]
    %v790 = vld [vmem:[#allocation5 + $0x1518] sm:$0xff]
    %v791 = vld [vmem:[#allocation5 + $0x1520] sm:$0xff]
    %v792 = vld [vmem:[#allocation5 + $0x1528] sm:$0xff]
    %v793 = vld [vmem:[#allocation5 + $0x1530] sm:$0xff]
    %v794 = vld [vmem:[#allocation5 + $0x1538] sm:$0xff]
    %v795 = vld [vmem:[#allocation5 + $0x1540] sm:$0xff]
    %v796 = vld [vmem:[#allocation5 + $0x1548] sm:$0xff]
    %v797 = vld [vmem:[#allocation5 + $0x1550] sm:$0xff]
    %v798 = vld [vmem:[#allocation5 + $0x1558] sm:$0xff]
    %v799 = vld [vmem:[#allocation5 + $0x1560] sm:$0xff]
    %v800 = vld [vmem:[#allocation5 + $0x1568] sm:$0xff]
    %v801 = vld [vmem:[#allocation5 + $0x1570] sm:$0xff]
    %v802 = vld [vmem:[#allocation5 + $0x1578] sm:$0xff]
    %v803 = vld [vmem:[#allocation5 + $0x1580] sm:$0xff]
    %v804 = vld [vmem:[#allocation5 + $0x1588] sm:$0xff]
    %v805 = vld [vmem:[#allocation5 + $0x1590] sm:$0xff]
    %v806 = vld [vmem:[#allocation5 + $0x1598] sm:$0xff]
    %v807 = vld [vmem:[#allocation5 + $0x15a0] sm:$0xff]
    %v808 = vld [vmem:[#allocation5 + $0x15a8] sm:$0xff]
    %v809 = vld [vmem:[#allocation5 + $0x15b0] sm:$0xff]
    %v810 = vld [vmem:[#allocation5 + $0x15b8] sm:$0xff]
    %v811 = vld [vmem:[#allocation5 + $0x15c0] sm:$0xff]
    %v812 = vld [vmem:[#allocation5 + $0x15c8] sm:$0xff]
    %v813 = vld [vmem:[#allocation5 + $0x15d0] sm:$0xff]
    %v814 = vld [vmem:[#allocation5 + $0x15d8] sm:$0xff]
    %v815 = vld [vmem:[#allocation5 + $0x15e0] sm:$0xff]
    %v816 = vld [vmem:[#allocation5 + $0x15e8] sm:$0xff]
    %v817 = vld [vmem:[#allocation5 + $0x15f0] sm:$0xff]
    %v818 = vld [vmem:[#allocation5 + $0x15f8] sm:$0xff]
    %v819 = vld [vmem:[#allocation5 + $0x1600] sm:$0xff]
    %v820 = vld [vmem:[#allocation5 + $0x1608] sm:$0xff]
    %v821 = vld [vmem:[#allocation5 + $0x1610] sm:$0xff]
    %v822 = vld [vmem:[#allocation5 + $0x1618] sm:$0xff]
    %v823 = vld [vmem:[#allocation5 + $0x1620] sm:$0xff]
    %v824 = vld [vmem:[#allocation5 + $0x1628] sm:$0xff]
    %v825 = vld [vmem:[#allocation5 + $0x1630] sm:$0xff]
    %v826 = vld [vmem:[#allocation5 + $0x1638] sm:$0xff]
    %v827 = vld [vmem:[#allocation5 + $0x1640] sm:$0xff]
    %v828 = vld [vmem:[#allocation5 + $0x1648] sm:$0xff]
    %v829 = vld [vmem:[#allocation5 + $0x1650] sm:$0xff]
    %v830 = vld [vmem:[#allocation5 + $0x1658] sm:$0xff]
    %v831 = vld [vmem:[#allocation5 + $0x1660] sm:$0xff]
    %v832 = vld [vmem:[#allocation5 + $0x1668] sm:$0xff]
    %v833 = vld [vmem:[#allocation5 + $0x1670] sm:$0xff]
    %v834 = vld [vmem:[#allocation5 + $0x1678] sm:$0xff]
    %v835 = vld [vmem:[#allocation5 + $0x1680] sm:$0xff]
    %v836 = vld [vmem:[#allocation5 + $0x1688] sm:$0xff]
    %v837 = vld [vmem:[#allocation5 + $0x1690] sm:$0xff]
    %v838 = vld [vmem:[#allocation5 + $0x1698] sm:$0xff]
    %v839 = vld [vmem:[#allocation5 + $0x16a0] sm:$0xff]
    %v840 = vld [vmem:[#allocation5 + $0x16a8] sm:$0xff]
    %v841 = vld [vmem:[#allocation5 + $0x16b0] sm:$0xff]
    %v842 = vld [vmem:[#allocation5 + $0x16b8] sm:$0xff]
    %v843 = vld [vmem:[#allocation5 + $0x16c0] sm:$0xff]
    %v844 = vld [vmem:[#allocation5 + $0x16c8] sm:$0xff]
    %v845 = vld [vmem:[#allocation5 + $0x16d0] sm:$0xff]
    %v846 = vld [vmem:[#allocation5 + $0x16d8] sm:$0xff]
    %v847 = vld [vmem:[#allocation5 + $0x16e0] sm:$0xff]
    %v848 = vld [vmem:[#allocation5 + $0x16e8] sm:$0xff]
    %v849 = vld [vmem:[#allocation5 + $0x16f0] sm:$0xff]
    %v850 = vld [vmem:[#allocation5 + $0x16f8] sm:$0xff]
    %v851 = vld [vmem:[#allocation5 + $0x1700] sm:$0xff]
    %v852 = vld [vmem:[#allocation5 + $0x1708] sm:$0xff]
    %v853 = vld [vmem:[#allocation5 + $0x1710] sm:$0xff]
    %v854 = vld [vmem:[#allocation5 + $0x1718] sm:$0xff]
    %v855 = vld [vmem:[#allocation5 + $0x1720] sm:$0xff]
    %v856 = vld [vmem:[#allocation5 + $0x1728] sm:$0xff]
    %v857 = vld [vmem:[#allocation5 + $0x1730] sm:$0xff]
    %v858 = vld [vmem:[#allocation5 + $0x1738] sm:$0xff]
    %v859 = vld [vmem:[#allocation5 + $0x1740] sm:$0xff]
    %v860 = vld [vmem:[#allocation5 + $0x1748] sm:$0xff]
    %v861 = vld [vmem:[#allocation5 + $0x1750] sm:$0xff]
    %v862 = vld [vmem:[#allocation5 + $0x1758] sm:$0xff]
    %v863 = vld [vmem:[#allocation5 + $0x1760] sm:$0xff]
    %v864 = vld [vmem:[#allocation5 + $0x1768] sm:$0xff]
    %v865 = vld [vmem:[#allocation5 + $0x1770] sm:$0xff]
    %v866 = vld [vmem:[#allocation5 + $0x1778] sm:$0xff]
    %v867 = vld [vmem:[#allocation5 + $0x1780] sm:$0xff]
    %v868 = vld [vmem:[#allocation5 + $0x1788] sm:$0xff]
    %v869 = vld [vmem:[#allocation5 + $0x1790] sm:$0xff]
    %v870 = vld [vmem:[#allocation5 + $0x1798] sm:$0xff]
    %v871 = vld [vmem:[#allocation5 + $0x17a0] sm:$0xff]
    %v872 = vld [vmem:[#allocation5 + $0x17a8] sm:$0xff]
    %v873 = vld [vmem:[#allocation5 + $0x17b0] sm:$0xff]
    %v874 = vld [vmem:[#allocation5 + $0x17b8] sm:$0xff]
    %v875 = vld [vmem:[#allocation5 + $0x17c0] sm:$0xff]
    %v876 = vld [vmem:[#allocation5 + $0x17c8] sm:$0xff]
    %v877 = vld [vmem:[#allocation5 + $0x17d0] sm:$0xff]
    %v878 = vld [vmem:[#allocation5 + $0x17d8] sm:$0xff]
    %v879 = vld [vmem:[#allocation5 + $0x17e0] sm:$0xff]
    %v880 = vld [vmem:[#allocation5 + $0x17e8] sm:$0xff]
    %v881 = vld [vmem:[#allocation5 + $0x17f0] sm:$0xff]
    %v882 = vld [vmem:[#allocation5 + $0x17f8] sm:$0xff]
    %v884 = vlaneseq
    %v885 = vshrl.u32 %v884, 7
    %v886 = vsub.s32 0, %v885
    %v887 = vrot.slane %v88, %v886
    %v888 = vlaneseq
    %v889 = vshrl.u32 %v888, 7
    %v890 = vsub.s32 1, %v889
    %v891 = vrot.slane %v88, %v890
    %v892 = vlaneseq
    %v893 = vshrl.u32 %v892, 7
    %v894 = vsub.s32 2, %v893
    %v895 = vrot.slane %v88, %v894
    %v896 = vlaneseq
    %v897 = vshrl.u32 %v896, 7
    %v898 = vsub.s32 3, %v897
    %v899 = vrot.slane %v88, %v898
    %v928 = vunpack.c.l.b16 %v91
    %v929 = vunpack.c.h.b16 %v91
    %v930 = vunpack.c.l.b16 %v92
    %v931 = vunpack.c.h.b16 %v92
    %v932 = vunpack.c.l.b16 %v93
    %v933 = vunpack.c.h.b16 %v93
    %v934 = vunpack.c.l.b16 %v94
    %v935 = vunpack.c.h.b16 %v94
    %v936 = vunpack.c.l.b16 %v95
    %v937 = vunpack.c.h.b16 %v95
    %v938 = vunpack.c.l.b16 %v96
    %v939 = vunpack.c.h.b16 %v96
    %v940 = vunpack.c.l.b16 %v97
    %v941 = vunpack.c.h.b16 %v97
    %v942 = vunpack.c.l.b16 %v98
    %v943 = vunpack.c.h.b16 %v98
    %v944 = vunpack.c.l.b16 %v99
    %v945 = vunpack.c.h.b16 %v99
    %v946 = vunpack.c.l.b16 %v100
    %v947 = vunpack.c.h.b16 %v100
    %v948 = vunpack.c.l.b16 %v101
    %v949 = vunpack.c.h.b16 %v101
    %v950 = vunpack.c.l.b16 %v102
    %v951 = vunpack.c.h.b16 %v102
    %v952 = vunpack.c.l.b16 %v103
    %v953 = vunpack.c.h.b16 %v103
    %v954 = vunpack.c.l.b16 %v104
    %v955 = vunpack.c.h.b16 %v104
    %v956 = vunpack.c.l.b16 %v105
    %v957 = vunpack.c.h.b16 %v105
    %v958 = vunpack.c.l.b16 %v106
    %v959 = vunpack.c.h.b16 %v106
    %v960 = vunpack.c.l.b16 %v107
    %v961 = vunpack.c.h.b16 %v107
    %v962 = vunpack.c.l.b16 %v108
    %v963 = vunpack.c.h.b16 %v108
    %v964 = vunpack.c.l.b16 %v109
    %v965 = vunpack.c.h.b16 %v109
    %v966 = vunpack.c.l.b16 %v110
    %v967 = vunpack.c.h.b16 %v110
    %v968 = vunpack.c.l.b16 %v111
    %v969 = vunpack.c.h.b16 %v111
    %v970 = vunpack.c.l.b16 %v112
    %v971 = vunpack.c.h.b16 %v112
    %v972 = vunpack.c.l.b16 %v113
    %v973 = vunpack.c.h.b16 %v113
    %v974 = vunpack.c.l.b16 %v114
    %v975 = vunpack.c.h.b16 %v114
    %v976 = vpack.c.b16 %v952, %v928
    %v977 = vpack.c.b16 %v953, %v929
    %v978 = vpack.c.b16 %v954, %v930
    %v979 = vpack.c.b16 %v955, %v931
    %v980 = vpack.c.b16 %v956, %v932
    %v981 = vpack.c.b16 %v957, %v933
    %v982 = vpack.c.b16 %v958, %v934
    %v983 = vpack.c.b16 %v959, %v935
    %v984 = vpack.c.b16 %v960, %v936
    %v985 = vpack.c.b16 %v961, %v937
    %v986 = vpack.c.b16 %v962, %v938
    %v987 = vpack.c.b16 %v963, %v939
    %v988 = vpack.c.b16 %v964, %v940
    %v989 = vpack.c.b16 %v965, %v941
    %v990 = vpack.c.b16 %v966, %v942
    %v991 = vpack.c.b16 %v967, %v943
    %v992 = vpack.c.b16 %v968, %v944
    %v993 = vpack.c.b16 %v969, %v945
    %v994 = vpack.c.b16 %v970, %v946
    %v995 = vpack.c.b16 %v971, %v947
    %v996 = vpack.c.b16 %v972, %v948
    %v997 = vpack.c.b16 %v973, %v949
    %v998 = vpack.c.b16 %v974, %v950
    %v999 = vpack.c.b16 %v975, %v951
    %v1792 = vunpack.c.l.b16 %v115
    %v1793 = vunpack.c.h.b16 %v115
    %v1794 = vunpack.c.l.b16 %v116
    %v1795 = vunpack.c.h.b16 %v116
    %v1796 = vunpack.c.l.b16 %v117
    %v1797 = vunpack.c.h.b16 %v117
    %v1798 = vunpack.c.l.b16 %v118
    %v1799 = vunpack.c.h.b16 %v118
    %v1800 = vunpack.c.l.b16 %v119
    %v1801 = vunpack.c.h.b16 %v119
    %v1802 = vunpack.c.l.b16 %v120
    %v1803 = vunpack.c.h.b16 %v120
    %v1804 = vunpack.c.l.b16 %v121
    %v1805 = vunpack.c.h.b16 %v121
    %v1806 = vunpack.c.l.b16 %v122
    %v1807 = vunpack.c.h.b16 %v122
    %v1808 = vunpack.c.l.b16 %v123
    %v1809 = vunpack.c.h.b16 %v123
    %v1810 = vunpack.c.l.b16 %v124
    %v1811 = vunpack.c.h.b16 %v124
    %v1812 = vunpack.c.l.b16 %v125
    %v1813 = vunpack.c.h.b16 %v125
    %v1814 = vunpack.c.l.b16 %v126
    %v1815 = vunpack.c.h.b16 %v126
    %v1816 = vunpack.c.l.b16 %v127
    %v1817 = vunpack.c.h.b16 %v127
    %v1818 = vunpack.c.l.b16 %v128
    %v1819 = vunpack.c.h.b16 %v128
    %v1820 = vunpack.c.l.b16 %v129
    %v1821 = vunpack.c.h.b16 %v129
    %v1822 = vunpack.c.l.b16 %v130
    %v1823 = vunpack.c.h.b16 %v130
    %v1824 = vunpack.c.l.b16 %v131
    %v1825 = vunpack.c.h.b16 %v131
    %v1826 = vunpack.c.l.b16 %v132
    %v1827 = vunpack.c.h.b16 %v132
    %v1828 = vunpack.c.l.b16 %v133
    %v1829 = vunpack.c.h.b16 %v133
    %v1830 = vunpack.c.l.b16 %v134
    %v1831 = vunpack.c.h.b16 %v134
    %v1832 = vunpack.c.l.b16 %v135
    %v1833 = vunpack.c.h.b16 %v135
    %v1834 = vunpack.c.l.b16 %v136
    %v1835 = vunpack.c.h.b16 %v136
    %v1836 = vunpack.c.l.b16 %v137
    %v1837 = vunpack.c.h.b16 %v137
    %v1838 = vunpack.c.l.b16 %v138
    %v1839 = vunpack.c.h.b16 %v138
    %v1840 = vunpack.c.l.b16 %v139
    %v1841 = vunpack.c.h.b16 %v139
    %v1842 = vunpack.c.l.b16 %v140
    %v1843 = vunpack.c.h.b16 %v140
    %v1844 = vunpack.c.l.b16 %v141
    %v1845 = vunpack.c.h.b16 %v141
    %v1846 = vunpack.c.l.b16 %v142
    %v1847 = vunpack.c.h.b16 %v142
    %v1848 = vunpack.c.l.b16 %v143
    %v1849 = vunpack.c.h.b16 %v143
    %v1850 = vunpack.c.l.b16 %v144
    %v1851 = vunpack.c.h.b16 %v144
    %v1852 = vunpack.c.l.b16 %v145
    %v1853 = vunpack.c.h.b16 %v145
    %v1854 = vunpack.c.l.b16 %v146
    %v1855 = vunpack.c.h.b16 %v146
    %v1856 = vunpack.c.l.b16 %v147
    %v1857 = vunpack.c.h.b16 %v147
    %v1858 = vunpack.c.l.b16 %v148
    %v1859 = vunpack.c.h.b16 %v148
    %v1860 = vunpack.c.l.b16 %v149
    %v1861 = vunpack.c.h.b16 %v149
    %v1862 = vunpack.c.l.b16 %v150
    %v1863 = vunpack.c.h.b16 %v150
    %v1864 = vunpack.c.l.b16 %v151
    %v1865 = vunpack.c.h.b16 %v151
    %v1866 = vunpack.c.l.b16 %v152
    %v1867 = vunpack.c.h.b16 %v152
    %v1868 = vunpack.c.l.b16 %v153
    %v1869 = vunpack.c.h.b16 %v153
    %v1870 = vunpack.c.l.b16 %v154
    %v1871 = vunpack.c.h.b16 %v154
    %v1872 = vunpack.c.l.b16 %v155
    %v1873 = vunpack.c.h.b16 %v155
    %v1874 = vunpack.c.l.b16 %v156
    %v1875 = vunpack.c.h.b16 %v156
    %v1876 = vunpack.c.l.b16 %v157
    %v1877 = vunpack.c.h.b16 %v157
    %v1878 = vunpack.c.l.b16 %v158
    %v1879 = vunpack.c.h.b16 %v158
    %v1880 = vunpack.c.l.b16 %v159
    %v1881 = vunpack.c.h.b16 %v159
    %v1882 = vunpack.c.l.b16 %v160
    %v1883 = vunpack.c.h.b16 %v160
    %v1884 = vunpack.c.l.b16 %v161
    %v1885 = vunpack.c.h.b16 %v161
    %v1886 = vunpack.c.l.b16 %v162
    %v1887 = vunpack.c.h.b16 %v162
    %v1888 = vunpack.c.l.b16 %v163
    %v1889 = vunpack.c.h.b16 %v163
    %v1890 = vunpack.c.l.b16 %v164
    %v1891 = vunpack.c.h.b16 %v164
    %v1892 = vunpack.c.l.b16 %v165
    %v1893 = vunpack.c.h.b16 %v165
    %v1894 = vunpack.c.l.b16 %v166
    %v1895 = vunpack.c.h.b16 %v166
    %v1896 = vunpack.c.l.b16 %v167
    %v1897 = vunpack.c.h.b16 %v167
    %v1898 = vunpack.c.l.b16 %v168
    %v1899 = vunpack.c.h.b16 %v168
    %v1900 = vunpack.c.l.b16 %v169
    %v1901 = vunpack.c.h.b16 %v169
    %v1902 = vunpack.c.l.b16 %v170
    %v1903 = vunpack.c.h.b16 %v170
    %v1904 = vunpack.c.l.b16 %v171
    %v1905 = vunpack.c.h.b16 %v171
    %v1906 = vunpack.c.l.b16 %v172
    %v1907 = vunpack.c.h.b16 %v172
    %v1908 = vunpack.c.l.b16 %v173
    %v1909 = vunpack.c.h.b16 %v173
    %v1910 = vunpack.c.l.b16 %v174
    %v1911 = vunpack.c.h.b16 %v174
    %v1912 = vunpack.c.l.b16 %v175
    %v1913 = vunpack.c.h.b16 %v175
    %v1914 = vunpack.c.l.b16 %v176
    %v1915 = vunpack.c.h.b16 %v176
    %v1916 = vunpack.c.l.b16 %v177
    %v1917 = vunpack.c.h.b16 %v177
    %v1918 = vunpack.c.l.b16 %v178
    %v1919 = vunpack.c.h.b16 %v178
    %v1920 = vunpack.c.l.b16 %v179
    %v1921 = vunpack.c.h.b16 %v179
    %v1922 = vunpack.c.l.b16 %v180
    %v1923 = vunpack.c.h.b16 %v180
    %v1924 = vunpack.c.l.b16 %v181
    %v1925 = vunpack.c.h.b16 %v181
    %v1926 = vunpack.c.l.b16 %v182
    %v1927 = vunpack.c.h.b16 %v182
    %v1928 = vunpack.c.l.b16 %v183
    %v1929 = vunpack.c.h.b16 %v183
    %v1930 = vunpack.c.l.b16 %v184
    %v1931 = vunpack.c.h.b16 %v184
    %v1932 = vunpack.c.l.b16 %v185
    %v1933 = vunpack.c.h.b16 %v185
    %v1934 = vunpack.c.l.b16 %v186
    %v1935 = vunpack.c.h.b16 %v186
    %v1936 = vunpack.c.l.b16 %v187
    %v1937 = vunpack.c.h.b16 %v187
    %v1938 = vunpack.c.l.b16 %v188
    %v1939 = vunpack.c.h.b16 %v188
    %v1940 = vunpack.c.l.b16 %v189
    %v1941 = vunpack.c.h.b16 %v189
    %v1942 = vunpack.c.l.b16 %v190
    %v1943 = vunpack.c.h.b16 %v190
    %v1944 = vunpack.c.l.b16 %v191
    %v1945 = vunpack.c.h.b16 %v191
    %v1946 = vunpack.c.l.b16 %v192
    %v1947 = vunpack.c.h.b16 %v192
    %v1948 = vunpack.c.l.b16 %v193
    %v1949 = vunpack.c.h.b16 %v193
    %v1950 = vunpack.c.l.b16 %v194
    %v1951 = vunpack.c.h.b16 %v194
    %v1952 = vunpack.c.l.b16 %v195
    %v1953 = vunpack.c.h.b16 %v195
    %v1954 = vunpack.c.l.b16 %v196
    %v1955 = vunpack.c.h.b16 %v196
    %v1956 = vunpack.c.l.b16 %v197
    %v1957 = vunpack.c.h.b16 %v197
    %v1958 = vunpack.c.l.b16 %v198
    %v1959 = vunpack.c.h.b16 %v198
    %v1960 = vunpack.c.l.b16 %v199
    %v1961 = vunpack.c.h.b16 %v199
    %v1962 = vunpack.c.l.b16 %v200
    %v1963 = vunpack.c.h.b16 %v200
    %v1964 = vunpack.c.l.b16 %v201
    %v1965 = vunpack.c.h.b16 %v201
    %v1966 = vunpack.c.l.b16 %v202
    %v1967 = vunpack.c.h.b16 %v202
    %v1968 = vunpack.c.l.b16 %v203
    %v1969 = vunpack.c.h.b16 %v203
    %v1970 = vunpack.c.l.b16 %v204
    %v1971 = vunpack.c.h.b16 %v204
    %v1972 = vunpack.c.l.b16 %v205
    %v1973 = vunpack.c.h.b16 %v205
    %v1974 = vunpack.c.l.b16 %v206
    %v1975 = vunpack.c.h.b16 %v206
    %v1976 = vunpack.c.l.b16 %v207
    %v1977 = vunpack.c.h.b16 %v207
    %v1978 = vunpack.c.l.b16 %v208
    %v1979 = vunpack.c.h.b16 %v208
    %v1980 = vunpack.c.l.b16 %v209
    %v1981 = vunpack.c.h.b16 %v209
    %v1982 = vunpack.c.l.b16 %v210
    %v1983 = vunpack.c.h.b16 %v210
    %v1984 = vunpack.c.l.b16 %v211
    %v1985 = vunpack.c.h.b16 %v211
    %v1986 = vunpack.c.l.b16 %v212
    %v1987 = vunpack.c.h.b16 %v212
    %v1988 = vunpack.c.l.b16 %v213
    %v1989 = vunpack.c.h.b16 %v213
    %v1990 = vunpack.c.l.b16 %v214
    %v1991 = vunpack.c.h.b16 %v214
    %v1992 = vunpack.c.l.b16 %v215
    %v1993 = vunpack.c.h.b16 %v215
    %v1994 = vunpack.c.l.b16 %v216
    %v1995 = vunpack.c.h.b16 %v216
    %v1996 = vunpack.c.l.b16 %v217
    %v1997 = vunpack.c.h.b16 %v217
    %v1998 = vunpack.c.l.b16 %v218
    %v1999 = vunpack.c.h.b16 %v218
    %v2000 = vunpack.c.l.b16 %v219
    %v2001 = vunpack.c.h.b16 %v219
    %v2002 = vunpack.c.l.b16 %v220
    %v2003 = vunpack.c.h.b16 %v220
    %v2004 = vunpack.c.l.b16 %v221
    %v2005 = vunpack.c.h.b16 %v221
    %v2006 = vunpack.c.l.b16 %v222
    %v2007 = vunpack.c.h.b16 %v222
    %v2008 = vunpack.c.l.b16 %v223
    %v2009 = vunpack.c.h.b16 %v223
    %v2010 = vunpack.c.l.b16 %v224
    %v2011 = vunpack.c.h.b16 %v224
    %v2012 = vunpack.c.l.b16 %v225
    %v2013 = vunpack.c.h.b16 %v225
    %v2014 = vunpack.c.l.b16 %v226
    %v2015 = vunpack.c.h.b16 %v226
    %v2016 = vunpack.c.l.b16 %v227
    %v2017 = vunpack.c.h.b16 %v227
    %v2018 = vunpack.c.l.b16 %v228
    %v2019 = vunpack.c.h.b16 %v228
    %v2020 = vunpack.c.l.b16 %v229
    %v2021 = vunpack.c.h.b16 %v229
    %v2022 = vunpack.c.l.b16 %v230
    %v2023 = vunpack.c.h.b16 %v230
    %v2024 = vunpack.c.l.b16 %v231
    %v2025 = vunpack.c.h.b16 %v231
    %v2026 = vunpack.c.l.b16 %v232
    %v2027 = vunpack.c.h.b16 %v232
    %v2028 = vunpack.c.l.b16 %v233
    %v2029 = vunpack.c.h.b16 %v233
    %v2030 = vunpack.c.l.b16 %v234
    %v2031 = vunpack.c.h.b16 %v234
    %v2032 = vunpack.c.l.b16 %v235
    %v2033 = vunpack.c.h.b16 %v235
    %v2034 = vunpack.c.l.b16 %v236
    %v2035 = vunpack.c.h.b16 %v236
    %v2036 = vunpack.c.l.b16 %v237
    %v2037 = vunpack.c.h.b16 %v237
    %v2038 = vunpack.c.l.b16 %v238
    %v2039 = vunpack.c.h.b16 %v238
    %v2040 = vunpack.c.l.b16 %v239
    %v2041 = vunpack.c.h.b16 %v239
    %v2042 = vunpack.c.l.b16 %v240
    %v2043 = vunpack.c.h.b16 %v240
    %v2044 = vunpack.c.l.b16 %v241
    %v2045 = vunpack.c.h.b16 %v241
    %v2046 = vunpack.c.l.b16 %v242
    %v2047 = vunpack.c.h.b16 %v242
    %v2048 = vunpack.c.l.b16 %v243
    %v2049 = vunpack.c.h.b16 %v243
    %v2050 = vunpack.c.l.b16 %v244
    %v2051 = vunpack.c.h.b16 %v244
    %v2052 = vunpack.c.l.b16 %v245
    %v2053 = vunpack.c.h.b16 %v245
    %v2054 = vunpack.c.l.b16 %v246
    %v2055 = vunpack.c.h.b16 %v246
    %v2056 = vunpack.c.l.b16 %v247
    %v2057 = vunpack.c.h.b16 %v247
    %v2058 = vunpack.c.l.b16 %v248
    %v2059 = vunpack.c.h.b16 %v248
    %v2060 = vunpack.c.l.b16 %v249
    %v2061 = vunpack.c.h.b16 %v249
    %v2062 = vunpack.c.l.b16 %v250
    %v2063 = vunpack.c.h.b16 %v250
    %v2064 = vunpack.c.l.b16 %v251
    %v2065 = vunpack.c.h.b16 %v251
    %v2066 = vunpack.c.l.b16 %v252
    %v2067 = vunpack.c.h.b16 %v252
    %v2068 = vunpack.c.l.b16 %v253
    %v2069 = vunpack.c.h.b16 %v253
    %v2070 = vunpack.c.l.b16 %v254
    %v2071 = vunpack.c.h.b16 %v254
    %v2072 = vunpack.c.l.b16 %v255
    %v2073 = vunpack.c.h.b16 %v255
    %v2074 = vunpack.c.l.b16 %v256
    %v2075 = vunpack.c.h.b16 %v256
    %v2076 = vunpack.c.l.b16 %v257
    %v2077 = vunpack.c.h.b16 %v257
    %v2078 = vunpack.c.l.b16 %v258
    %v2079 = vunpack.c.h.b16 %v258
    %v2080 = vunpack.c.l.b16 %v259
    %v2081 = vunpack.c.h.b16 %v259
    %v2082 = vunpack.c.l.b16 %v260
    %v2083 = vunpack.c.h.b16 %v260
    %v2084 = vunpack.c.l.b16 %v261
    %v2085 = vunpack.c.h.b16 %v261
    %v2086 = vunpack.c.l.b16 %v262
    %v2087 = vunpack.c.h.b16 %v262
    %v2088 = vunpack.c.l.b16 %v263
    %v2089 = vunpack.c.h.b16 %v263
    %v2090 = vunpack.c.l.b16 %v264
    %v2091 = vunpack.c.h.b16 %v264
    %v2092 = vunpack.c.l.b16 %v265
    %v2093 = vunpack.c.h.b16 %v265
    %v2094 = vunpack.c.l.b16 %v266
    %v2095 = vunpack.c.h.b16 %v266
    %v2096 = vunpack.c.l.b16 %v267
    %v2097 = vunpack.c.h.b16 %v267
    %v2098 = vunpack.c.l.b16 %v268
    %v2099 = vunpack.c.h.b16 %v268
    %v2100 = vunpack.c.l.b16 %v269
    %v2101 = vunpack.c.h.b16 %v269
    %v2102 = vunpack.c.l.b16 %v270
    %v2103 = vunpack.c.h.b16 %v270
    %v2104 = vunpack.c.l.b16 %v271
    %v2105 = vunpack.c.h.b16 %v271
    %v2106 = vunpack.c.l.b16 %v272
    %v2107 = vunpack.c.h.b16 %v272
    %v2108 = vunpack.c.l.b16 %v273
    %v2109 = vunpack.c.h.b16 %v273
    %v2110 = vunpack.c.l.b16 %v274
    %v2111 = vunpack.c.h.b16 %v274
    %v2112 = vunpack.c.l.b16 %v275
    %v2113 = vunpack.c.h.b16 %v275
    %v2114 = vunpack.c.l.b16 %v276
    %v2115 = vunpack.c.h.b16 %v276
    %v2116 = vunpack.c.l.b16 %v277
    %v2117 = vunpack.c.h.b16 %v277
    %v2118 = vunpack.c.l.b16 %v278
    %v2119 = vunpack.c.h.b16 %v278
    %v2120 = vunpack.c.l.b16 %v279
    %v2121 = vunpack.c.h.b16 %v279
    %v2122 = vunpack.c.l.b16 %v280
    %v2123 = vunpack.c.h.b16 %v280
    %v2124 = vunpack.c.l.b16 %v281
    %v2125 = vunpack.c.h.b16 %v281
    %v2126 = vunpack.c.l.b16 %v282
    %v2127 = vunpack.c.h.b16 %v282
    %v2128 = vunpack.c.l.b16 %v283
    %v2129 = vunpack.c.h.b16 %v283
    %v2130 = vunpack.c.l.b16 %v284
    %v2131 = vunpack.c.h.b16 %v284
    %v2132 = vunpack.c.l.b16 %v285
    %v2133 = vunpack.c.h.b16 %v285
    %v2134 = vunpack.c.l.b16 %v286
    %v2135 = vunpack.c.h.b16 %v286
    %v2136 = vunpack.c.l.b16 %v287
    %v2137 = vunpack.c.h.b16 %v287
    %v2138 = vunpack.c.l.b16 %v288
    %v2139 = vunpack.c.h.b16 %v288
    %v2140 = vunpack.c.l.b16 %v289
    %v2141 = vunpack.c.h.b16 %v289
    %v2142 = vunpack.c.l.b16 %v290
    %v2143 = vunpack.c.h.b16 %v290
    %v2144 = vunpack.c.l.b16 %v291
    %v2145 = vunpack.c.h.b16 %v291
    %v2146 = vunpack.c.l.b16 %v292
    %v2147 = vunpack.c.h.b16 %v292
    %v2148 = vunpack.c.l.b16 %v293
    %v2149 = vunpack.c.h.b16 %v293
    %v2150 = vunpack.c.l.b16 %v294
    %v2151 = vunpack.c.h.b16 %v294
    %v2152 = vunpack.c.l.b16 %v295
    %v2153 = vunpack.c.h.b16 %v295
    %v2154 = vunpack.c.l.b16 %v296
    %v2155 = vunpack.c.h.b16 %v296
    %v2156 = vunpack.c.l.b16 %v297
    %v2157 = vunpack.c.h.b16 %v297
    %v2158 = vunpack.c.l.b16 %v298
    %v2159 = vunpack.c.h.b16 %v298
    %v2160 = vunpack.c.l.b16 %v299
    %v2161 = vunpack.c.h.b16 %v299
    %v2162 = vunpack.c.l.b16 %v300
    %v2163 = vunpack.c.h.b16 %v300
    %v2164 = vunpack.c.l.b16 %v301
    %v2165 = vunpack.c.h.b16 %v301
    %v2166 = vunpack.c.l.b16 %v302
    %v2167 = vunpack.c.h.b16 %v302
    %v2168 = vunpack.c.l.b16 %v303
    %v2169 = vunpack.c.h.b16 %v303
    %v2170 = vunpack.c.l.b16 %v304
    %v2171 = vunpack.c.h.b16 %v304
    %v2172 = vunpack.c.l.b16 %v305
    %v2173 = vunpack.c.h.b16 %v305
    %v2174 = vunpack.c.l.b16 %v306
    %v2175 = vunpack.c.h.b16 %v306
    %v2176 = vunpack.c.l.b16 %v307
    %v2177 = vunpack.c.h.b16 %v307
    %v2178 = vunpack.c.l.b16 %v308
    %v2179 = vunpack.c.h.b16 %v308
    %v2180 = vunpack.c.l.b16 %v309
    %v2181 = vunpack.c.h.b16 %v309
    %v2182 = vunpack.c.l.b16 %v310
    %v2183 = vunpack.c.h.b16 %v310
    %v2184 = vunpack.c.l.b16 %v311
    %v2185 = vunpack.c.h.b16 %v311
    %v2186 = vunpack.c.l.b16 %v312
    %v2187 = vunpack.c.h.b16 %v312
    %v2188 = vunpack.c.l.b16 %v313
    %v2189 = vunpack.c.h.b16 %v313
    %v2190 = vunpack.c.l.b16 %v314
    %v2191 = vunpack.c.h.b16 %v314
    %v2192 = vunpack.c.l.b16 %v315
    %v2193 = vunpack.c.h.b16 %v315
    %v2194 = vunpack.c.l.b16 %v316
    %v2195 = vunpack.c.h.b16 %v316
    %v2196 = vunpack.c.l.b16 %v317
    %v2197 = vunpack.c.h.b16 %v317
    %v2198 = vunpack.c.l.b16 %v318
    %v2199 = vunpack.c.h.b16 %v318
    %v2200 = vunpack.c.l.b16 %v319
    %v2201 = vunpack.c.h.b16 %v319
    %v2202 = vunpack.c.l.b16 %v320
    %v2203 = vunpack.c.h.b16 %v320
    %v2204 = vunpack.c.l.b16 %v321
    %v2205 = vunpack.c.h.b16 %v321
    %v2206 = vunpack.c.l.b16 %v322
    %v2207 = vunpack.c.h.b16 %v322
    %v2208 = vunpack.c.l.b16 %v323
    %v2209 = vunpack.c.h.b16 %v323
    %v2210 = vunpack.c.l.b16 %v324
    %v2211 = vunpack.c.h.b16 %v324
    %v2212 = vunpack.c.l.b16 %v325
    %v2213 = vunpack.c.h.b16 %v325
    %v2214 = vunpack.c.l.b16 %v326
    %v2215 = vunpack.c.h.b16 %v326
    %v2216 = vunpack.c.l.b16 %v327
    %v2217 = vunpack.c.h.b16 %v327
    %v2218 = vunpack.c.l.b16 %v328
    %v2219 = vunpack.c.h.b16 %v328
    %v2220 = vunpack.c.l.b16 %v329
    %v2221 = vunpack.c.h.b16 %v329
    %v2222 = vunpack.c.l.b16 %v330
    %v2223 = vunpack.c.h.b16 %v330
    %v2224 = vunpack.c.l.b16 %v331
    %v2225 = vunpack.c.h.b16 %v331
    %v2226 = vunpack.c.l.b16 %v332
    %v2227 = vunpack.c.h.b16 %v332
    %v2228 = vunpack.c.l.b16 %v333
    %v2229 = vunpack.c.h.b16 %v333
    %v2230 = vunpack.c.l.b16 %v334
    %v2231 = vunpack.c.h.b16 %v334
    %v2232 = vunpack.c.l.b16 %v335
    %v2233 = vunpack.c.h.b16 %v335
    %v2234 = vunpack.c.l.b16 %v336
    %v2235 = vunpack.c.h.b16 %v336
    %v2236 = vunpack.c.l.b16 %v337
    %v2237 = vunpack.c.h.b16 %v337
    %v2238 = vunpack.c.l.b16 %v338
    %v2239 = vunpack.c.h.b16 %v338
    %v2240 = vunpack.c.l.b16 %v339
    %v2241 = vunpack.c.h.b16 %v339
    %v2242 = vunpack.c.l.b16 %v340
    %v2243 = vunpack.c.h.b16 %v340
    %v2244 = vunpack.c.l.b16 %v341
    %v2245 = vunpack.c.h.b16 %v341
    %v2246 = vunpack.c.l.b16 %v342
    %v2247 = vunpack.c.h.b16 %v342
    %v2248 = vunpack.c.l.b16 %v343
    %v2249 = vunpack.c.h.b16 %v343
    %v2250 = vunpack.c.l.b16 %v344
    %v2251 = vunpack.c.h.b16 %v344
    %v2252 = vunpack.c.l.b16 %v345
    %v2253 = vunpack.c.h.b16 %v345
    %v2254 = vunpack.c.l.b16 %v346
    %v2255 = vunpack.c.h.b16 %v346
    %v2256 = vunpack.c.l.b16 %v347
    %v2257 = vunpack.c.h.b16 %v347
    %v2258 = vunpack.c.l.b16 %v348
    %v2259 = vunpack.c.h.b16 %v348
    %v2260 = vunpack.c.l.b16 %v349
    %v2261 = vunpack.c.h.b16 %v349
    %v2262 = vunpack.c.l.b16 %v350
    %v2263 = vunpack.c.h.b16 %v350
    %v2264 = vunpack.c.l.b16 %v351
    %v2265 = vunpack.c.h.b16 %v351
    %v2266 = vunpack.c.l.b16 %v352
    %v2267 = vunpack.c.h.b16 %v352
    %v2268 = vunpack.c.l.b16 %v353
    %v2269 = vunpack.c.h.b16 %v353
    %v2270 = vunpack.c.l.b16 %v354
    %v2271 = vunpack.c.h.b16 %v354
    %v2272 = vunpack.c.l.b16 %v355
    %v2273 = vunpack.c.h.b16 %v355
    %v2274 = vunpack.c.l.b16 %v356
    %v2275 = vunpack.c.h.b16 %v356
    %v2276 = vunpack.c.l.b16 %v357
    %v2277 = vunpack.c.h.b16 %v357
    %v2278 = vunpack.c.l.b16 %v358
    %v2279 = vunpack.c.h.b16 %v358
    %v2280 = vunpack.c.l.b16 %v359
    %v2281 = vunpack.c.h.b16 %v359
    %v2282 = vunpack.c.l.b16 %v360
    %v2283 = vunpack.c.h.b16 %v360
    %v2284 = vunpack.c.l.b16 %v361
    %v2285 = vunpack.c.h.b16 %v361
    %v2286 = vunpack.c.l.b16 %v362
    %v2287 = vunpack.c.h.b16 %v362
    %v2288 = vunpack.c.l.b16 %v363
    %v2289 = vunpack.c.h.b16 %v363
    %v2290 = vunpack.c.l.b16 %v364
    %v2291 = vunpack.c.h.b16 %v364
    %v2292 = vunpack.c.l.b16 %v365
    %v2293 = vunpack.c.h.b16 %v365
    %v2294 = vunpack.c.l.b16 %v366
    %v2295 = vunpack.c.h.b16 %v366
    %v2296 = vunpack.c.l.b16 %v367
    %v2297 = vunpack.c.h.b16 %v367
    %v2298 = vunpack.c.l.b16 %v368
    %v2299 = vunpack.c.h.b16 %v368
    %v2300 = vunpack.c.l.b16 %v369
    %v2301 = vunpack.c.h.b16 %v369
    %v2302 = vunpack.c.l.b16 %v370
    %v2303 = vunpack.c.h.b16 %v370
    %v2304 = vunpack.c.l.b16 %v371
    %v2305 = vunpack.c.h.b16 %v371
    %v2306 = vunpack.c.l.b16 %v372
    %v2307 = vunpack.c.h.b16 %v372
    %v2308 = vunpack.c.l.b16 %v373
    %v2309 = vunpack.c.h.b16 %v373
    %v2310 = vunpack.c.l.b16 %v374
    %v2311 = vunpack.c.h.b16 %v374
    %v2312 = vunpack.c.l.b16 %v375
    %v2313 = vunpack.c.h.b16 %v375
    %v2314 = vunpack.c.l.b16 %v376
    %v2315 = vunpack.c.h.b16 %v376
    %v2316 = vunpack.c.l.b16 %v377
    %v2317 = vunpack.c.h.b16 %v377
    %v2318 = vunpack.c.l.b16 %v378
    %v2319 = vunpack.c.h.b16 %v378
    %v2320 = vunpack.c.l.b16 %v379
    %v2321 = vunpack.c.h.b16 %v379
    %v2322 = vunpack.c.l.b16 %v380
    %v2323 = vunpack.c.h.b16 %v380
    %v2324 = vunpack.c.l.b16 %v381
    %v2325 = vunpack.c.h.b16 %v381
    %v2326 = vunpack.c.l.b16 %v382
    %v2327 = vunpack.c.h.b16 %v382
    %v2328 = vunpack.c.l.b16 %v383
    %v2329 = vunpack.c.h.b16 %v383
    %v2330 = vunpack.c.l.b16 %v384
    %v2331 = vunpack.c.h.b16 %v384
    %v2332 = vunpack.c.l.b16 %v385
    %v2333 = vunpack.c.h.b16 %v385
    %v2334 = vunpack.c.l.b16 %v386
    %v2335 = vunpack.c.h.b16 %v386
    %v2336 = vunpack.c.l.b16 %v387
    %v2337 = vunpack.c.h.b16 %v387
    %v2338 = vunpack.c.l.b16 %v388
    %v2339 = vunpack.c.h.b16 %v388
    %v2340 = vunpack.c.l.b16 %v389
    %v2341 = vunpack.c.h.b16 %v389
    %v2342 = vunpack.c.l.b16 %v390
    %v2343 = vunpack.c.h.b16 %v390
    %v2344 = vunpack.c.l.b16 %v391
    %v2345 = vunpack.c.h.b16 %v391
    %v2346 = vunpack.c.l.b16 %v392
    %v2347 = vunpack.c.h.b16 %v392
    %v2348 = vunpack.c.l.b16 %v393
    %v2349 = vunpack.c.h.b16 %v393
    %v2350 = vunpack.c.l.b16 %v394
    %v2351 = vunpack.c.h.b16 %v394
    %v2352 = vunpack.c.l.b16 %v395
    %v2353 = vunpack.c.h.b16 %v395
    %v2354 = vunpack.c.l.b16 %v396
    %v2355 = vunpack.c.h.b16 %v396
    %v2356 = vunpack.c.l.b16 %v397
    %v2357 = vunpack.c.h.b16 %v397
    %v2358 = vunpack.c.l.b16 %v398
    %v2359 = vunpack.c.h.b16 %v398
    %v2360 = vunpack.c.l.b16 %v399
    %v2361 = vunpack.c.h.b16 %v399
    %v2362 = vunpack.c.l.b16 %v400
    %v2363 = vunpack.c.h.b16 %v400
    %v2364 = vunpack.c.l.b16 %v401
    %v2365 = vunpack.c.h.b16 %v401
    %v2366 = vunpack.c.l.b16 %v402
    %v2367 = vunpack.c.h.b16 %v402
    %v2368 = vunpack.c.l.b16 %v403
    %v2369 = vunpack.c.h.b16 %v403
    %v2370 = vunpack.c.l.b16 %v404
    %v2371 = vunpack.c.h.b16 %v404
    %v2372 = vunpack.c.l.b16 %v405
    %v2373 = vunpack.c.h.b16 %v405
    %v2374 = vunpack.c.l.b16 %v406
    %v2375 = vunpack.c.h.b16 %v406
    %v2376 = vunpack.c.l.b16 %v407
    %v2377 = vunpack.c.h.b16 %v407
    %v2378 = vunpack.c.l.b16 %v408
    %v2379 = vunpack.c.h.b16 %v408
    %v2380 = vunpack.c.l.b16 %v409
    %v2381 = vunpack.c.h.b16 %v409
    %v2382 = vunpack.c.l.b16 %v410
    %v2383 = vunpack.c.h.b16 %v410
    %v2384 = vunpack.c.l.b16 %v411
    %v2385 = vunpack.c.h.b16 %v411
    %v2386 = vunpack.c.l.b16 %v412
    %v2387 = vunpack.c.h.b16 %v412
    %v2388 = vunpack.c.l.b16 %v413
    %v2389 = vunpack.c.h.b16 %v413
    %v2390 = vunpack.c.l.b16 %v414
    %v2391 = vunpack.c.h.b16 %v414
    %v2392 = vunpack.c.l.b16 %v415
    %v2393 = vunpack.c.h.b16 %v415
    %v2394 = vunpack.c.l.b16 %v416
    %v2395 = vunpack.c.h.b16 %v416
    %v2396 = vunpack.c.l.b16 %v417
    %v2397 = vunpack.c.h.b16 %v417
    %v2398 = vunpack.c.l.b16 %v418
    %v2399 = vunpack.c.h.b16 %v418
    %v2400 = vunpack.c.l.b16 %v419
    %v2401 = vunpack.c.h.b16 %v419
    %v2402 = vunpack.c.l.b16 %v420
    %v2403 = vunpack.c.h.b16 %v420
    %v2404 = vunpack.c.l.b16 %v421
    %v2405 = vunpack.c.h.b16 %v421
    %v2406 = vunpack.c.l.b16 %v422
    %v2407 = vunpack.c.h.b16 %v422
    %v2408 = vunpack.c.l.b16 %v423
    %v2409 = vunpack.c.h.b16 %v423
    %v2410 = vunpack.c.l.b16 %v424
    %v2411 = vunpack.c.h.b16 %v424
    %v2412 = vunpack.c.l.b16 %v425
    %v2413 = vunpack.c.h.b16 %v425
    %v2414 = vunpack.c.l.b16 %v426
    %v2415 = vunpack.c.h.b16 %v426
    %v2416 = vunpack.c.l.b16 %v427
    %v2417 = vunpack.c.h.b16 %v427
    %v2418 = vunpack.c.l.b16 %v428
    %v2419 = vunpack.c.h.b16 %v428
    %v2420 = vunpack.c.l.b16 %v429
    %v2421 = vunpack.c.h.b16 %v429
    %v2422 = vunpack.c.l.b16 %v430
    %v2423 = vunpack.c.h.b16 %v430
    %v2424 = vunpack.c.l.b16 %v431
    %v2425 = vunpack.c.h.b16 %v431
    %v2426 = vunpack.c.l.b16 %v432
    %v2427 = vunpack.c.h.b16 %v432
    %v2428 = vunpack.c.l.b16 %v433
    %v2429 = vunpack.c.h.b16 %v433
    %v2430 = vunpack.c.l.b16 %v434
    %v2431 = vunpack.c.h.b16 %v434
    %v2432 = vunpack.c.l.b16 %v435
    %v2433 = vunpack.c.h.b16 %v435
    %v2434 = vunpack.c.l.b16 %v436
    %v2435 = vunpack.c.h.b16 %v436
    %v2436 = vunpack.c.l.b16 %v437
    %v2437 = vunpack.c.h.b16 %v437
    %v2438 = vunpack.c.l.b16 %v438
    %v2439 = vunpack.c.h.b16 %v438
    %v2440 = vunpack.c.l.b16 %v439
    %v2441 = vunpack.c.h.b16 %v439
    %v2442 = vunpack.c.l.b16 %v440
    %v2443 = vunpack.c.h.b16 %v440
    %v2444 = vunpack.c.l.b16 %v441
    %v2445 = vunpack.c.h.b16 %v441
    %v2446 = vunpack.c.l.b16 %v442
    %v2447 = vunpack.c.h.b16 %v442
    %v2448 = vunpack.c.l.b16 %v443
    %v2449 = vunpack.c.h.b16 %v443
    %v2450 = vunpack.c.l.b16 %v444
    %v2451 = vunpack.c.h.b16 %v444
    %v2452 = vunpack.c.l.b16 %v445
    %v2453 = vunpack.c.h.b16 %v445
    %v2454 = vunpack.c.l.b16 %v446
    %v2455 = vunpack.c.h.b16 %v446
    %v2456 = vunpack.c.l.b16 %v447
    %v2457 = vunpack.c.h.b16 %v447
    %v2458 = vunpack.c.l.b16 %v448
    %v2459 = vunpack.c.h.b16 %v448
    %v2460 = vunpack.c.l.b16 %v449
    %v2461 = vunpack.c.h.b16 %v449
    %v2462 = vunpack.c.l.b16 %v450
    %v2463 = vunpack.c.h.b16 %v450
    %v2464 = vunpack.c.l.b16 %v451
    %v2465 = vunpack.c.h.b16 %v451
    %v2466 = vunpack.c.l.b16 %v452
    %v2467 = vunpack.c.h.b16 %v452
    %v2468 = vunpack.c.l.b16 %v453
    %v2469 = vunpack.c.h.b16 %v453
    %v2470 = vunpack.c.l.b16 %v454
    %v2471 = vunpack.c.h.b16 %v454
    %v2472 = vunpack.c.l.b16 %v455
    %v2473 = vunpack.c.h.b16 %v455
    %v2474 = vunpack.c.l.b16 %v456
    %v2475 = vunpack.c.h.b16 %v456
    %v2476 = vunpack.c.l.b16 %v457
    %v2477 = vunpack.c.h.b16 %v457
    %v2478 = vunpack.c.l.b16 %v458
    %v2479 = vunpack.c.h.b16 %v458
    %v2480 = vunpack.c.l.b16 %v459
    %v2481 = vunpack.c.h.b16 %v459
    %v2482 = vunpack.c.l.b16 %v460
    %v2483 = vunpack.c.h.b16 %v460
    %v2484 = vunpack.c.l.b16 %v461
    %v2485 = vunpack.c.h.b16 %v461
    %v2486 = vunpack.c.l.b16 %v462
    %v2487 = vunpack.c.h.b16 %v462
    %v2488 = vunpack.c.l.b16 %v463
    %v2489 = vunpack.c.h.b16 %v463
    %v2490 = vunpack.c.l.b16 %v464
    %v2491 = vunpack.c.h.b16 %v464
    %v2492 = vunpack.c.l.b16 %v465
    %v2493 = vunpack.c.h.b16 %v465
    %v2494 = vunpack.c.l.b16 %v466
    %v2495 = vunpack.c.h.b16 %v466
    %v2496 = vunpack.c.l.b16 %v467
    %v2497 = vunpack.c.h.b16 %v467
    %v2498 = vunpack.c.l.b16 %v468
    %v2499 = vunpack.c.h.b16 %v468
    %v2500 = vunpack.c.l.b16 %v469
    %v2501 = vunpack.c.h.b16 %v469
    %v2502 = vunpack.c.l.b16 %v470
    %v2503 = vunpack.c.h.b16 %v470
    %v2504 = vunpack.c.l.b16 %v471
    %v2505 = vunpack.c.h.b16 %v471
    %v2506 = vunpack.c.l.b16 %v472
    %v2507 = vunpack.c.h.b16 %v472
    %v2508 = vunpack.c.l.b16 %v473
    %v2509 = vunpack.c.h.b16 %v473
    %v2510 = vunpack.c.l.b16 %v474
    %v2511 = vunpack.c.h.b16 %v474
    %v2512 = vunpack.c.l.b16 %v475
    %v2513 = vunpack.c.h.b16 %v475
    %v2514 = vunpack.c.l.b16 %v476
    %v2515 = vunpack.c.h.b16 %v476
    %v2516 = vunpack.c.l.b16 %v477
    %v2517 = vunpack.c.h.b16 %v477
    %v2518 = vunpack.c.l.b16 %v478
    %v2519 = vunpack.c.h.b16 %v478
    %v2520 = vunpack.c.l.b16 %v479
    %v2521 = vunpack.c.h.b16 %v479
    %v2522 = vunpack.c.l.b16 %v480
    %v2523 = vunpack.c.h.b16 %v480
    %v2524 = vunpack.c.l.b16 %v481
    %v2525 = vunpack.c.h.b16 %v481
    %v2526 = vunpack.c.l.b16 %v482
    %v2527 = vunpack.c.h.b16 %v482
    %v2528 = vunpack.c.l.b16 %v483
    %v2529 = vunpack.c.h.b16 %v483
    %v2530 = vunpack.c.l.b16 %v484
    %v2531 = vunpack.c.h.b16 %v484
    %v2532 = vunpack.c.l.b16 %v485
    %v2533 = vunpack.c.h.b16 %v485
    %v2534 = vunpack.c.l.b16 %v486
    %v2535 = vunpack.c.h.b16 %v486
    %v2536 = vunpack.c.l.b16 %v487
    %v2537 = vunpack.c.h.b16 %v487
    %v2538 = vunpack.c.l.b16 %v488
    %v2539 = vunpack.c.h.b16 %v488
    %v2540 = vunpack.c.l.b16 %v489
    %v2541 = vunpack.c.h.b16 %v489
    %v2542 = vunpack.c.l.b16 %v490
    %v2543 = vunpack.c.h.b16 %v490
    %v2544 = vunpack.c.l.b16 %v491
    %v2545 = vunpack.c.h.b16 %v491
    %v2546 = vunpack.c.l.b16 %v492
    %v2547 = vunpack.c.h.b16 %v492
    %v2548 = vunpack.c.l.b16 %v493
    %v2549 = vunpack.c.h.b16 %v493
    %v2550 = vunpack.c.l.b16 %v494
    %v2551 = vunpack.c.h.b16 %v494
    %v2552 = vunpack.c.l.b16 %v495
    %v2553 = vunpack.c.h.b16 %v495
    %v2554 = vunpack.c.l.b16 %v496
    %v2555 = vunpack.c.h.b16 %v496
    %v2556 = vunpack.c.l.b16 %v497
    %v2557 = vunpack.c.h.b16 %v497
    %v2558 = vunpack.c.l.b16 %v498
    %v2559 = vunpack.c.h.b16 %v498
    %v2560 = vunpack.c.l.b16 %v499
    %v2561 = vunpack.c.h.b16 %v499
    %v2562 = vunpack.c.l.b16 %v500
    %v2563 = vunpack.c.h.b16 %v500
    %v2564 = vunpack.c.l.b16 %v501
    %v2565 = vunpack.c.h.b16 %v501
    %v2566 = vunpack.c.l.b16 %v502
    %v2567 = vunpack.c.h.b16 %v502
    %v2568 = vunpack.c.l.b16 %v503
    %v2569 = vunpack.c.h.b16 %v503
    %v2570 = vunpack.c.l.b16 %v504
    %v2571 = vunpack.c.h.b16 %v504
    %v2572 = vunpack.c.l.b16 %v505
    %v2573 = vunpack.c.h.b16 %v505
    %v2574 = vunpack.c.l.b16 %v506
    %v2575 = vunpack.c.h.b16 %v506
    %v2576 = vunpack.c.l.b16 %v507
    %v2577 = vunpack.c.h.b16 %v507
    %v2578 = vunpack.c.l.b16 %v508
    %v2579 = vunpack.c.h.b16 %v508
    %v2580 = vunpack.c.l.b16 %v509
    %v2581 = vunpack.c.h.b16 %v509
    %v2582 = vunpack.c.l.b16 %v510
    %v2583 = vunpack.c.h.b16 %v510
    %v2584 = vunpack.c.l.b16 %v511
    %v2585 = vunpack.c.h.b16 %v511
    %v2586 = vunpack.c.l.b16 %v512
    %v2587 = vunpack.c.h.b16 %v512
    %v2588 = vunpack.c.l.b16 %v513
    %v2589 = vunpack.c.h.b16 %v513
    %v2590 = vunpack.c.l.b16 %v514
    %v2591 = vunpack.c.h.b16 %v514
    %v2592 = vunpack.c.l.b16 %v515
    %v2593 = vunpack.c.h.b16 %v515
    %v2594 = vunpack.c.l.b16 %v516
    %v2595 = vunpack.c.h.b16 %v516
    %v2596 = vunpack.c.l.b16 %v517
    %v2597 = vunpack.c.h.b16 %v517
    %v2598 = vunpack.c.l.b16 %v518
    %v2599 = vunpack.c.h.b16 %v518
    %v2600 = vunpack.c.l.b16 %v519
    %v2601 = vunpack.c.h.b16 %v519
    %v2602 = vunpack.c.l.b16 %v520
    %v2603 = vunpack.c.h.b16 %v520
    %v2604 = vunpack.c.l.b16 %v521
    %v2605 = vunpack.c.h.b16 %v521
    %v2606 = vunpack.c.l.b16 %v522
    %v2607 = vunpack.c.h.b16 %v522
    %v2608 = vunpack.c.l.b16 %v523
    %v2609 = vunpack.c.h.b16 %v523
    %v2610 = vunpack.c.l.b16 %v524
    %v2611 = vunpack.c.h.b16 %v524
    %v2612 = vunpack.c.l.b16 %v525
    %v2613 = vunpack.c.h.b16 %v525
    %v2614 = vunpack.c.l.b16 %v526
    %v2615 = vunpack.c.h.b16 %v526
    %v2616 = vunpack.c.l.b16 %v527
    %v2617 = vunpack.c.h.b16 %v527
    %v2618 = vunpack.c.l.b16 %v528
    %v2619 = vunpack.c.h.b16 %v528
    %v2620 = vunpack.c.l.b16 %v529
    %v2621 = vunpack.c.h.b16 %v529
    %v2622 = vunpack.c.l.b16 %v530
    %v2623 = vunpack.c.h.b16 %v530
    %v2624 = vunpack.c.l.b16 %v531
    %v2625 = vunpack.c.h.b16 %v531
    %v2626 = vunpack.c.l.b16 %v532
    %v2627 = vunpack.c.h.b16 %v532
    %v2628 = vunpack.c.l.b16 %v533
    %v2629 = vunpack.c.h.b16 %v533
    %v2630 = vunpack.c.l.b16 %v534
    %v2631 = vunpack.c.h.b16 %v534
    %v2632 = vunpack.c.l.b16 %v535
    %v2633 = vunpack.c.h.b16 %v535
    %v2634 = vunpack.c.l.b16 %v536
    %v2635 = vunpack.c.h.b16 %v536
    %v2636 = vunpack.c.l.b16 %v537
    %v2637 = vunpack.c.h.b16 %v537
    %v2638 = vunpack.c.l.b16 %v538
    %v2639 = vunpack.c.h.b16 %v538
    %v2640 = vunpack.c.l.b16 %v539
    %v2641 = vunpack.c.h.b16 %v539
    %v2642 = vunpack.c.l.b16 %v540
    %v2643 = vunpack.c.h.b16 %v540
    %v2644 = vunpack.c.l.b16 %v541
    %v2645 = vunpack.c.h.b16 %v541
    %v2646 = vunpack.c.l.b16 %v542
    %v2647 = vunpack.c.h.b16 %v542
    %v2648 = vunpack.c.l.b16 %v543
    %v2649 = vunpack.c.h.b16 %v543
    %v2650 = vunpack.c.l.b16 %v544
    %v2651 = vunpack.c.h.b16 %v544
    %v2652 = vunpack.c.l.b16 %v545
    %v2653 = vunpack.c.h.b16 %v545
    %v2654 = vunpack.c.l.b16 %v546
    %v2655 = vunpack.c.h.b16 %v546
    %v2656 = vunpack.c.l.b16 %v547
    %v2657 = vunpack.c.h.b16 %v547
    %v2658 = vunpack.c.l.b16 %v548
    %v2659 = vunpack.c.h.b16 %v548
    %v2660 = vunpack.c.l.b16 %v549
    %v2661 = vunpack.c.h.b16 %v549
    %v2662 = vunpack.c.l.b16 %v550
    %v2663 = vunpack.c.h.b16 %v550
    %v2664 = vunpack.c.l.b16 %v551
    %v2665 = vunpack.c.h.b16 %v551
    %v2666 = vunpack.c.l.b16 %v552
    %v2667 = vunpack.c.h.b16 %v552
    %v2668 = vunpack.c.l.b16 %v553
    %v2669 = vunpack.c.h.b16 %v553
    %v2670 = vunpack.c.l.b16 %v554
    %v2671 = vunpack.c.h.b16 %v554
    %v2672 = vunpack.c.l.b16 %v555
    %v2673 = vunpack.c.h.b16 %v555
    %v2674 = vunpack.c.l.b16 %v556
    %v2675 = vunpack.c.h.b16 %v556
    %v2676 = vunpack.c.l.b16 %v557
    %v2677 = vunpack.c.h.b16 %v557
    %v2678 = vunpack.c.l.b16 %v558
    %v2679 = vunpack.c.h.b16 %v558
    %v2680 = vunpack.c.l.b16 %v559
    %v2681 = vunpack.c.h.b16 %v559
    %v2682 = vunpack.c.l.b16 %v560
    %v2683 = vunpack.c.h.b16 %v560
    %v2684 = vunpack.c.l.b16 %v561
    %v2685 = vunpack.c.h.b16 %v561
    %v2686 = vunpack.c.l.b16 %v562
    %v2687 = vunpack.c.h.b16 %v562
    %v2688 = vunpack.c.l.b16 %v563
    %v2689 = vunpack.c.h.b16 %v563
    %v2690 = vunpack.c.l.b16 %v564
    %v2691 = vunpack.c.h.b16 %v564
    %v2692 = vunpack.c.l.b16 %v565
    %v2693 = vunpack.c.h.b16 %v565
    %v2694 = vunpack.c.l.b16 %v566
    %v2695 = vunpack.c.h.b16 %v566
    %v2696 = vunpack.c.l.b16 %v567
    %v2697 = vunpack.c.h.b16 %v567
    %v2698 = vunpack.c.l.b16 %v568
    %v2699 = vunpack.c.h.b16 %v568
    %v2700 = vunpack.c.l.b16 %v569
    %v2701 = vunpack.c.h.b16 %v569
    %v2702 = vunpack.c.l.b16 %v570
    %v2703 = vunpack.c.h.b16 %v570
    %v2704 = vunpack.c.l.b16 %v571
    %v2705 = vunpack.c.h.b16 %v571
    %v2706 = vunpack.c.l.b16 %v572
    %v2707 = vunpack.c.h.b16 %v572
    %v2708 = vunpack.c.l.b16 %v573
    %v2709 = vunpack.c.h.b16 %v573
    %v2710 = vunpack.c.l.b16 %v574
    %v2711 = vunpack.c.h.b16 %v574
    %v2712 = vunpack.c.l.b16 %v575
    %v2713 = vunpack.c.h.b16 %v575
    %v2714 = vunpack.c.l.b16 %v576
    %v2715 = vunpack.c.h.b16 %v576
    %v2716 = vunpack.c.l.b16 %v577
    %v2717 = vunpack.c.h.b16 %v577
    %v2718 = vunpack.c.l.b16 %v578
    %v2719 = vunpack.c.h.b16 %v578
    %v2720 = vunpack.c.l.b16 %v579
    %v2721 = vunpack.c.h.b16 %v579
    %v2722 = vunpack.c.l.b16 %v580
    %v2723 = vunpack.c.h.b16 %v580
    %v2724 = vunpack.c.l.b16 %v581
    %v2725 = vunpack.c.h.b16 %v581
    %v2726 = vunpack.c.l.b16 %v582
    %v2727 = vunpack.c.h.b16 %v582
    %v2728 = vunpack.c.l.b16 %v583
    %v2729 = vunpack.c.h.b16 %v583
    %v2730 = vunpack.c.l.b16 %v584
    %v2731 = vunpack.c.h.b16 %v584
    %v2732 = vunpack.c.l.b16 %v585
    %v2733 = vunpack.c.h.b16 %v585
    %v2734 = vunpack.c.l.b16 %v586
    %v2735 = vunpack.c.h.b16 %v586
    %v2736 = vunpack.c.l.b16 %v587
    %v2737 = vunpack.c.h.b16 %v587
    %v2738 = vunpack.c.l.b16 %v588
    %v2739 = vunpack.c.h.b16 %v588
    %v2740 = vunpack.c.l.b16 %v589
    %v2741 = vunpack.c.h.b16 %v589
    %v2742 = vunpack.c.l.b16 %v590
    %v2743 = vunpack.c.h.b16 %v590
    %v2744 = vunpack.c.l.b16 %v591
    %v2745 = vunpack.c.h.b16 %v591
    %v2746 = vunpack.c.l.b16 %v592
    %v2747 = vunpack.c.h.b16 %v592
    %v2748 = vunpack.c.l.b16 %v593
    %v2749 = vunpack.c.h.b16 %v593
    %v2750 = vunpack.c.l.b16 %v594
    %v2751 = vunpack.c.h.b16 %v594
    %v2752 = vunpack.c.l.b16 %v595
    %v2753 = vunpack.c.h.b16 %v595
    %v2754 = vunpack.c.l.b16 %v596
    %v2755 = vunpack.c.h.b16 %v596
    %v2756 = vunpack.c.l.b16 %v597
    %v2757 = vunpack.c.h.b16 %v597
    %v2758 = vunpack.c.l.b16 %v598
    %v2759 = vunpack.c.h.b16 %v598
    %v2760 = vunpack.c.l.b16 %v599
    %v2761 = vunpack.c.h.b16 %v599
    %v2762 = vunpack.c.l.b16 %v600
    %v2763 = vunpack.c.h.b16 %v600
    %v2764 = vunpack.c.l.b16 %v601
    %v2765 = vunpack.c.h.b16 %v601
    %v2766 = vunpack.c.l.b16 %v602
    %v2767 = vunpack.c.h.b16 %v602
    %v2768 = vunpack.c.l.b16 %v603
    %v2769 = vunpack.c.h.b16 %v603
    %v2770 = vunpack.c.l.b16 %v604
    %v2771 = vunpack.c.h.b16 %v604
    %v2772 = vunpack.c.l.b16 %v605
    %v2773 = vunpack.c.h.b16 %v605
    %v2774 = vunpack.c.l.b16 %v606
    %v2775 = vunpack.c.h.b16 %v606
    %v2776 = vunpack.c.l.b16 %v607
    %v2777 = vunpack.c.h.b16 %v607
    %v2778 = vunpack.c.l.b16 %v608
    %v2779 = vunpack.c.h.b16 %v608
    %v2780 = vunpack.c.l.b16 %v609
    %v2781 = vunpack.c.h.b16 %v609
    %v2782 = vunpack.c.l.b16 %v610
    %v2783 = vunpack.c.h.b16 %v610
    %v2784 = vunpack.c.l.b16 %v611
    %v2785 = vunpack.c.h.b16 %v611
    %v2786 = vunpack.c.l.b16 %v612
    %v2787 = vunpack.c.h.b16 %v612
    %v2788 = vunpack.c.l.b16 %v613
    %v2789 = vunpack.c.h.b16 %v613
    %v2790 = vunpack.c.l.b16 %v614
    %v2791 = vunpack.c.h.b16 %v614
    %v2792 = vunpack.c.l.b16 %v615
    %v2793 = vunpack.c.h.b16 %v615
    %v2794 = vunpack.c.l.b16 %v616
    %v2795 = vunpack.c.h.b16 %v616
    %v2796 = vunpack.c.l.b16 %v617
    %v2797 = vunpack.c.h.b16 %v617
    %v2798 = vunpack.c.l.b16 %v618
    %v2799 = vunpack.c.h.b16 %v618
    %v2800 = vunpack.c.l.b16 %v619
    %v2801 = vunpack.c.h.b16 %v619
    %v2802 = vunpack.c.l.b16 %v620
    %v2803 = vunpack.c.h.b16 %v620
    %v2804 = vunpack.c.l.b16 %v621
    %v2805 = vunpack.c.h.b16 %v621
    %v2806 = vunpack.c.l.b16 %v622
    %v2807 = vunpack.c.h.b16 %v622
    %v2808 = vunpack.c.l.b16 %v623
    %v2809 = vunpack.c.h.b16 %v623
    %v2810 = vunpack.c.l.b16 %v624
    %v2811 = vunpack.c.h.b16 %v624
    %v2812 = vunpack.c.l.b16 %v625
    %v2813 = vunpack.c.h.b16 %v625
    %v2814 = vunpack.c.l.b16 %v626
    %v2815 = vunpack.c.h.b16 %v626
    %v2816 = vunpack.c.l.b16 %v627
    %v2817 = vunpack.c.h.b16 %v627
    %v2818 = vunpack.c.l.b16 %v628
    %v2819 = vunpack.c.h.b16 %v628
    %v2820 = vunpack.c.l.b16 %v629
    %v2821 = vunpack.c.h.b16 %v629
    %v2822 = vunpack.c.l.b16 %v630
    %v2823 = vunpack.c.h.b16 %v630
    %v2824 = vunpack.c.l.b16 %v631
    %v2825 = vunpack.c.h.b16 %v631
    %v2826 = vunpack.c.l.b16 %v632
    %v2827 = vunpack.c.h.b16 %v632
    %v2828 = vunpack.c.l.b16 %v633
    %v2829 = vunpack.c.h.b16 %v633
    %v2830 = vunpack.c.l.b16 %v634
    %v2831 = vunpack.c.h.b16 %v634
    %v2832 = vunpack.c.l.b16 %v635
    %v2833 = vunpack.c.h.b16 %v635
    %v2834 = vunpack.c.l.b16 %v636
    %v2835 = vunpack.c.h.b16 %v636
    %v2836 = vunpack.c.l.b16 %v637
    %v2837 = vunpack.c.h.b16 %v637
    %v2838 = vunpack.c.l.b16 %v638
    %v2839 = vunpack.c.h.b16 %v638
    %v2840 = vunpack.c.l.b16 %v639
    %v2841 = vunpack.c.h.b16 %v639
    %v2842 = vunpack.c.l.b16 %v640
    %v2843 = vunpack.c.h.b16 %v640
    %v2844 = vunpack.c.l.b16 %v641
    %v2845 = vunpack.c.h.b16 %v641
    %v2846 = vunpack.c.l.b16 %v642
    %v2847 = vunpack.c.h.b16 %v642
    %v2848 = vunpack.c.l.b16 %v643
    %v2849 = vunpack.c.h.b16 %v643
    %v2850 = vunpack.c.l.b16 %v644
    %v2851 = vunpack.c.h.b16 %v644
    %v2852 = vunpack.c.l.b16 %v645
    %v2853 = vunpack.c.h.b16 %v645
    %v2854 = vunpack.c.l.b16 %v646
    %v2855 = vunpack.c.h.b16 %v646
    %v2856 = vunpack.c.l.b16 %v647
    %v2857 = vunpack.c.h.b16 %v647
    %v2858 = vunpack.c.l.b16 %v648
    %v2859 = vunpack.c.h.b16 %v648
    %v2860 = vunpack.c.l.b16 %v649
    %v2861 = vunpack.c.h.b16 %v649
    %v2862 = vunpack.c.l.b16 %v650
    %v2863 = vunpack.c.h.b16 %v650
    %v2864 = vunpack.c.l.b16 %v651
    %v2865 = vunpack.c.h.b16 %v651
    %v2866 = vunpack.c.l.b16 %v652
    %v2867 = vunpack.c.h.b16 %v652
    %v2868 = vunpack.c.l.b16 %v653
    %v2869 = vunpack.c.h.b16 %v653
    %v2870 = vunpack.c.l.b16 %v654
    %v2871 = vunpack.c.h.b16 %v654
    %v2872 = vunpack.c.l.b16 %v655
    %v2873 = vunpack.c.h.b16 %v655
    %v2874 = vunpack.c.l.b16 %v656
    %v2875 = vunpack.c.h.b16 %v656
    %v2876 = vunpack.c.l.b16 %v657
    %v2877 = vunpack.c.h.b16 %v657
    %v2878 = vunpack.c.l.b16 %v658
    %v2879 = vunpack.c.h.b16 %v658
    %v2880 = vunpack.c.l.b16 %v659
    %v2881 = vunpack.c.h.b16 %v659
    %v2882 = vunpack.c.l.b16 %v660
    %v2883 = vunpack.c.h.b16 %v660
    %v2884 = vunpack.c.l.b16 %v661
    %v2885 = vunpack.c.h.b16 %v661
    %v2886 = vunpack.c.l.b16 %v662
    %v2887 = vunpack.c.h.b16 %v662
    %v2888 = vunpack.c.l.b16 %v663
    %v2889 = vunpack.c.h.b16 %v663
    %v2890 = vunpack.c.l.b16 %v664
    %v2891 = vunpack.c.h.b16 %v664
    %v2892 = vunpack.c.l.b16 %v665
    %v2893 = vunpack.c.h.b16 %v665
    %v2894 = vunpack.c.l.b16 %v666
    %v2895 = vunpack.c.h.b16 %v666
    %v2896 = vunpack.c.l.b16 %v667
    %v2897 = vunpack.c.h.b16 %v667
    %v2898 = vunpack.c.l.b16 %v668
    %v2899 = vunpack.c.h.b16 %v668
    %v2900 = vunpack.c.l.b16 %v669
    %v2901 = vunpack.c.h.b16 %v669
    %v2902 = vunpack.c.l.b16 %v670
    %v2903 = vunpack.c.h.b16 %v670
    %v2904 = vunpack.c.l.b16 %v671
    %v2905 = vunpack.c.h.b16 %v671
    %v2906 = vunpack.c.l.b16 %v672
    %v2907 = vunpack.c.h.b16 %v672
    %v2908 = vunpack.c.l.b16 %v673
    %v2909 = vunpack.c.h.b16 %v673
    %v2910 = vunpack.c.l.b16 %v674
    %v2911 = vunpack.c.h.b16 %v674
    %v2912 = vunpack.c.l.b16 %v675
    %v2913 = vunpack.c.h.b16 %v675
    %v2914 = vunpack.c.l.b16 %v676
    %v2915 = vunpack.c.h.b16 %v676
    %v2916 = vunpack.c.l.b16 %v677
    %v2917 = vunpack.c.h.b16 %v677
    %v2918 = vunpack.c.l.b16 %v678
    %v2919 = vunpack.c.h.b16 %v678
    %v2920 = vunpack.c.l.b16 %v679
    %v2921 = vunpack.c.h.b16 %v679
    %v2922 = vunpack.c.l.b16 %v680
    %v2923 = vunpack.c.h.b16 %v680
    %v2924 = vunpack.c.l.b16 %v681
    %v2925 = vunpack.c.h.b16 %v681
    %v2926 = vunpack.c.l.b16 %v682
    %v2927 = vunpack.c.h.b16 %v682
    %v2928 = vunpack.c.l.b16 %v683
    %v2929 = vunpack.c.h.b16 %v683
    %v2930 = vunpack.c.l.b16 %v684
    %v2931 = vunpack.c.h.b16 %v684
    %v2932 = vunpack.c.l.b16 %v685
    %v2933 = vunpack.c.h.b16 %v685
    %v2934 = vunpack.c.l.b16 %v686
    %v2935 = vunpack.c.h.b16 %v686
    %v2936 = vunpack.c.l.b16 %v687
    %v2937 = vunpack.c.h.b16 %v687
    %v2938 = vunpack.c.l.b16 %v688
    %v2939 = vunpack.c.h.b16 %v688
    %v2940 = vunpack.c.l.b16 %v689
    %v2941 = vunpack.c.h.b16 %v689
    %v2942 = vunpack.c.l.b16 %v690
    %v2943 = vunpack.c.h.b16 %v690
    %v2944 = vunpack.c.l.b16 %v691
    %v2945 = vunpack.c.h.b16 %v691
    %v2946 = vunpack.c.l.b16 %v692
    %v2947 = vunpack.c.h.b16 %v692
    %v2948 = vunpack.c.l.b16 %v693
    %v2949 = vunpack.c.h.b16 %v693
    %v2950 = vunpack.c.l.b16 %v694
    %v2951 = vunpack.c.h.b16 %v694
    %v2952 = vunpack.c.l.b16 %v695
    %v2953 = vunpack.c.h.b16 %v695
    %v2954 = vunpack.c.l.b16 %v696
    %v2955 = vunpack.c.h.b16 %v696
    %v2956 = vunpack.c.l.b16 %v697
    %v2957 = vunpack.c.h.b16 %v697
    %v2958 = vunpack.c.l.b16 %v698
    %v2959 = vunpack.c.h.b16 %v698
    %v2960 = vunpack.c.l.b16 %v699
    %v2961 = vunpack.c.h.b16 %v699
    %v2962 = vunpack.c.l.b16 %v700
    %v2963 = vunpack.c.h.b16 %v700
    %v2964 = vunpack.c.l.b16 %v701
    %v2965 = vunpack.c.h.b16 %v701
    %v2966 = vunpack.c.l.b16 %v702
    %v2967 = vunpack.c.h.b16 %v702
    %v2968 = vunpack.c.l.b16 %v703
    %v2969 = vunpack.c.h.b16 %v703
    %v2970 = vunpack.c.l.b16 %v704
    %v2971 = vunpack.c.h.b16 %v704
    %v2972 = vunpack.c.l.b16 %v705
    %v2973 = vunpack.c.h.b16 %v705
    %v2974 = vunpack.c.l.b16 %v706
    %v2975 = vunpack.c.h.b16 %v706
    %v2976 = vunpack.c.l.b16 %v707
    %v2977 = vunpack.c.h.b16 %v707
    %v2978 = vunpack.c.l.b16 %v708
    %v2979 = vunpack.c.h.b16 %v708
    %v2980 = vunpack.c.l.b16 %v709
    %v2981 = vunpack.c.h.b16 %v709
    %v2982 = vunpack.c.l.b16 %v710
    %v2983 = vunpack.c.h.b16 %v710
    %v2984 = vunpack.c.l.b16 %v711
    %v2985 = vunpack.c.h.b16 %v711
    %v2986 = vunpack.c.l.b16 %v712
    %v2987 = vunpack.c.h.b16 %v712
    %v2988 = vunpack.c.l.b16 %v713
    %v2989 = vunpack.c.h.b16 %v713
    %v2990 = vunpack.c.l.b16 %v714
    %v2991 = vunpack.c.h.b16 %v714
    %v2992 = vunpack.c.l.b16 %v715
    %v2993 = vunpack.c.h.b16 %v715
    %v2994 = vunpack.c.l.b16 %v716
    %v2995 = vunpack.c.h.b16 %v716
    %v2996 = vunpack.c.l.b16 %v717
    %v2997 = vunpack.c.h.b16 %v717
    %v2998 = vunpack.c.l.b16 %v718
    %v2999 = vunpack.c.h.b16 %v718
    %v3000 = vunpack.c.l.b16 %v719
    %v3001 = vunpack.c.h.b16 %v719
    %v3002 = vunpack.c.l.b16 %v720
    %v3003 = vunpack.c.h.b16 %v720
    %v3004 = vunpack.c.l.b16 %v721
    %v3005 = vunpack.c.h.b16 %v721
    %v3006 = vunpack.c.l.b16 %v722
    %v3007 = vunpack.c.h.b16 %v722
    %v3008 = vunpack.c.l.b16 %v723
    %v3009 = vunpack.c.h.b16 %v723
    %v3010 = vunpack.c.l.b16 %v724
    %v3011 = vunpack.c.h.b16 %v724
    %v3012 = vunpack.c.l.b16 %v725
    %v3013 = vunpack.c.h.b16 %v725
    %v3014 = vunpack.c.l.b16 %v726
    %v3015 = vunpack.c.h.b16 %v726
    %v3016 = vunpack.c.l.b16 %v727
    %v3017 = vunpack.c.h.b16 %v727
    %v3018 = vunpack.c.l.b16 %v728
    %v3019 = vunpack.c.h.b16 %v728
    %v3020 = vunpack.c.l.b16 %v729
    %v3021 = vunpack.c.h.b16 %v729
    %v3022 = vunpack.c.l.b16 %v730
    %v3023 = vunpack.c.h.b16 %v730
    %v3024 = vunpack.c.l.b16 %v731
    %v3025 = vunpack.c.h.b16 %v731
    %v3026 = vunpack.c.l.b16 %v732
    %v3027 = vunpack.c.h.b16 %v732
    %v3028 = vunpack.c.l.b16 %v733
    %v3029 = vunpack.c.h.b16 %v733
    %v3030 = vunpack.c.l.b16 %v734
    %v3031 = vunpack.c.h.b16 %v734
    %v3032 = vunpack.c.l.b16 %v735
    %v3033 = vunpack.c.h.b16 %v735
    %v3034 = vunpack.c.l.b16 %v736
    %v3035 = vunpack.c.h.b16 %v736
    %v3036 = vunpack.c.l.b16 %v737
    %v3037 = vunpack.c.h.b16 %v737
    %v3038 = vunpack.c.l.b16 %v738
    %v3039 = vunpack.c.h.b16 %v738
    %v3040 = vunpack.c.l.b16 %v739
    %v3041 = vunpack.c.h.b16 %v739
    %v3042 = vunpack.c.l.b16 %v740
    %v3043 = vunpack.c.h.b16 %v740
    %v3044 = vunpack.c.l.b16 %v741
    %v3045 = vunpack.c.h.b16 %v741
    %v3046 = vunpack.c.l.b16 %v742
    %v3047 = vunpack.c.h.b16 %v742
    %v3048 = vunpack.c.l.b16 %v743
    %v3049 = vunpack.c.h.b16 %v743
    %v3050 = vunpack.c.l.b16 %v744
    %v3051 = vunpack.c.h.b16 %v744
    %v3052 = vunpack.c.l.b16 %v745
    %v3053 = vunpack.c.h.b16 %v745
    %v3054 = vunpack.c.l.b16 %v746
    %v3055 = vunpack.c.h.b16 %v746
    %v3056 = vunpack.c.l.b16 %v747
    %v3057 = vunpack.c.h.b16 %v747
    %v3058 = vunpack.c.l.b16 %v748
    %v3059 = vunpack.c.h.b16 %v748
    %v3060 = vunpack.c.l.b16 %v749
    %v3061 = vunpack.c.h.b16 %v749
    %v3062 = vunpack.c.l.b16 %v750
    %v3063 = vunpack.c.h.b16 %v750
    %v3064 = vunpack.c.l.b16 %v751
    %v3065 = vunpack.c.h.b16 %v751
    %v3066 = vunpack.c.l.b16 %v752
    %v3067 = vunpack.c.h.b16 %v752
    %v3068 = vunpack.c.l.b16 %v753
    %v3069 = vunpack.c.h.b16 %v753
    %v3070 = vunpack.c.l.b16 %v754
    %v3071 = vunpack.c.h.b16 %v754
    %v3072 = vunpack.c.l.b16 %v755
    %v3073 = vunpack.c.h.b16 %v755
    %v3074 = vunpack.c.l.b16 %v756
    %v3075 = vunpack.c.h.b16 %v756
    %v3076 = vunpack.c.l.b16 %v757
    %v3077 = vunpack.c.h.b16 %v757
    %v3078 = vunpack.c.l.b16 %v758
    %v3079 = vunpack.c.h.b16 %v758
    %v3080 = vunpack.c.l.b16 %v759
    %v3081 = vunpack.c.h.b16 %v759
    %v3082 = vunpack.c.l.b16 %v760
    %v3083 = vunpack.c.h.b16 %v760
    %v3084 = vunpack.c.l.b16 %v761
    %v3085 = vunpack.c.h.b16 %v761
    %v3086 = vunpack.c.l.b16 %v762
    %v3087 = vunpack.c.h.b16 %v762
    %v3088 = vunpack.c.l.b16 %v763
    %v3089 = vunpack.c.h.b16 %v763
    %v3090 = vunpack.c.l.b16 %v764
    %v3091 = vunpack.c.h.b16 %v764
    %v3092 = vunpack.c.l.b16 %v765
    %v3093 = vunpack.c.h.b16 %v765
    %v3094 = vunpack.c.l.b16 %v766
    %v3095 = vunpack.c.h.b16 %v766
    %v3096 = vunpack.c.l.b16 %v767
    %v3097 = vunpack.c.h.b16 %v767
    %v3098 = vunpack.c.l.b16 %v768
    %v3099 = vunpack.c.h.b16 %v768
    %v3100 = vunpack.c.l.b16 %v769
    %v3101 = vunpack.c.h.b16 %v769
    %v3102 = vunpack.c.l.b16 %v770
    %v3103 = vunpack.c.h.b16 %v770
    %v3104 = vunpack.c.l.b16 %v771
    %v3105 = vunpack.c.h.b16 %v771
    %v3106 = vunpack.c.l.b16 %v772
    %v3107 = vunpack.c.h.b16 %v772
    %v3108 = vunpack.c.l.b16 %v773
    %v3109 = vunpack.c.h.b16 %v773
    %v3110 = vunpack.c.l.b16 %v774
    %v3111 = vunpack.c.h.b16 %v774
    %v3112 = vunpack.c.l.b16 %v775
    %v3113 = vunpack.c.h.b16 %v775
    %v3114 = vunpack.c.l.b16 %v776
    %v3115 = vunpack.c.h.b16 %v776
    %v3116 = vunpack.c.l.b16 %v777
    %v3117 = vunpack.c.h.b16 %v777
    %v3118 = vunpack.c.l.b16 %v778
    %v3119 = vunpack.c.h.b16 %v778
    %v3120 = vunpack.c.l.b16 %v779
    %v3121 = vunpack.c.h.b16 %v779
    %v3122 = vunpack.c.l.b16 %v780
    %v3123 = vunpack.c.h.b16 %v780
    %v3124 = vunpack.c.l.b16 %v781
    %v3125 = vunpack.c.h.b16 %v781
    %v3126 = vunpack.c.l.b16 %v782
    %v3127 = vunpack.c.h.b16 %v782
    %v3128 = vunpack.c.l.b16 %v783
    %v3129 = vunpack.c.h.b16 %v783
    %v3130 = vunpack.c.l.b16 %v784
    %v3131 = vunpack.c.h.b16 %v784
    %v3132 = vunpack.c.l.b16 %v785
    %v3133 = vunpack.c.h.b16 %v785
    %v3134 = vunpack.c.l.b16 %v786
    %v3135 = vunpack.c.h.b16 %v786
    %v3136 = vunpack.c.l.b16 %v787
    %v3137 = vunpack.c.h.b16 %v787
    %v3138 = vunpack.c.l.b16 %v788
    %v3139 = vunpack.c.h.b16 %v788
    %v3140 = vunpack.c.l.b16 %v789
    %v3141 = vunpack.c.h.b16 %v789
    %v3142 = vunpack.c.l.b16 %v790
    %v3143 = vunpack.c.h.b16 %v790
    %v3144 = vunpack.c.l.b16 %v791
    %v3145 = vunpack.c.h.b16 %v791
    %v3146 = vunpack.c.l.b16 %v792
    %v3147 = vunpack.c.h.b16 %v792
    %v3148 = vunpack.c.l.b16 %v793
    %v3149 = vunpack.c.h.b16 %v793
    %v3150 = vunpack.c.l.b16 %v794
    %v3151 = vunpack.c.h.b16 %v794
    %v3152 = vunpack.c.l.b16 %v795
    %v3153 = vunpack.c.h.b16 %v795
    %v3154 = vunpack.c.l.b16 %v796
    %v3155 = vunpack.c.h.b16 %v796
    %v3156 = vunpack.c.l.b16 %v797
    %v3157 = vunpack.c.h.b16 %v797
    %v3158 = vunpack.c.l.b16 %v798
    %v3159 = vunpack.c.h.b16 %v798
    %v3160 = vunpack.c.l.b16 %v799
    %v3161 = vunpack.c.h.b16 %v799
    %v3162 = vunpack.c.l.b16 %v800
    %v3163 = vunpack.c.h.b16 %v800
    %v3164 = vunpack.c.l.b16 %v801
    %v3165 = vunpack.c.h.b16 %v801
    %v3166 = vunpack.c.l.b16 %v802
    %v3167 = vunpack.c.h.b16 %v802
    %v3168 = vunpack.c.l.b16 %v803
    %v3169 = vunpack.c.h.b16 %v803
    %v3170 = vunpack.c.l.b16 %v804
    %v3171 = vunpack.c.h.b16 %v804
    %v3172 = vunpack.c.l.b16 %v805
    %v3173 = vunpack.c.h.b16 %v805
    %v3174 = vunpack.c.l.b16 %v806
    %v3175 = vunpack.c.h.b16 %v806
    %v3176 = vunpack.c.l.b16 %v807
    %v3177 = vunpack.c.h.b16 %v807
    %v3178 = vunpack.c.l.b16 %v808
    %v3179 = vunpack.c.h.b16 %v808
    %v3180 = vunpack.c.l.b16 %v809
    %v3181 = vunpack.c.h.b16 %v809
    %v3182 = vunpack.c.l.b16 %v810
    %v3183 = vunpack.c.h.b16 %v810
    %v3184 = vunpack.c.l.b16 %v811
    %v3185 = vunpack.c.h.b16 %v811
    %v3186 = vunpack.c.l.b16 %v812
    %v3187 = vunpack.c.h.b16 %v812
    %v3188 = vunpack.c.l.b16 %v813
    %v3189 = vunpack.c.h.b16 %v813
    %v3190 = vunpack.c.l.b16 %v814
    %v3191 = vunpack.c.h.b16 %v814
    %v3192 = vunpack.c.l.b16 %v815
    %v3193 = vunpack.c.h.b16 %v815
    %v3194 = vunpack.c.l.b16 %v816
    %v3195 = vunpack.c.h.b16 %v816
    %v3196 = vunpack.c.l.b16 %v817
    %v3197 = vunpack.c.h.b16 %v817
    %v3198 = vunpack.c.l.b16 %v818
    %v3199 = vunpack.c.h.b16 %v818
    %v3200 = vunpack.c.l.b16 %v819
    %v3201 = vunpack.c.h.b16 %v819
    %v3202 = vunpack.c.l.b16 %v820
    %v3203 = vunpack.c.h.b16 %v820
    %v3204 = vunpack.c.l.b16 %v821
    %v3205 = vunpack.c.h.b16 %v821
    %v3206 = vunpack.c.l.b16 %v822
    %v3207 = vunpack.c.h.b16 %v822
    %v3208 = vunpack.c.l.b16 %v823
    %v3209 = vunpack.c.h.b16 %v823
    %v3210 = vunpack.c.l.b16 %v824
    %v3211 = vunpack.c.h.b16 %v824
    %v3212 = vunpack.c.l.b16 %v825
    %v3213 = vunpack.c.h.b16 %v825
    %v3214 = vunpack.c.l.b16 %v826
    %v3215 = vunpack.c.h.b16 %v826
    %v3216 = vunpack.c.l.b16 %v827
    %v3217 = vunpack.c.h.b16 %v827
    %v3218 = vunpack.c.l.b16 %v828
    %v3219 = vunpack.c.h.b16 %v828
    %v3220 = vunpack.c.l.b16 %v829
    %v3221 = vunpack.c.h.b16 %v829
    %v3222 = vunpack.c.l.b16 %v830
    %v3223 = vunpack.c.h.b16 %v830
    %v3224 = vunpack.c.l.b16 %v831
    %v3225 = vunpack.c.h.b16 %v831
    %v3226 = vunpack.c.l.b16 %v832
    %v3227 = vunpack.c.h.b16 %v832
    %v3228 = vunpack.c.l.b16 %v833
    %v3229 = vunpack.c.h.b16 %v833
    %v3230 = vunpack.c.l.b16 %v834
    %v3231 = vunpack.c.h.b16 %v834
    %v3232 = vunpack.c.l.b16 %v835
    %v3233 = vunpack.c.h.b16 %v835
    %v3234 = vunpack.c.l.b16 %v836
    %v3235 = vunpack.c.h.b16 %v836
    %v3236 = vunpack.c.l.b16 %v837
    %v3237 = vunpack.c.h.b16 %v837
    %v3238 = vunpack.c.l.b16 %v838
    %v3239 = vunpack.c.h.b16 %v838
    %v3240 = vunpack.c.l.b16 %v839
    %v3241 = vunpack.c.h.b16 %v839
    %v3242 = vunpack.c.l.b16 %v840
    %v3243 = vunpack.c.h.b16 %v840
    %v3244 = vunpack.c.l.b16 %v841
    %v3245 = vunpack.c.h.b16 %v841
    %v3246 = vunpack.c.l.b16 %v842
    %v3247 = vunpack.c.h.b16 %v842
    %v3248 = vunpack.c.l.b16 %v843
    %v3249 = vunpack.c.h.b16 %v843
    %v3250 = vunpack.c.l.b16 %v844
    %v3251 = vunpack.c.h.b16 %v844
    %v3252 = vunpack.c.l.b16 %v845
    %v3253 = vunpack.c.h.b16 %v845
    %v3254 = vunpack.c.l.b16 %v846
    %v3255 = vunpack.c.h.b16 %v846
    %v3256 = vunpack.c.l.b16 %v847
    %v3257 = vunpack.c.h.b16 %v847
    %v3258 = vunpack.c.l.b16 %v848
    %v3259 = vunpack.c.h.b16 %v848
    %v3260 = vunpack.c.l.b16 %v849
    %v3261 = vunpack.c.h.b16 %v849
    %v3262 = vunpack.c.l.b16 %v850
    %v3263 = vunpack.c.h.b16 %v850
    %v3264 = vunpack.c.l.b16 %v851
    %v3265 = vunpack.c.h.b16 %v851
    %v3266 = vunpack.c.l.b16 %v852
    %v3267 = vunpack.c.h.b16 %v852
    %v3268 = vunpack.c.l.b16 %v853
    %v3269 = vunpack.c.h.b16 %v853
    %v3270 = vunpack.c.l.b16 %v854
    %v3271 = vunpack.c.h.b16 %v854
    %v3272 = vunpack.c.l.b16 %v855
    %v3273 = vunpack.c.h.b16 %v855
    %v3274 = vunpack.c.l.b16 %v856
    %v3275 = vunpack.c.h.b16 %v856
    %v3276 = vunpack.c.l.b16 %v857
    %v3277 = vunpack.c.h.b16 %v857
    %v3278 = vunpack.c.l.b16 %v858
    %v3279 = vunpack.c.h.b16 %v858
    %v3280 = vunpack.c.l.b16 %v859
    %v3281 = vunpack.c.h.b16 %v859
    %v3282 = vunpack.c.l.b16 %v860
    %v3283 = vunpack.c.h.b16 %v860
    %v3284 = vunpack.c.l.b16 %v861
    %v3285 = vunpack.c.h.b16 %v861
    %v3286 = vunpack.c.l.b16 %v862
    %v3287 = vunpack.c.h.b16 %v862
    %v3288 = vunpack.c.l.b16 %v863
    %v3289 = vunpack.c.h.b16 %v863
    %v3290 = vunpack.c.l.b16 %v864
    %v3291 = vunpack.c.h.b16 %v864
    %v3292 = vunpack.c.l.b16 %v865
    %v3293 = vunpack.c.h.b16 %v865
    %v3294 = vunpack.c.l.b16 %v866
    %v3295 = vunpack.c.h.b16 %v866
    %v3296 = vunpack.c.l.b16 %v867
    %v3297 = vunpack.c.h.b16 %v867
    %v3298 = vunpack.c.l.b16 %v868
    %v3299 = vunpack.c.h.b16 %v868
    %v3300 = vunpack.c.l.b16 %v869
    %v3301 = vunpack.c.h.b16 %v869
    %v3302 = vunpack.c.l.b16 %v870
    %v3303 = vunpack.c.h.b16 %v870
    %v3304 = vunpack.c.l.b16 %v871
    %v3305 = vunpack.c.h.b16 %v871
    %v3306 = vunpack.c.l.b16 %v872
    %v3307 = vunpack.c.h.b16 %v872
    %v3308 = vunpack.c.l.b16 %v873
    %v3309 = vunpack.c.h.b16 %v873
    %v3310 = vunpack.c.l.b16 %v874
    %v3311 = vunpack.c.h.b16 %v874
    %v3312 = vunpack.c.l.b16 %v875
    %v3313 = vunpack.c.h.b16 %v875
    %v3314 = vunpack.c.l.b16 %v876
    %v3315 = vunpack.c.h.b16 %v876
    %v3316 = vunpack.c.l.b16 %v877
    %v3317 = vunpack.c.h.b16 %v877
    %v3318 = vunpack.c.l.b16 %v878
    %v3319 = vunpack.c.h.b16 %v878
    %v3320 = vunpack.c.l.b16 %v879
    %v3321 = vunpack.c.h.b16 %v879
    %v3322 = vunpack.c.l.b16 %v880
    %v3323 = vunpack.c.h.b16 %v880
    %v3324 = vunpack.c.l.b16 %v881
    %v3325 = vunpack.c.h.b16 %v881
    %v3326 = vunpack.c.l.b16 %v882
    %v3327 = vunpack.c.h.b16 %v882
    %v3328 = vpack.c.b16 %v1796, %v1792
    %v3329 = vpack.c.b16 %v1797, %v1793
    %v3330 = vpack.c.b16 %v1798, %v1794
    %v3331 = vpack.c.b16 %v1799, %v1795
    %v3332 = vpack.c.b16 %v1804, %v1800
    %v3333 = vpack.c.b16 %v1805, %v1801
    %v3334 = vpack.c.b16 %v1806, %v1802
    %v3335 = vpack.c.b16 %v1807, %v1803
    %v3336 = vpack.c.b16 %v1812, %v1808
    %v3337 = vpack.c.b16 %v1813, %v1809
    %v3338 = vpack.c.b16 %v1814, %v1810
    %v3339 = vpack.c.b16 %v1815, %v1811
    %v3340 = vpack.c.b16 %v1820, %v1816
    %v3341 = vpack.c.b16 %v1821, %v1817
    %v3342 = vpack.c.b16 %v1822, %v1818
    %v3343 = vpack.c.b16 %v1823, %v1819
    %v3344 = vpack.c.b16 %v1828, %v1824
    %v3345 = vpack.c.b16 %v1829, %v1825
    %v3346 = vpack.c.b16 %v1830, %v1826
    %v3347 = vpack.c.b16 %v1831, %v1827
    %v3348 = vpack.c.b16 %v1836, %v1832
    %v3349 = vpack.c.b16 %v1837, %v1833
    %v3350 = vpack.c.b16 %v1838, %v1834
    %v3351 = vpack.c.b16 %v1839, %v1835
    %v3352 = vpack.c.b16 %v1844, %v1840
    %v3353 = vpack.c.b16 %v1845, %v1841
    %v3354 = vpack.c.b16 %v1846, %v1842
    %v3355 = vpack.c.b16 %v1847, %v1843
    %v3356 = vpack.c.b16 %v1852, %v1848
    %v3357 = vpack.c.b16 %v1853, %v1849
    %v3358 = vpack.c.b16 %v1854, %v1850
    %v3359 = vpack.c.b16 %v1855, %v1851
    %v3360 = vpack.c.b16 %v1860, %v1856
    %v3361 = vpack.c.b16 %v1861, %v1857
    %v3362 = vpack.c.b16 %v1862, %v1858
    %v3363 = vpack.c.b16 %v1863, %v1859
    %v3364 = vpack.c.b16 %v1868, %v1864
    %v3365 = vpack.c.b16 %v1869, %v1865
    %v3366 = vpack.c.b16 %v1870, %v1866
    %v3367 = vpack.c.b16 %v1871, %v1867
    %v3368 = vpack.c.b16 %v1876, %v1872
    %v3369 = vpack.c.b16 %v1877, %v1873
    %v3370 = vpack.c.b16 %v1878, %v1874
    %v3371 = vpack.c.b16 %v1879, %v1875
    %v3372 = vpack.c.b16 %v1884, %v1880
    %v3373 = vpack.c.b16 %v1885, %v1881
    %v3374 = vpack.c.b16 %v1886, %v1882
    %v3375 = vpack.c.b16 %v1887, %v1883
    %v3376 = vpack.c.b16 %v1892, %v1888
    %v3377 = vpack.c.b16 %v1893, %v1889
    %v3378 = vpack.c.b16 %v1894, %v1890
    %v3379 = vpack.c.b16 %v1895, %v1891
    %v3380 = vpack.c.b16 %v1900, %v1896
    %v3381 = vpack.c.b16 %v1901, %v1897
    %v3382 = vpack.c.b16 %v1902, %v1898
    %v3383 = vpack.c.b16 %v1903, %v1899
    %v3384 = vpack.c.b16 %v1908, %v1904
    %v3385 = vpack.c.b16 %v1909, %v1905
    %v3386 = vpack.c.b16 %v1910, %v1906
    %v3387 = vpack.c.b16 %v1911, %v1907
    %v3388 = vpack.c.b16 %v1916, %v1912
    %v3389 = vpack.c.b16 %v1917, %v1913
    %v3390 = vpack.c.b16 %v1918, %v1914
    %v3391 = vpack.c.b16 %v1919, %v1915
    %v3392 = vpack.c.b16 %v1924, %v1920
    %v3393 = vpack.c.b16 %v1925, %v1921
    %v3394 = vpack.c.b16 %v1926, %v1922
    %v3395 = vpack.c.b16 %v1927, %v1923
    %v3396 = vpack.c.b16 %v1932, %v1928
    %v3397 = vpack.c.b16 %v1933, %v1929
    %v3398 = vpack.c.b16 %v1934, %v1930
    %v3399 = vpack.c.b16 %v1935, %v1931
    %v3400 = vpack.c.b16 %v1940, %v1936
    %v3401 = vpack.c.b16 %v1941, %v1937
    %v3402 = vpack.c.b16 %v1942, %v1938
    %v3403 = vpack.c.b16 %v1943, %v1939
    %v3404 = vpack.c.b16 %v1948, %v1944
    %v3405 = vpack.c.b16 %v1949, %v1945
    %v3406 = vpack.c.b16 %v1950, %v1946
    %v3407 = vpack.c.b16 %v1951, %v1947
    %v3408 = vpack.c.b16 %v1956, %v1952
    %v3409 = vpack.c.b16 %v1957, %v1953
    %v3410 = vpack.c.b16 %v1958, %v1954
    %v3411 = vpack.c.b16 %v1959, %v1955
    %v3412 = vpack.c.b16 %v1964, %v1960
    %v3413 = vpack.c.b16 %v1965, %v1961
    %v3414 = vpack.c.b16 %v1966, %v1962
    %v3415 = vpack.c.b16 %v1967, %v1963
    %v3416 = vpack.c.b16 %v1972, %v1968
    %v3417 = vpack.c.b16 %v1973, %v1969
    %v3418 = vpack.c.b16 %v1974, %v1970
    %v3419 = vpack.c.b16 %v1975, %v1971
    %v3420 = vpack.c.b16 %v1980, %v1976
    %v3421 = vpack.c.b16 %v1981, %v1977
    %v3422 = vpack.c.b16 %v1982, %v1978
    %v3423 = vpack.c.b16 %v1983, %v1979
    %v3424 = vpack.c.b16 %v1988, %v1984
    %v3425 = vpack.c.b16 %v1989, %v1985
    %v3426 = vpack.c.b16 %v1990, %v1986
    %v3427 = vpack.c.b16 %v1991, %v1987
    %v3428 = vpack.c.b16 %v1996, %v1992
    %v3429 = vpack.c.b16 %v1997, %v1993
    %v3430 = vpack.c.b16 %v1998, %v1994
    %v3431 = vpack.c.b16 %v1999, %v1995
    %v3432 = vpack.c.b16 %v2004, %v2000
    %v3433 = vpack.c.b16 %v2005, %v2001
    %v3434 = vpack.c.b16 %v2006, %v2002
    %v3435 = vpack.c.b16 %v2007, %v2003
    %v3436 = vpack.c.b16 %v2012, %v2008
    %v3437 = vpack.c.b16 %v2013, %v2009
    %v3438 = vpack.c.b16 %v2014, %v2010
    %v3439 = vpack.c.b16 %v2015, %v2011
    %v3440 = vpack.c.b16 %v2020, %v2016
    %v3441 = vpack.c.b16 %v2021, %v2017
    %v3442 = vpack.c.b16 %v2022, %v2018
    %v3443 = vpack.c.b16 %v2023, %v2019
    %v3444 = vpack.c.b16 %v2028, %v2024
    %v3445 = vpack.c.b16 %v2029, %v2025
    %v3446 = vpack.c.b16 %v2030, %v2026
    %v3447 = vpack.c.b16 %v2031, %v2027
    %v3448 = vpack.c.b16 %v2036, %v2032
    %v3449 = vpack.c.b16 %v2037, %v2033
    %v3450 = vpack.c.b16 %v2038, %v2034
    %v3451 = vpack.c.b16 %v2039, %v2035
    %v3452 = vpack.c.b16 %v2044, %v2040
    %v3453 = vpack.c.b16 %v2045, %v2041
    %v3454 = vpack.c.b16 %v2046, %v2042
    %v3455 = vpack.c.b16 %v2047, %v2043
    %v3456 = vpack.c.b16 %v2052, %v2048
    %v3457 = vpack.c.b16 %v2053, %v2049
    %v3458 = vpack.c.b16 %v2054, %v2050
    %v3459 = vpack.c.b16 %v2055, %v2051
    %v3460 = vpack.c.b16 %v2060, %v2056
    %v3461 = vpack.c.b16 %v2061, %v2057
    %v3462 = vpack.c.b16 %v2062, %v2058
    %v3463 = vpack.c.b16 %v2063, %v2059
    %v3464 = vpack.c.b16 %v2068, %v2064
    %v3465 = vpack.c.b16 %v2069, %v2065
    %v3466 = vpack.c.b16 %v2070, %v2066
    %v3467 = vpack.c.b16 %v2071, %v2067
    %v3468 = vpack.c.b16 %v2076, %v2072
    %v3469 = vpack.c.b16 %v2077, %v2073
    %v3470 = vpack.c.b16 %v2078, %v2074
    %v3471 = vpack.c.b16 %v2079, %v2075
    %v3472 = vpack.c.b16 %v2084, %v2080
    %v3473 = vpack.c.b16 %v2085, %v2081
    %v3474 = vpack.c.b16 %v2086, %v2082
    %v3475 = vpack.c.b16 %v2087, %v2083
    %v3476 = vpack.c.b16 %v2092, %v2088
    %v3477 = vpack.c.b16 %v2093, %v2089
    %v3478 = vpack.c.b16 %v2094, %v2090
    %v3479 = vpack.c.b16 %v2095, %v2091
    %v3480 = vpack.c.b16 %v2100, %v2096
    %v3481 = vpack.c.b16 %v2101, %v2097
    %v3482 = vpack.c.b16 %v2102, %v2098
    %v3483 = vpack.c.b16 %v2103, %v2099
    %v3484 = vpack.c.b16 %v2108, %v2104
    %v3485 = vpack.c.b16 %v2109, %v2105
    %v3486 = vpack.c.b16 %v2110, %v2106
    %v3487 = vpack.c.b16 %v2111, %v2107
    %v3488 = vpack.c.b16 %v2116, %v2112
    %v3489 = vpack.c.b16 %v2117, %v2113
    %v3490 = vpack.c.b16 %v2118, %v2114
    %v3491 = vpack.c.b16 %v2119, %v2115
    %v3492 = vpack.c.b16 %v2124, %v2120
    %v3493 = vpack.c.b16 %v2125, %v2121
    %v3494 = vpack.c.b16 %v2126, %v2122
    %v3495 = vpack.c.b16 %v2127, %v2123
    %v3496 = vpack.c.b16 %v2132, %v2128
    %v3497 = vpack.c.b16 %v2133, %v2129
    %v3498 = vpack.c.b16 %v2134, %v2130
    %v3499 = vpack.c.b16 %v2135, %v2131
    %v3500 = vpack.c.b16 %v2140, %v2136
    %v3501 = vpack.c.b16 %v2141, %v2137
    %v3502 = vpack.c.b16 %v2142, %v2138
    %v3503 = vpack.c.b16 %v2143, %v2139
    %v3504 = vpack.c.b16 %v2148, %v2144
    %v3505 = vpack.c.b16 %v2149, %v2145
    %v3506 = vpack.c.b16 %v2150, %v2146
    %v3507 = vpack.c.b16 %v2151, %v2147
    %v3508 = vpack.c.b16 %v2156, %v2152
    %v3509 = vpack.c.b16 %v2157, %v2153
    %v3510 = vpack.c.b16 %v2158, %v2154
    %v3511 = vpack.c.b16 %v2159, %v2155
    %v3512 = vpack.c.b16 %v2164, %v2160
    %v3513 = vpack.c.b16 %v2165, %v2161
    %v3514 = vpack.c.b16 %v2166, %v2162
    %v3515 = vpack.c.b16 %v2167, %v2163
    %v3516 = vpack.c.b16 %v2172, %v2168
    %v3517 = vpack.c.b16 %v2173, %v2169
    %v3518 = vpack.c.b16 %v2174, %v2170
    %v3519 = vpack.c.b16 %v2175, %v2171
    %v3520 = vpack.c.b16 %v2180, %v2176
    %v3521 = vpack.c.b16 %v2181, %v2177
    %v3522 = vpack.c.b16 %v2182, %v2178
    %v3523 = vpack.c.b16 %v2183, %v2179
    %v3524 = vpack.c.b16 %v2188, %v2184
    %v3525 = vpack.c.b16 %v2189, %v2185
    %v3526 = vpack.c.b16 %v2190, %v2186
    %v3527 = vpack.c.b16 %v2191, %v2187
    %v3528 = vpack.c.b16 %v2196, %v2192
    %v3529 = vpack.c.b16 %v2197, %v2193
    %v3530 = vpack.c.b16 %v2198, %v2194
    %v3531 = vpack.c.b16 %v2199, %v2195
    %v3532 = vpack.c.b16 %v2204, %v2200
    %v3533 = vpack.c.b16 %v2205, %v2201
    %v3534 = vpack.c.b16 %v2206, %v2202
    %v3535 = vpack.c.b16 %v2207, %v2203
    %v3536 = vpack.c.b16 %v2212, %v2208
    %v3537 = vpack.c.b16 %v2213, %v2209
    %v3538 = vpack.c.b16 %v2214, %v2210
    %v3539 = vpack.c.b16 %v2215, %v2211
    %v3540 = vpack.c.b16 %v2220, %v2216
    %v3541 = vpack.c.b16 %v2221, %v2217
    %v3542 = vpack.c.b16 %v2222, %v2218
    %v3543 = vpack.c.b16 %v2223, %v2219
    %v3544 = vpack.c.b16 %v2228, %v2224
    %v3545 = vpack.c.b16 %v2229, %v2225
    %v3546 = vpack.c.b16 %v2230, %v2226
    %v3547 = vpack.c.b16 %v2231, %v2227
    %v3548 = vpack.c.b16 %v2236, %v2232
    %v3549 = vpack.c.b16 %v2237, %v2233
    %v3550 = vpack.c.b16 %v2238, %v2234
    %v3551 = vpack.c.b16 %v2239, %v2235
    %v3552 = vpack.c.b16 %v2244, %v2240
    %v3553 = vpack.c.b16 %v2245, %v2241
    %v3554 = vpack.c.b16 %v2246, %v2242
    %v3555 = vpack.c.b16 %v2247, %v2243
    %v3556 = vpack.c.b16 %v2252, %v2248
    %v3557 = vpack.c.b16 %v2253, %v2249
    %v3558 = vpack.c.b16 %v2254, %v2250
    %v3559 = vpack.c.b16 %v2255, %v2251
    %v3560 = vpack.c.b16 %v2260, %v2256
    %v3561 = vpack.c.b16 %v2261, %v2257
    %v3562 = vpack.c.b16 %v2262, %v2258
    %v3563 = vpack.c.b16 %v2263, %v2259
    %v3564 = vpack.c.b16 %v2268, %v2264
    %v3565 = vpack.c.b16 %v2269, %v2265
    %v3566 = vpack.c.b16 %v2270, %v2266
    %v3567 = vpack.c.b16 %v2271, %v2267
    %v3568 = vpack.c.b16 %v2276, %v2272
    %v3569 = vpack.c.b16 %v2277, %v2273
    %v3570 = vpack.c.b16 %v2278, %v2274
    %v3571 = vpack.c.b16 %v2279, %v2275
    %v3572 = vpack.c.b16 %v2284, %v2280
    %v3573 = vpack.c.b16 %v2285, %v2281
    %v3574 = vpack.c.b16 %v2286, %v2282
    %v3575 = vpack.c.b16 %v2287, %v2283
    %v3576 = vpack.c.b16 %v2292, %v2288
    %v3577 = vpack.c.b16 %v2293, %v2289
    %v3578 = vpack.c.b16 %v2294, %v2290
    %v3579 = vpack.c.b16 %v2295, %v2291
    %v3580 = vpack.c.b16 %v2300, %v2296
    %v3581 = vpack.c.b16 %v2301, %v2297
    %v3582 = vpack.c.b16 %v2302, %v2298
    %v3583 = vpack.c.b16 %v2303, %v2299
    %v3584 = vpack.c.b16 %v2308, %v2304
    %v3585 = vpack.c.b16 %v2309, %v2305
    %v3586 = vpack.c.b16 %v2310, %v2306
    %v3587 = vpack.c.b16 %v2311, %v2307
    %v3588 = vpack.c.b16 %v2316, %v2312
    %v3589 = vpack.c.b16 %v2317, %v2313
    %v3590 = vpack.c.b16 %v2318, %v2314
    %v3591 = vpack.c.b16 %v2319, %v2315
    %v3592 = vpack.c.b16 %v2324, %v2320
    %v3593 = vpack.c.b16 %v2325, %v2321
    %v3594 = vpack.c.b16 %v2326, %v2322
    %v3595 = vpack.c.b16 %v2327, %v2323
    %v3596 = vpack.c.b16 %v2332, %v2328
    %v3597 = vpack.c.b16 %v2333, %v2329
    %v3598 = vpack.c.b16 %v2334, %v2330
    %v3599 = vpack.c.b16 %v2335, %v2331
    %v3600 = vpack.c.b16 %v2340, %v2336
    %v3601 = vpack.c.b16 %v2341, %v2337
    %v3602 = vpack.c.b16 %v2342, %v2338
    %v3603 = vpack.c.b16 %v2343, %v2339
    %v3604 = vpack.c.b16 %v2348, %v2344
    %v3605 = vpack.c.b16 %v2349, %v2345
    %v3606 = vpack.c.b16 %v2350, %v2346
    %v3607 = vpack.c.b16 %v2351, %v2347
    %v3608 = vpack.c.b16 %v2356, %v2352
    %v3609 = vpack.c.b16 %v2357, %v2353
    %v3610 = vpack.c.b16 %v2358, %v2354
    %v3611 = vpack.c.b16 %v2359, %v2355
    %v3612 = vpack.c.b16 %v2364, %v2360
    %v3613 = vpack.c.b16 %v2365, %v2361
    %v3614 = vpack.c.b16 %v2366, %v2362
    %v3615 = vpack.c.b16 %v2367, %v2363
    %v3616 = vpack.c.b16 %v2372, %v2368
    %v3617 = vpack.c.b16 %v2373, %v2369
    %v3618 = vpack.c.b16 %v2374, %v2370
    %v3619 = vpack.c.b16 %v2375, %v2371
    %v3620 = vpack.c.b16 %v2380, %v2376
    %v3621 = vpack.c.b16 %v2381, %v2377
    %v3622 = vpack.c.b16 %v2382, %v2378
    %v3623 = vpack.c.b16 %v2383, %v2379
    %v3624 = vpack.c.b16 %v2388, %v2384
    %v3625 = vpack.c.b16 %v2389, %v2385
    %v3626 = vpack.c.b16 %v2390, %v2386
    %v3627 = vpack.c.b16 %v2391, %v2387
    %v3628 = vpack.c.b16 %v2396, %v2392
    %v3629 = vpack.c.b16 %v2397, %v2393
    %v3630 = vpack.c.b16 %v2398, %v2394
    %v3631 = vpack.c.b16 %v2399, %v2395
    %v3632 = vpack.c.b16 %v2404, %v2400
    %v3633 = vpack.c.b16 %v2405, %v2401
    %v3634 = vpack.c.b16 %v2406, %v2402
    %v3635 = vpack.c.b16 %v2407, %v2403
    %v3636 = vpack.c.b16 %v2412, %v2408
    %v3637 = vpack.c.b16 %v2413, %v2409
    %v3638 = vpack.c.b16 %v2414, %v2410
    %v3639 = vpack.c.b16 %v2415, %v2411
    %v3640 = vpack.c.b16 %v2420, %v2416
    %v3641 = vpack.c.b16 %v2421, %v2417
    %v3642 = vpack.c.b16 %v2422, %v2418
    %v3643 = vpack.c.b16 %v2423, %v2419
    %v3644 = vpack.c.b16 %v2428, %v2424
    %v3645 = vpack.c.b16 %v2429, %v2425
    %v3646 = vpack.c.b16 %v2430, %v2426
    %v3647 = vpack.c.b16 %v2431, %v2427
    %v3648 = vpack.c.b16 %v2436, %v2432
    %v3649 = vpack.c.b16 %v2437, %v2433
    %v3650 = vpack.c.b16 %v2438, %v2434
    %v3651 = vpack.c.b16 %v2439, %v2435
    %v3652 = vpack.c.b16 %v2444, %v2440
    %v3653 = vpack.c.b16 %v2445, %v2441
    %v3654 = vpack.c.b16 %v2446, %v2442
    %v3655 = vpack.c.b16 %v2447, %v2443
    %v3656 = vpack.c.b16 %v2452, %v2448
    %v3657 = vpack.c.b16 %v2453, %v2449
    %v3658 = vpack.c.b16 %v2454, %v2450
    %v3659 = vpack.c.b16 %v2455, %v2451
    %v3660 = vpack.c.b16 %v2460, %v2456
    %v3661 = vpack.c.b16 %v2461, %v2457
    %v3662 = vpack.c.b16 %v2462, %v2458
    %v3663 = vpack.c.b16 %v2463, %v2459
    %v3664 = vpack.c.b16 %v2468, %v2464
    %v3665 = vpack.c.b16 %v2469, %v2465
    %v3666 = vpack.c.b16 %v2470, %v2466
    %v3667 = vpack.c.b16 %v2471, %v2467
    %v3668 = vpack.c.b16 %v2476, %v2472
    %v3669 = vpack.c.b16 %v2477, %v2473
    %v3670 = vpack.c.b16 %v2478, %v2474
    %v3671 = vpack.c.b16 %v2479, %v2475
    %v3672 = vpack.c.b16 %v2484, %v2480
    %v3673 = vpack.c.b16 %v2485, %v2481
    %v3674 = vpack.c.b16 %v2486, %v2482
    %v3675 = vpack.c.b16 %v2487, %v2483
    %v3676 = vpack.c.b16 %v2492, %v2488
    %v3677 = vpack.c.b16 %v2493, %v2489
    %v3678 = vpack.c.b16 %v2494, %v2490
    %v3679 = vpack.c.b16 %v2495, %v2491
    %v3680 = vpack.c.b16 %v2500, %v2496
    %v3681 = vpack.c.b16 %v2501, %v2497
    %v3682 = vpack.c.b16 %v2502, %v2498
    %v3683 = vpack.c.b16 %v2503, %v2499
    %v3684 = vpack.c.b16 %v2508, %v2504
    %v3685 = vpack.c.b16 %v2509, %v2505
    %v3686 = vpack.c.b16 %v2510, %v2506
    %v3687 = vpack.c.b16 %v2511, %v2507
    %v3688 = vpack.c.b16 %v2516, %v2512
    %v3689 = vpack.c.b16 %v2517, %v2513
    %v3690 = vpack.c.b16 %v2518, %v2514
    %v3691 = vpack.c.b16 %v2519, %v2515
    %v3692 = vpack.c.b16 %v2524, %v2520
    %v3693 = vpack.c.b16 %v2525, %v2521
    %v3694 = vpack.c.b16 %v2526, %v2522
    %v3695 = vpack.c.b16 %v2527, %v2523
    %v3696 = vpack.c.b16 %v2532, %v2528
    %v3697 = vpack.c.b16 %v2533, %v2529
    %v3698 = vpack.c.b16 %v2534, %v2530
    %v3699 = vpack.c.b16 %v2535, %v2531
    %v3700 = vpack.c.b16 %v2540, %v2536
    %v3701 = vpack.c.b16 %v2541, %v2537
    %v3702 = vpack.c.b16 %v2542, %v2538
    %v3703 = vpack.c.b16 %v2543, %v2539
    %v3704 = vpack.c.b16 %v2548, %v2544
    %v3705 = vpack.c.b16 %v2549, %v2545
    %v3706 = vpack.c.b16 %v2550, %v2546
    %v3707 = vpack.c.b16 %v2551, %v2547
    %v3708 = vpack.c.b16 %v2556, %v2552
    %v3709 = vpack.c.b16 %v2557, %v2553
    %v3710 = vpack.c.b16 %v2558, %v2554
    %v3711 = vpack.c.b16 %v2559, %v2555
    %v3712 = vpack.c.b16 %v2564, %v2560
    %v3713 = vpack.c.b16 %v2565, %v2561
    %v3714 = vpack.c.b16 %v2566, %v2562
    %v3715 = vpack.c.b16 %v2567, %v2563
    %v3716 = vpack.c.b16 %v2572, %v2568
    %v3717 = vpack.c.b16 %v2573, %v2569
    %v3718 = vpack.c.b16 %v2574, %v2570
    %v3719 = vpack.c.b16 %v2575, %v2571
    %v3720 = vpack.c.b16 %v2580, %v2576
    %v3721 = vpack.c.b16 %v2581, %v2577
    %v3722 = vpack.c.b16 %v2582, %v2578
    %v3723 = vpack.c.b16 %v2583, %v2579
    %v3724 = vpack.c.b16 %v2588, %v2584
    %v3725 = vpack.c.b16 %v2589, %v2585
    %v3726 = vpack.c.b16 %v2590, %v2586
    %v3727 = vpack.c.b16 %v2591, %v2587
    %v3728 = vpack.c.b16 %v2596, %v2592
    %v3729 = vpack.c.b16 %v2597, %v2593
    %v3730 = vpack.c.b16 %v2598, %v2594
    %v3731 = vpack.c.b16 %v2599, %v2595
    %v3732 = vpack.c.b16 %v2604, %v2600
    %v3733 = vpack.c.b16 %v2605, %v2601
    %v3734 = vpack.c.b16 %v2606, %v2602
    %v3735 = vpack.c.b16 %v2607, %v2603
    %v3736 = vpack.c.b16 %v2612, %v2608
    %v3737 = vpack.c.b16 %v2613, %v2609
    %v3738 = vpack.c.b16 %v2614, %v2610
    %v3739 = vpack.c.b16 %v2615, %v2611
    %v3740 = vpack.c.b16 %v2620, %v2616
    %v3741 = vpack.c.b16 %v2621, %v2617
    %v3742 = vpack.c.b16 %v2622, %v2618
    %v3743 = vpack.c.b16 %v2623, %v2619
    %v3744 = vpack.c.b16 %v2628, %v2624
    %v3745 = vpack.c.b16 %v2629, %v2625
    %v3746 = vpack.c.b16 %v2630, %v2626
    %v3747 = vpack.c.b16 %v2631, %v2627
    %v3748 = vpack.c.b16 %v2636, %v2632
    %v3749 = vpack.c.b16 %v2637, %v2633
    %v3750 = vpack.c.b16 %v2638, %v2634
    %v3751 = vpack.c.b16 %v2639, %v2635
    %v3752 = vpack.c.b16 %v2644, %v2640
    %v3753 = vpack.c.b16 %v2645, %v2641
    %v3754 = vpack.c.b16 %v2646, %v2642
    %v3755 = vpack.c.b16 %v2647, %v2643
    %v3756 = vpack.c.b16 %v2652, %v2648
    %v3757 = vpack.c.b16 %v2653, %v2649
    %v3758 = vpack.c.b16 %v2654, %v2650
    %v3759 = vpack.c.b16 %v2655, %v2651
    %v3760 = vpack.c.b16 %v2660, %v2656
    %v3761 = vpack.c.b16 %v2661, %v2657
    %v3762 = vpack.c.b16 %v2662, %v2658
    %v3763 = vpack.c.b16 %v2663, %v2659
    %v3764 = vpack.c.b16 %v2668, %v2664
    %v3765 = vpack.c.b16 %v2669, %v2665
    %v3766 = vpack.c.b16 %v2670, %v2666
    %v3767 = vpack.c.b16 %v2671, %v2667
    %v3768 = vpack.c.b16 %v2676, %v2672
    %v3769 = vpack.c.b16 %v2677, %v2673
    %v3770 = vpack.c.b16 %v2678, %v2674
    %v3771 = vpack.c.b16 %v2679, %v2675
    %v3772 = vpack.c.b16 %v2684, %v2680
    %v3773 = vpack.c.b16 %v2685, %v2681
    %v3774 = vpack.c.b16 %v2686, %v2682
    %v3775 = vpack.c.b16 %v2687, %v2683
    %v3776 = vpack.c.b16 %v2692, %v2688
    %v3777 = vpack.c.b16 %v2693, %v2689
    %v3778 = vpack.c.b16 %v2694, %v2690
    %v3779 = vpack.c.b16 %v2695, %v2691
    %v3780 = vpack.c.b16 %v2700, %v2696
    %v3781 = vpack.c.b16 %v2701, %v2697
    %v3782 = vpack.c.b16 %v2702, %v2698
    %v3783 = vpack.c.b16 %v2703, %v2699
    %v3784 = vpack.c.b16 %v2708, %v2704
    %v3785 = vpack.c.b16 %v2709, %v2705
    %v3786 = vpack.c.b16 %v2710, %v2706
    %v3787 = vpack.c.b16 %v2711, %v2707
    %v3788 = vpack.c.b16 %v2716, %v2712
    %v3789 = vpack.c.b16 %v2717, %v2713
    %v3790 = vpack.c.b16 %v2718, %v2714
    %v3791 = vpack.c.b16 %v2719, %v2715
    %v3792 = vpack.c.b16 %v2724, %v2720
    %v3793 = vpack.c.b16 %v2725, %v2721
    %v3794 = vpack.c.b16 %v2726, %v2722
    %v3795 = vpack.c.b16 %v2727, %v2723
    %v3796 = vpack.c.b16 %v2732, %v2728
    %v3797 = vpack.c.b16 %v2733, %v2729
    %v3798 = vpack.c.b16 %v2734, %v2730
    %v3799 = vpack.c.b16 %v2735, %v2731
    %v3800 = vpack.c.b16 %v2740, %v2736
    %v3801 = vpack.c.b16 %v2741, %v2737
    %v3802 = vpack.c.b16 %v2742, %v2738
    %v3803 = vpack.c.b16 %v2743, %v2739
    %v3804 = vpack.c.b16 %v2748, %v2744
    %v3805 = vpack.c.b16 %v2749, %v2745
    %v3806 = vpack.c.b16 %v2750, %v2746
    %v3807 = vpack.c.b16 %v2751, %v2747
    %v3808 = vpack.c.b16 %v2756, %v2752
    %v3809 = vpack.c.b16 %v2757, %v2753
    %v3810 = vpack.c.b16 %v2758, %v2754
    %v3811 = vpack.c.b16 %v2759, %v2755
    %v3812 = vpack.c.b16 %v2764, %v2760
    %v3813 = vpack.c.b16 %v2765, %v2761
    %v3814 = vpack.c.b16 %v2766, %v2762
    %v3815 = vpack.c.b16 %v2767, %v2763
    %v3816 = vpack.c.b16 %v2772, %v2768
    %v3817 = vpack.c.b16 %v2773, %v2769
    %v3818 = vpack.c.b16 %v2774, %v2770
    %v3819 = vpack.c.b16 %v2775, %v2771
    %v3820 = vpack.c.b16 %v2780, %v2776
    %v3821 = vpack.c.b16 %v2781, %v2777
    %v3822 = vpack.c.b16 %v2782, %v2778
    %v3823 = vpack.c.b16 %v2783, %v2779
    %v3824 = vpack.c.b16 %v2788, %v2784
    %v3825 = vpack.c.b16 %v2789, %v2785
    %v3826 = vpack.c.b16 %v2790, %v2786
    %v3827 = vpack.c.b16 %v2791, %v2787
    %v3828 = vpack.c.b16 %v2796, %v2792
    %v3829 = vpack.c.b16 %v2797, %v2793
    %v3830 = vpack.c.b16 %v2798, %v2794
    %v3831 = vpack.c.b16 %v2799, %v2795
    %v3832 = vpack.c.b16 %v2804, %v2800
    %v3833 = vpack.c.b16 %v2805, %v2801
    %v3834 = vpack.c.b16 %v2806, %v2802
    %v3835 = vpack.c.b16 %v2807, %v2803
    %v3836 = vpack.c.b16 %v2812, %v2808
    %v3837 = vpack.c.b16 %v2813, %v2809
    %v3838 = vpack.c.b16 %v2814, %v2810
    %v3839 = vpack.c.b16 %v2815, %v2811
    %v3840 = vpack.c.b16 %v2820, %v2816
    %v3841 = vpack.c.b16 %v2821, %v2817
    %v3842 = vpack.c.b16 %v2822, %v2818
    %v3843 = vpack.c.b16 %v2823, %v2819
    %v3844 = vpack.c.b16 %v2828, %v2824
    %v3845 = vpack.c.b16 %v2829, %v2825
    %v3846 = vpack.c.b16 %v2830, %v2826
    %v3847 = vpack.c.b16 %v2831, %v2827
    %v3848 = vpack.c.b16 %v2836, %v2832
    %v3849 = vpack.c.b16 %v2837, %v2833
    %v3850 = vpack.c.b16 %v2838, %v2834
    %v3851 = vpack.c.b16 %v2839, %v2835
    %v3852 = vpack.c.b16 %v2844, %v2840
    %v3853 = vpack.c.b16 %v2845, %v2841
    %v3854 = vpack.c.b16 %v2846, %v2842
    %v3855 = vpack.c.b16 %v2847, %v2843
    %v3856 = vpack.c.b16 %v2852, %v2848
    %v3857 = vpack.c.b16 %v2853, %v2849
    %v3858 = vpack.c.b16 %v2854, %v2850
    %v3859 = vpack.c.b16 %v2855, %v2851
    %v3860 = vpack.c.b16 %v2860, %v2856
    %v3861 = vpack.c.b16 %v2861, %v2857
    %v3862 = vpack.c.b16 %v2862, %v2858
    %v3863 = vpack.c.b16 %v2863, %v2859
    %v3864 = vpack.c.b16 %v2868, %v2864
    %v3865 = vpack.c.b16 %v2869, %v2865
    %v3866 = vpack.c.b16 %v2870, %v2866
    %v3867 = vpack.c.b16 %v2871, %v2867
    %v3868 = vpack.c.b16 %v2876, %v2872
    %v3869 = vpack.c.b16 %v2877, %v2873
    %v3870 = vpack.c.b16 %v2878, %v2874
    %v3871 = vpack.c.b16 %v2879, %v2875
    %v3872 = vpack.c.b16 %v2884, %v2880
    %v3873 = vpack.c.b16 %v2885, %v2881
    %v3874 = vpack.c.b16 %v2886, %v2882
    %v3875 = vpack.c.b16 %v2887, %v2883
    %v3876 = vpack.c.b16 %v2892, %v2888
    %v3877 = vpack.c.b16 %v2893, %v2889
    %v3878 = vpack.c.b16 %v2894, %v2890
    %v3879 = vpack.c.b16 %v2895, %v2891
    %v3880 = vpack.c.b16 %v2900, %v2896
    %v3881 = vpack.c.b16 %v2901, %v2897
    %v3882 = vpack.c.b16 %v2902, %v2898
    %v3883 = vpack.c.b16 %v2903, %v2899
    %v3884 = vpack.c.b16 %v2908, %v2904
    %v3885 = vpack.c.b16 %v2909, %v2905
    %v3886 = vpack.c.b16 %v2910, %v2906
    %v3887 = vpack.c.b16 %v2911, %v2907
    %v3888 = vpack.c.b16 %v2916, %v2912
    %v3889 = vpack.c.b16 %v2917, %v2913
    %v3890 = vpack.c.b16 %v2918, %v2914
    %v3891 = vpack.c.b16 %v2919, %v2915
    %v3892 = vpack.c.b16 %v2924, %v2920
    %v3893 = vpack.c.b16 %v2925, %v2921
    %v3894 = vpack.c.b16 %v2926, %v2922
    %v3895 = vpack.c.b16 %v2927, %v2923
    %v3896 = vpack.c.b16 %v2932, %v2928
    %v3897 = vpack.c.b16 %v2933, %v2929
    %v3898 = vpack.c.b16 %v2934, %v2930
    %v3899 = vpack.c.b16 %v2935, %v2931
    %v3900 = vpack.c.b16 %v2940, %v2936
    %v3901 = vpack.c.b16 %v2941, %v2937
    %v3902 = vpack.c.b16 %v2942, %v2938
    %v3903 = vpack.c.b16 %v2943, %v2939
    %v3904 = vpack.c.b16 %v2948, %v2944
    %v3905 = vpack.c.b16 %v2949, %v2945
    %v3906 = vpack.c.b16 %v2950, %v2946
    %v3907 = vpack.c.b16 %v2951, %v2947
    %v3908 = vpack.c.b16 %v2956, %v2952
    %v3909 = vpack.c.b16 %v2957, %v2953
    %v3910 = vpack.c.b16 %v2958, %v2954
    %v3911 = vpack.c.b16 %v2959, %v2955
    %v3912 = vpack.c.b16 %v2964, %v2960
    %v3913 = vpack.c.b16 %v2965, %v2961
    %v3914 = vpack.c.b16 %v2966, %v2962
    %v3915 = vpack.c.b16 %v2967, %v2963
    %v3916 = vpack.c.b16 %v2972, %v2968
    %v3917 = vpack.c.b16 %v2973, %v2969
    %v3918 = vpack.c.b16 %v2974, %v2970
    %v3919 = vpack.c.b16 %v2975, %v2971
    %v3920 = vpack.c.b16 %v2980, %v2976
    %v3921 = vpack.c.b16 %v2981, %v2977
    %v3922 = vpack.c.b16 %v2982, %v2978
    %v3923 = vpack.c.b16 %v2983, %v2979
    %v3924 = vpack.c.b16 %v2988, %v2984
    %v3925 = vpack.c.b16 %v2989, %v2985
    %v3926 = vpack.c.b16 %v2990, %v2986
    %v3927 = vpack.c.b16 %v2991, %v2987
    %v3928 = vpack.c.b16 %v2996, %v2992
    %v3929 = vpack.c.b16 %v2997, %v2993
    %v3930 = vpack.c.b16 %v2998, %v2994
    %v3931 = vpack.c.b16 %v2999, %v2995
    %v3932 = vpack.c.b16 %v3004, %v3000
    %v3933 = vpack.c.b16 %v3005, %v3001
    %v3934 = vpack.c.b16 %v3006, %v3002
    %v3935 = vpack.c.b16 %v3007, %v3003
    %v3936 = vpack.c.b16 %v3012, %v3008
    %v3937 = vpack.c.b16 %v3013, %v3009
    %v3938 = vpack.c.b16 %v3014, %v3010
    %v3939 = vpack.c.b16 %v3015, %v3011
    %v3940 = vpack.c.b16 %v3020, %v3016
    %v3941 = vpack.c.b16 %v3021, %v3017
    %v3942 = vpack.c.b16 %v3022, %v3018
    %v3943 = vpack.c.b16 %v3023, %v3019
    %v3944 = vpack.c.b16 %v3028, %v3024
    %v3945 = vpack.c.b16 %v3029, %v3025
    %v3946 = vpack.c.b16 %v3030, %v3026
    %v3947 = vpack.c.b16 %v3031, %v3027
    %v3948 = vpack.c.b16 %v3036, %v3032
    %v3949 = vpack.c.b16 %v3037, %v3033
    %v3950 = vpack.c.b16 %v3038, %v3034
    %v3951 = vpack.c.b16 %v3039, %v3035
    %v3952 = vpack.c.b16 %v3044, %v3040
    %v3953 = vpack.c.b16 %v3045, %v3041
    %v3954 = vpack.c.b16 %v3046, %v3042
    %v3955 = vpack.c.b16 %v3047, %v3043
    %v3956 = vpack.c.b16 %v3052, %v3048
    %v3957 = vpack.c.b16 %v3053, %v3049
    %v3958 = vpack.c.b16 %v3054, %v3050
    %v3959 = vpack.c.b16 %v3055, %v3051
    %v3960 = vpack.c.b16 %v3060, %v3056
    %v3961 = vpack.c.b16 %v3061, %v3057
    %v3962 = vpack.c.b16 %v3062, %v3058
    %v3963 = vpack.c.b16 %v3063, %v3059
    %v3964 = vpack.c.b16 %v3068, %v3064
    %v3965 = vpack.c.b16 %v3069, %v3065
    %v3966 = vpack.c.b16 %v3070, %v3066
    %v3967 = vpack.c.b16 %v3071, %v3067
    %v3968 = vpack.c.b16 %v3076, %v3072
    %v3969 = vpack.c.b16 %v3077, %v3073
    %v3970 = vpack.c.b16 %v3078, %v3074
    %v3971 = vpack.c.b16 %v3079, %v3075
    %v3972 = vpack.c.b16 %v3084, %v3080
    %v3973 = vpack.c.b16 %v3085, %v3081
    %v3974 = vpack.c.b16 %v3086, %v3082
    %v3975 = vpack.c.b16 %v3087, %v3083
    %v3976 = vpack.c.b16 %v3092, %v3088
    %v3977 = vpack.c.b16 %v3093, %v3089
    %v3978 = vpack.c.b16 %v3094, %v3090
    %v3979 = vpack.c.b16 %v3095, %v3091
    %v3980 = vpack.c.b16 %v3100, %v3096
    %v3981 = vpack.c.b16 %v3101, %v3097
    %v3982 = vpack.c.b16 %v3102, %v3098
    %v3983 = vpack.c.b16 %v3103, %v3099
    %v3984 = vpack.c.b16 %v3108, %v3104
    %v3985 = vpack.c.b16 %v3109, %v3105
    %v3986 = vpack.c.b16 %v3110, %v3106
    %v3987 = vpack.c.b16 %v3111, %v3107
    %v3988 = vpack.c.b16 %v3116, %v3112
    %v3989 = vpack.c.b16 %v3117, %v3113
    %v3990 = vpack.c.b16 %v3118, %v3114
    %v3991 = vpack.c.b16 %v3119, %v3115
    %v3992 = vpack.c.b16 %v3124, %v3120
    %v3993 = vpack.c.b16 %v3125, %v3121
    %v3994 = vpack.c.b16 %v3126, %v3122
    %v3995 = vpack.c.b16 %v3127, %v3123
    %v3996 = vpack.c.b16 %v3132, %v3128
    %v3997 = vpack.c.b16 %v3133, %v3129
    %v3998 = vpack.c.b16 %v3134, %v3130
    %v3999 = vpack.c.b16 %v3135, %v3131
    %v4000 = vpack.c.b16 %v3140, %v3136
    %v4001 = vpack.c.b16 %v3141, %v3137
    %v4002 = vpack.c.b16 %v3142, %v3138
    %v4003 = vpack.c.b16 %v3143, %v3139
    %v4004 = vpack.c.b16 %v3148, %v3144
    %v4005 = vpack.c.b16 %v3149, %v3145
    %v4006 = vpack.c.b16 %v3150, %v3146
    %v4007 = vpack.c.b16 %v3151, %v3147
    %v4008 = vpack.c.b16 %v3156, %v3152
    %v4009 = vpack.c.b16 %v3157, %v3153
    %v4010 = vpack.c.b16 %v3158, %v3154
    %v4011 = vpack.c.b16 %v3159, %v3155
    %v4012 = vpack.c.b16 %v3164, %v3160
    %v4013 = vpack.c.b16 %v3165, %v3161
    %v4014 = vpack.c.b16 %v3166, %v3162
    %v4015 = vpack.c.b16 %v3167, %v3163
    %v4016 = vpack.c.b16 %v3172, %v3168
    %v4017 = vpack.c.b16 %v3173, %v3169
    %v4018 = vpack.c.b16 %v3174, %v3170
    %v4019 = vpack.c.b16 %v3175, %v3171
    %v4020 = vpack.c.b16 %v3180, %v3176
    %v4021 = vpack.c.b16 %v3181, %v3177
    %v4022 = vpack.c.b16 %v3182, %v3178
    %v4023 = vpack.c.b16 %v3183, %v3179
    %v4024 = vpack.c.b16 %v3188, %v3184
    %v4025 = vpack.c.b16 %v3189, %v3185
    %v4026 = vpack.c.b16 %v3190, %v3186
    %v4027 = vpack.c.b16 %v3191, %v3187
    %v4028 = vpack.c.b16 %v3196, %v3192
    %v4029 = vpack.c.b16 %v3197, %v3193
    %v4030 = vpack.c.b16 %v3198, %v3194
    %v4031 = vpack.c.b16 %v3199, %v3195
    %v4032 = vpack.c.b16 %v3204, %v3200
    %v4033 = vpack.c.b16 %v3205, %v3201
    %v4034 = vpack.c.b16 %v3206, %v3202
    %v4035 = vpack.c.b16 %v3207, %v3203
    %v4036 = vpack.c.b16 %v3212, %v3208
    %v4037 = vpack.c.b16 %v3213, %v3209
    %v4038 = vpack.c.b16 %v3214, %v3210
    %v4039 = vpack.c.b16 %v3215, %v3211
    %v4040 = vpack.c.b16 %v3220, %v3216
    %v4041 = vpack.c.b16 %v3221, %v3217
    %v4042 = vpack.c.b16 %v3222, %v3218
    %v4043 = vpack.c.b16 %v3223, %v3219
    %v4044 = vpack.c.b16 %v3228, %v3224
    %v4045 = vpack.c.b16 %v3229, %v3225
    %v4046 = vpack.c.b16 %v3230, %v3226
    %v4047 = vpack.c.b16 %v3231, %v3227
    %v4048 = vpack.c.b16 %v3236, %v3232
    %v4049 = vpack.c.b16 %v3237, %v3233
    %v4050 = vpack.c.b16 %v3238, %v3234
    %v4051 = vpack.c.b16 %v3239, %v3235
    %v4052 = vpack.c.b16 %v3244, %v3240
    %v4053 = vpack.c.b16 %v3245, %v3241
    %v4054 = vpack.c.b16 %v3246, %v3242
    %v4055 = vpack.c.b16 %v3247, %v3243
    %v4056 = vpack.c.b16 %v3252, %v3248
    %v4057 = vpack.c.b16 %v3253, %v3249
    %v4058 = vpack.c.b16 %v3254, %v3250
    %v4059 = vpack.c.b16 %v3255, %v3251
    %v4060 = vpack.c.b16 %v3260, %v3256
    %v4061 = vpack.c.b16 %v3261, %v3257
    %v4062 = vpack.c.b16 %v3262, %v3258
    %v4063 = vpack.c.b16 %v3263, %v3259
    %v4064 = vpack.c.b16 %v3268, %v3264
    %v4065 = vpack.c.b16 %v3269, %v3265
    %v4066 = vpack.c.b16 %v3270, %v3266
    %v4067 = vpack.c.b16 %v3271, %v3267
    %v4068 = vpack.c.b16 %v3276, %v3272
    %v4069 = vpack.c.b16 %v3277, %v3273
    %v4070 = vpack.c.b16 %v3278, %v3274
    %v4071 = vpack.c.b16 %v3279, %v3275
    %v4072 = vpack.c.b16 %v3284, %v3280
    %v4073 = vpack.c.b16 %v3285, %v3281
    %v4074 = vpack.c.b16 %v3286, %v3282
    %v4075 = vpack.c.b16 %v3287, %v3283
    %v4076 = vpack.c.b16 %v3292, %v3288
    %v4077 = vpack.c.b16 %v3293, %v3289
    %v4078 = vpack.c.b16 %v3294, %v3290
    %v4079 = vpack.c.b16 %v3295, %v3291
    %v4080 = vpack.c.b16 %v3300, %v3296
    %v4081 = vpack.c.b16 %v3301, %v3297
    %v4082 = vpack.c.b16 %v3302, %v3298
    %v4083 = vpack.c.b16 %v3303, %v3299
    %v4084 = vpack.c.b16 %v3308, %v3304
    %v4085 = vpack.c.b16 %v3309, %v3305
    %v4086 = vpack.c.b16 %v3310, %v3306
    %v4087 = vpack.c.b16 %v3311, %v3307
    %v4088 = vpack.c.b16 %v3316, %v3312
    %v4089 = vpack.c.b16 %v3317, %v3313
    %v4090 = vpack.c.b16 %v3318, %v3314
    %v4091 = vpack.c.b16 %v3319, %v3315
    %v4092 = vpack.c.b16 %v3324, %v3320
    %v4093 = vpack.c.b16 %v3325, %v3321
    %v4094 = vpack.c.b16 %v3326, %v3322
    %v4095 = vpack.c.b16 %v3327, %v3323
    %4864 = vmatprep.subr.bf16.mxu0 %v3329
    %4865 = vmatpush1.bf16.msra.mxu0 %v3328
    %4866 = vmatprep.subr.bf16.mxu0 %v3333
    %4867 = vmatpush1.bf16.msra.mxu0 %v3332
    %4868 = vmatprep.subr.bf16.mxu0 %v3337
    %4869 = vmatpush1.bf16.msra.mxu0 %v3336
    %4870 = vmatprep.subr.bf16.mxu0 %v3341
    %4871 = vmatpush1.bf16.msra.mxu0 %v3340
    %4872 = vmatprep.subr.bf16.mxu0 %v3345
    %4873 = vmatpush1.bf16.msra.mxu0 %v3344
    %4874 = vmatprep.subr.bf16.mxu0 %v3349
    %4875 = vmatpush1.bf16.msra.mxu0 %v3348
    %4876 = vmatprep.subr.bf16.mxu0 %v3353
    %4877 = vmatpush1.bf16.msra.mxu0 %v3352
    %4878 = vmatprep.subr.bf16.mxu0 %v3357
    %4879 = vmatpush1.bf16.msra.mxu0 %v3356
    %4880 = vmatprep.subr.bf16.mxu0 %v3361
    %4881 = vmatpush1.bf16.msra.mxu0 %v3360
    %4882 = vmatprep.subr.bf16.mxu0 %v3365
    %4883 = vmatpush1.bf16.msra.mxu0 %v3364
    %4884 = vmatprep.subr.bf16.mxu0 %v3369
    %4885 = vmatpush1.bf16.msra.mxu0 %v3368
    %4886 = vmatprep.subr.bf16.mxu0 %v3373
    %4887 = vmatpush1.bf16.msra.mxu0 %v3372
    %4888 = vmatprep.subr.bf16.mxu0 %v3377
    %4889 = vmatpush1.bf16.msra.mxu0 %v3376
    %4890 = vmatprep.subr.bf16.mxu0 %v3381
    %4891 = vmatpush1.bf16.msra.mxu0 %v3380
    %4892 = vmatprep.subr.bf16.mxu0 %v3385
    %4893 = vmatpush1.bf16.msra.mxu0 %v3384
    %4894 = vmatprep.subr.bf16.mxu0 %v3389
    %4895 = vmatpush1.bf16.msra.mxu0 %v3388
    %4896 = vmatprep.mubr.bf16.mxu0 %v977
    %4897 = vmatmul.mubr.bf16.gmra.mrb[0].mxu0 %v976
    %v4898 = vpop.f32.mrb[0].mxu0
    %v4899 = vadd.f32 %v887, %v4898
    %v4900 = vpop.f32.mrb[0].mxu0
    %v4901 = vadd.f32 %v891, %v4900
    %v4902 = vpop.f32.mrb[0].mxu0
    %v4903 = vadd.f32 %v887, %v4902
    %v4904 = vpop.f32.mrb[0].mxu0
    %v4905 = vadd.f32 %v891, %v4904
    %4906 = vdwg.mxu0
    %4907 = vmatprep.subr.bf16.mxu0 %v3393
    %4908 = vmatpush1.bf16.msra.mxu0 %v3392
    %4909 = vmatprep.subr.bf16.mxu0 %v3397
    %4910 = vmatpush1.bf16.msra.mxu0 %v3396
    %4911 = vmatprep.subr.bf16.mxu0 %v3401
    %4912 = vmatpush1.bf16.msra.mxu0 %v3400
    %4913 = vmatprep.subr.bf16.mxu0 %v3405
    %4914 = vmatpush1.bf16.msra.mxu0 %v3404
    %4915 = vmatprep.subr.bf16.mxu0 %v3409
    %4916 = vmatpush1.bf16.msra.mxu0 %v3408
    %4917 = vmatprep.subr.bf16.mxu0 %v3413
    %4918 = vmatpush1.bf16.msra.mxu0 %v3412
    %4919 = vmatprep.subr.bf16.mxu0 %v3417
    %4920 = vmatpush1.bf16.msra.mxu0 %v3416
    %4921 = vmatprep.subr.bf16.mxu0 %v3421
    %4922 = vmatpush1.bf16.msra.mxu0 %v3420
    %4923 = vmatprep.subr.bf16.mxu0 %v3425
    %4924 = vmatpush1.bf16.msra.mxu0 %v3424
    %4925 = vmatprep.subr.bf16.mxu0 %v3429
    %4926 = vmatpush1.bf16.msra.mxu0 %v3428
    %4927 = vmatprep.subr.bf16.mxu0 %v3433
    %4928 = vmatpush1.bf16.msra.mxu0 %v3432
    %4929 = vmatprep.subr.bf16.mxu0 %v3437
    %4930 = vmatpush1.bf16.msra.mxu0 %v3436
    %4931 = vmatprep.subr.bf16.mxu0 %v3441
    %4932 = vmatpush1.bf16.msra.mxu0 %v3440
    %4933 = vmatprep.subr.bf16.mxu0 %v3445
    %4934 = vmatpush1.bf16.msra.mxu0 %v3444
    %4935 = vmatprep.subr.bf16.mxu0 %v3449
    %4936 = vmatpush1.bf16.msra.mxu0 %v3448
    %4937 = vmatprep.subr.bf16.mxu0 %v3453
    %4938 = vmatpush1.bf16.msra.mxu0 %v3452
    %4939 = vmatprep.mubr.bf16.mxu0 %v979
    %4940 = vmatmul.mubr.bf16.gmra.mrb[0].mxu0 %v978
    %v4941 = vpop.f32.mrb[0].mxu0
    %v4942 = vadd.f32 %v4899, %v4941
    %v4943 = vpop.f32.mrb[0].mxu0
    %v4944 = vadd.f32 %v4901, %v4943
    %v4945 = vpop.f32.mrb[0].mxu0
    %v4946 = vadd.f32 %v4903, %v4945
    %v4947 = vpop.f32.mrb[0].mxu0
    %v4948 = vadd.f32 %v4905, %v4947
    %4949 = vdwg.mxu0
    %4950 = vmatprep.subr.bf16.mxu0 %v3457
    %4951 = vmatpush1.bf16.msra.mxu0 %v3456
    %4952 = vmatprep.subr.bf16.mxu0 %v3461
    %4953 = vmatpush1.bf16.msra.mxu0 %v3460
    %4954 = vmatprep.subr.bf16.mxu0 %v3465
    %4955 = vmatpush1.bf16.msra.mxu0 %v3464
    %4956 = vmatprep.subr.bf16.mxu0 %v3469
    %4957 = vmatpush1.bf16.msra.mxu0 %v3468
    %4958 = vmatprep.subr.bf16.mxu0 %v3473
    %4959 = vmatpush1.bf16.msra.mxu0 %v3472
    %4960 = vmatprep.subr.bf16.mxu0 %v3477
    %4961 = vmatpush1.bf16.msra.mxu0 %v3476
    %4962 = vmatprep.subr.bf16.mxu0 %v3481
    %4963 = vmatpush1.bf16.msra.mxu0 %v3480
    %4964 = vmatprep.subr.bf16.mxu0 %v3485
    %4965 = vmatpush1.bf16.msra.mxu0 %v3484
    %4966 = vmatprep.subr.bf16.mxu0 %v3489
    %4967 = vmatpush1.bf16.msra.mxu0 %v3488
    %4968 = vmatprep.subr.bf16.mxu0 %v3493
    %4969 = vmatpush1.bf16.msra.mxu0 %v3492
    %4970 = vmatprep.subr.bf16.mxu0 %v3497
    %4971 = vmatpush1.bf16.msra.mxu0 %v3496
    %4972 = vmatprep.subr.bf16.mxu0 %v3501
    %4973 = vmatpush1.bf16.msra.mxu0 %v3500
    %4974 = vmatprep.subr.bf16.mxu0 %v3505
    %4975 = vmatpush1.bf16.msra.mxu0 %v3504
    %4976 = vmatprep.subr.bf16.mxu0 %v3509
    %4977 = vmatpush1.bf16.msra.mxu0 %v3508
    %4978 = vmatprep.subr.bf16.mxu0 %v3513
    %4979 = vmatpush1.bf16.msra.mxu0 %v3512
    %4980 = vmatprep.subr.bf16.mxu0 %v3517
    %4981 = vmatpush1.bf16.msra.mxu0 %v3516
    %4982 = vmatprep.mubr.bf16.mxu0 %v981
    %4983 = vmatmul.mubr.bf16.gmra.mrb[0].mxu0 %v980
    %v4984 = vpop.f32.mrb[0].mxu0
    %v4985 = vadd.f32 %v4942, %v4984
    %v4986 = vpop.f32.mrb[0].mxu0
    %v4987 = vadd.f32 %v4944, %v4986
    %v4988 = vpop.f32.mrb[0].mxu0
    %v4989 = vadd.f32 %v4946, %v4988
    %v4990 = vpop.f32.mrb[0].mxu0
    %v4991 = vadd.f32 %v4948, %v4990
    %4992 = vdwg.mxu0
    %4993 = vmatprep.subr.bf16.mxu0 %v3521
    %4994 = vmatpush1.bf16.msra.mxu0 %v3520
    %4995 = vmatprep.subr.bf16.mxu0 %v3525
    %4996 = vmatpush1.bf16.msra.mxu0 %v3524
    %4997 = vmatprep.subr.bf16.mxu0 %v3529
    %4998 = vmatpush1.bf16.msra.mxu0 %v3528
    %4999 = vmatprep.subr.bf16.mxu0 %v3533
    %5000 = vmatpush1.bf16.msra.mxu0 %v3532
    %5001 = vmatprep.subr.bf16.mxu0 %v3537
    %5002 = vmatpush1.bf16.msra.mxu0 %v3536
    %5003 = vmatprep.subr.bf16.mxu0 %v3541
    %5004 = vmatpush1.bf16.msra.mxu0 %v3540
    %5005 = vmatprep.subr.bf16.mxu0 %v3545
    %5006 = vmatpush1.bf16.msra.mxu0 %v3544
    %5007 = vmatprep.subr.bf16.mxu0 %v3549
    %5008 = vmatpush1.bf16.msra.mxu0 %v3548
    %5009 = vmatprep.subr.bf16.mxu0 %v3553
    %5010 = vmatpush1.bf16.msra.mxu0 %v3552
    %5011 = vmatprep.subr.bf16.mxu0 %v3557
    %5012 = vmatpush1.bf16.msra.mxu0 %v3556
    %5013 = vmatprep.subr.bf16.mxu0 %v3561
    %5014 = vmatpush1.bf16.msra.mxu0 %v3560
    %5015 = vmatprep.subr.bf16.mxu0 %v3565
    %5016 = vmatpush1.bf16.msra.mxu0 %v3564
    %5017 = vmatprep.subr.bf16.mxu0 %v3569
    %5018 = vmatpush1.bf16.msra.mxu0 %v3568
    %5019 = vmatprep.subr.bf16.mxu0 %v3573
    %5020 = vmatpush1.bf16.msra.mxu0 %v3572
    %5021 = vmatprep.subr.bf16.mxu0 %v3577
    %5022 = vmatpush1.bf16.msra.mxu0 %v3576
    %5023 = vmatprep.subr.bf16.mxu0 %v3581
    %5024 = vmatpush1.bf16.msra.mxu0 %v3580
    %5025 = vmatprep.mubr.bf16.mxu0 %v983
    %5026 = vmatmul.mubr.bf16.gmra.mrb[0].mxu0 %v982
    %v5027 = vpop.f32.mrb[0].mxu0
    %v5028 = vadd.f32 %v4985, %v5027
    %v5029 = vpop.f32.mrb[0].mxu0
    %v5030 = vadd.f32 %v4987, %v5029
    %v5031 = vpop.f32.mrb[0].mxu0
    %v5032 = vadd.f32 %v4989, %v5031
    %v5033 = vpop.f32.mrb[0].mxu0
    %v5034 = vadd.f32 %v4991, %v5033
    %5035 = vdwg.mxu0
    %5036 = vmatprep.subr.bf16.mxu0 %v3585
    %5037 = vmatpush1.bf16.msra.mxu0 %v3584
    %5038 = vmatprep.subr.bf16.mxu0 %v3589
    %5039 = vmatpush1.bf16.msra.mxu0 %v3588
    %5040 = vmatprep.subr.bf16.mxu0 %v3593
    %5041 = vmatpush1.bf16.msra.mxu0 %v3592
    %5042 = vmatprep.subr.bf16.mxu0 %v3597
    %5043 = vmatpush1.bf16.msra.mxu0 %v3596
    %5044 = vmatprep.subr.bf16.mxu0 %v3601
    %5045 = vmatpush1.bf16.msra.mxu0 %v3600
    %5046 = vmatprep.subr.bf16.mxu0 %v3605
    %5047 = vmatpush1.bf16.msra.mxu0 %v3604
    %5048 = vmatprep.subr.bf16.mxu0 %v3609
    %5049 = vmatpush1.bf16.msra.mxu0 %v3608
    %5050 = vmatprep.subr.bf16.mxu0 %v3613
    %5051 = vmatpush1.bf16.msra.mxu0 %v3612
    %5052 = vmatprep.subr.bf16.mxu0 %v3617
    %5053 = vmatpush1.bf16.msra.mxu0 %v3616
    %5054 = vmatprep.subr.bf16.mxu0 %v3621
    %5055 = vmatpush1.bf16.msra.mxu0 %v3620
    %5056 = vmatprep.subr.bf16.mxu0 %v3625
    %5057 = vmatpush1.bf16.msra.mxu0 %v3624
    %5058 = vmatprep.subr.bf16.mxu0 %v3629
    %5059 = vmatpush1.bf16.msra.mxu0 %v3628
    %5060 = vmatprep.subr.bf16.mxu0 %v3633
    %5061 = vmatpush1.bf16.msra.mxu0 %v3632
    %5062 = vmatprep.subr.bf16.mxu0 %v3637
    %5063 = vmatpush1.bf16.msra.mxu0 %v3636
    %5064 = vmatprep.subr.bf16.mxu0 %v3641
    %5065 = vmatpush1.bf16.msra.mxu0 %v3640
    %5066 = vmatprep.subr.bf16.mxu0 %v3645
    %5067 = vmatpush1.bf16.msra.mxu0 %v3644
    %5068 = vmatprep.mubr.bf16.mxu0 %v985
    %5069 = vmatmul.mubr.bf16.gmra.mrb[0].mxu0 %v984
    %v5070 = vpop.f32.mrb[0].mxu0
    %v5071 = vadd.f32 %v5028, %v5070
    %v5072 = vpop.f32.mrb[0].mxu0
    %v5073 = vadd.f32 %v5030, %v5072
    %v5074 = vpop.f32.mrb[0].mxu0
    %v5075 = vadd.f32 %v5032, %v5074
    %v5076 = vpop.f32.mrb[0].mxu0
    %v5077 = vadd.f32 %v5034, %v5076
    %5078 = vdwg.mxu0
    %5079 = vmatprep.subr.bf16.mxu0 %v3649
    %5080 = vmatpush1.bf16.msra.mxu0 %v3648
    %5081 = vmatprep.subr.bf16.mxu0 %v3653
    %5082 = vmatpush1.bf16.msra.mxu0 %v3652
    %5083 = vmatprep.subr.bf16.mxu0 %v3657
    %5084 = vmatpush1.bf16.msra.mxu0 %v3656
    %5085 = vmatprep.subr.bf16.mxu0 %v3661
    %5086 = vmatpush1.bf16.msra.mxu0 %v3660
    %5087 = vmatprep.subr.bf16.mxu0 %v3665
    %5088 = vmatpush1.bf16.msra.mxu0 %v3664
    %5089 = vmatprep.subr.bf16.mxu0 %v3669
    %5090 = vmatpush1.bf16.msra.mxu0 %v3668
    %5091 = vmatprep.subr.bf16.mxu0 %v3673
    %5092 = vmatpush1.bf16.msra.mxu0 %v3672
    %5093 = vmatprep.subr.bf16.mxu0 %v3677
    %5094 = vmatpush1.bf16.msra.mxu0 %v3676
    %5095 = vmatprep.subr.bf16.mxu0 %v3681
    %5096 = vmatpush1.bf16.msra.mxu0 %v3680
    %5097 = vmatprep.subr.bf16.mxu0 %v3685
    %5098 = vmatpush1.bf16.msra.mxu0 %v3684
    %5099 = vmatprep.subr.bf16.mxu0 %v3689
    %5100 = vmatpush1.bf16.msra.mxu0 %v3688
    %5101 = vmatprep.subr.bf16.mxu0 %v3693
    %5102 = vmatpush1.bf16.msra.mxu0 %v3692
    %5103 = vmatprep.subr.bf16.mxu0 %v3697
    %5104 = vmatpush1.bf16.msra.mxu0 %v3696
    %5105 = vmatprep.subr.bf16.mxu0 %v3701
    %5106 = vmatpush1.bf16.msra.mxu0 %v3700
    %5107 = vmatprep.subr.bf16.mxu0 %v3705
    %5108 = vmatpush1.bf16.msra.mxu0 %v3704
    %5109 = vmatprep.subr.bf16.mxu0 %v3709
    %5110 = vmatpush1.bf16.msra.mxu0 %v3708
    %5111 = vmatprep.mubr.bf16.mxu0 %v987
    %5112 = vmatmul.mubr.bf16.gmra.mrb[0].mxu0 %v986
    %v5113 = vpop.f32.mrb[0].mxu0
    %v5114 = vadd.f32 %v5071, %v5113
    %v5115 = vpop.f32.mrb[0].mxu0
    %v5116 = vadd.f32 %v5073, %v5115
    %v5117 = vpop.f32.mrb[0].mxu0
    %v5118 = vadd.f32 %v5075, %v5117
    %v5119 = vpop.f32.mrb[0].mxu0
    %v5120 = vadd.f32 %v5077, %v5119
    %5121 = vdwg.mxu0
    %5122 = vmatprep.subr.bf16.mxu0 %v3713
    %5123 = vmatpush1.bf16.msra.mxu0 %v3712
    %5124 = vmatprep.subr.bf16.mxu0 %v3717
    %5125 = vmatpush1.bf16.msra.mxu0 %v3716
    %5126 = vmatprep.subr.bf16.mxu0 %v3721
    %5127 = vmatpush1.bf16.msra.mxu0 %v3720
    %5128 = vmatprep.subr.bf16.mxu0 %v3725
    %5129 = vmatpush1.bf16.msra.mxu0 %v3724
    %5130 = vmatprep.subr.bf16.mxu0 %v3729
    %5131 = vmatpush1.bf16.msra.mxu0 %v3728
    %5132 = vmatprep.subr.bf16.mxu0 %v3733
    %5133 = vmatpush1.bf16.msra.mxu0 %v3732
    %5134 = vmatprep.subr.bf16.mxu0 %v3737
    %5135 = vmatpush1.bf16.msra.mxu0 %v3736
    %5136 = vmatprep.subr.bf16.mxu0 %v3741
    %5137 = vmatpush1.bf16.msra.mxu0 %v3740
    %5138 = vmatprep.subr.bf16.mxu0 %v3745
    %5139 = vmatpush1.bf16.msra.mxu0 %v3744
    %5140 = vmatprep.subr.bf16.mxu0 %v3749
    %5141 = vmatpush1.bf16.msra.mxu0 %v3748
    %5142 = vmatprep.subr.bf16.mxu0 %v3753
    %5143 = vmatpush1.bf16.msra.mxu0 %v3752
    %5144 = vmatprep.subr.bf16.mxu0 %v3757
    %5145 = vmatpush1.bf16.msra.mxu0 %v3756
    %5146 = vmatprep.subr.bf16.mxu0 %v3761
    %5147 = vmatpush1.bf16.msra.mxu0 %v3760
    %5148 = vmatprep.subr.bf16.mxu0 %v3765
    %5149 = vmatpush1.bf16.msra.mxu0 %v3764
    %5150 = vmatprep.subr.bf16.mxu0 %v3769
    %5151 = vmatpush1.bf16.msra.mxu0 %v3768
    %5152 = vmatprep.subr.bf16.mxu0 %v3773
    %5153 = vmatpush1.bf16.msra.mxu0 %v3772
    %5154 = vmatprep.mubr.bf16.mxu0 %v989
    %5155 = vmatmul.mubr.bf16.gmra.mrb[0].mxu0 %v988
    %v5156 = vpop.f32.mrb[0].mxu0
    %v5157 = vadd.f32 %v5114, %v5156
    %v5158 = vpop.f32.mrb[0].mxu0
    %v5159 = vadd.f32 %v5116, %v5158
    %v5160 = vpop.f32.mrb[0].mxu0
    %v5161 = vadd.f32 %v5118, %v5160
    %v5162 = vpop.f32.mrb[0].mxu0
    %v5163 = vadd.f32 %v5120, %v5162
    %5164 = vdwg.mxu0
    %5165 = vmatprep.subr.bf16.mxu0 %v3777
    %5166 = vmatpush1.bf16.msra.mxu0 %v3776
    %5167 = vmatprep.subr.bf16.mxu0 %v3781
    %5168 = vmatpush1.bf16.msra.mxu0 %v3780
    %5169 = vmatprep.subr.bf16.mxu0 %v3785
    %5170 = vmatpush1.bf16.msra.mxu0 %v3784
    %5171 = vmatprep.subr.bf16.mxu0 %v3789
    %5172 = vmatpush1.bf16.msra.mxu0 %v3788
    %5173 = vmatprep.subr.bf16.mxu0 %v3793
    %5174 = vmatpush1.bf16.msra.mxu0 %v3792
    %5175 = vmatprep.subr.bf16.mxu0 %v3797
    %5176 = vmatpush1.bf16.msra.mxu0 %v3796
    %5177 = vmatprep.subr.bf16.mxu0 %v3801
    %5178 = vmatpush1.bf16.msra.mxu0 %v3800
    %5179 = vmatprep.subr.bf16.mxu0 %v3805
    %5180 = vmatpush1.bf16.msra.mxu0 %v3804
    %5181 = vmatprep.subr.bf16.mxu0 %v3809
    %5182 = vmatpush1.bf16.msra.mxu0 %v3808
    %5183 = vmatprep.subr.bf16.mxu0 %v3813
    %5184 = vmatpush1.bf16.msra.mxu0 %v3812
    %5185 = vmatprep.subr.bf16.mxu0 %v3817
    %5186 = vmatpush1.bf16.msra.mxu0 %v3816
    %5187 = vmatprep.subr.bf16.mxu0 %v3821
    %5188 = vmatpush1.bf16.msra.mxu0 %v3820
    %5189 = vmatprep.subr.bf16.mxu0 %v3825
    %5190 = vmatpush1.bf16.msra.mxu0 %v3824
    %5191 = vmatprep.subr.bf16.mxu0 %v3829
    %5192 = vmatpush1.bf16.msra.mxu0 %v3828
    %5193 = vmatprep.subr.bf16.mxu0 %v3833
    %5194 = vmatpush1.bf16.msra.mxu0 %v3832
    %5195 = vmatprep.subr.bf16.mxu0 %v3837
    %5196 = vmatpush1.bf16.msra.mxu0 %v3836
    %5197 = vmatprep.mubr.bf16.mxu0 %v991
    %5198 = vmatmul.mubr.bf16.gmra.mrb[0].mxu0 %v990
    %v5199 = vpop.f32.mrb[0].mxu0
    %v5200 = vadd.f32 %v5157, %v5199
    %v5201 = vpop.f32.mrb[0].mxu0
    %v5202 = vadd.f32 %v5159, %v5201
    %v5203 = vpop.f32.mrb[0].mxu0
    %v5204 = vadd.f32 %v5161, %v5203
    %v5205 = vpop.f32.mrb[0].mxu0
    %v5206 = vadd.f32 %v5163, %v5205
    %5207 = vdwg.mxu0
    %5208 = vmatprep.subr.bf16.mxu0 %v3841
    %5209 = vmatpush1.bf16.msra.mxu0 %v3840
    %5210 = vmatprep.subr.bf16.mxu0 %v3845
    %5211 = vmatpush1.bf16.msra.mxu0 %v3844
    %5212 = vmatprep.subr.bf16.mxu0 %v3849
    %5213 = vmatpush1.bf16.msra.mxu0 %v3848
    %5214 = vmatprep.subr.bf16.mxu0 %v3853
    %5215 = vmatpush1.bf16.msra.mxu0 %v3852
    %5216 = vmatprep.subr.bf16.mxu0 %v3857
    %5217 = vmatpush1.bf16.msra.mxu0 %v3856
    %5218 = vmatprep.subr.bf16.mxu0 %v3861
    %5219 = vmatpush1.bf16.msra.mxu0 %v3860
    %5220 = vmatprep.subr.bf16.mxu0 %v3865
    %5221 = vmatpush1.bf16.msra.mxu0 %v3864
    %5222 = vmatprep.subr.bf16.mxu0 %v3869
    %5223 = vmatpush1.bf16.msra.mxu0 %v3868
    %5224 = vmatprep.subr.bf16.mxu0 %v3873
    %5225 = vmatpush1.bf16.msra.mxu0 %v3872
    %5226 = vmatprep.subr.bf16.mxu0 %v3877
    %5227 = vmatpush1.bf16.msra.mxu0 %v3876
    %5228 = vmatprep.subr.bf16.mxu0 %v3881
    %5229 = vmatpush1.bf16.msra.mxu0 %v3880
    %5230 = vmatprep.subr.bf16.mxu0 %v3885
    %5231 = vmatpush1.bf16.msra.mxu0 %v3884
    %5232 = vmatprep.subr.bf16.mxu0 %v3889
    %5233 = vmatpush1.bf16.msra.mxu0 %v3888
    %5234 = vmatprep.subr.bf16.mxu0 %v3893
    %5235 = vmatpush1.bf16.msra.mxu0 %v3892
    %5236 = vmatprep.subr.bf16.mxu0 %v3897
    %5237 = vmatpush1.bf16.msra.mxu0 %v3896
    %5238 = vmatprep.subr.bf16.mxu0 %v3901
    %5239 = vmatpush1.bf16.msra.mxu0 %v3900
    %5240 = vmatprep.mubr.bf16.mxu0 %v993
    %5241 = vmatmul.mubr.bf16.gmra.mrb[0].mxu0 %v992
    %v5242 = vpop.f32.mrb[0].mxu0
    %v5243 = vadd.f32 %v5200, %v5242
    %v5244 = vpop.f32.mrb[0].mxu0
    %v5245 = vadd.f32 %v5202, %v5244
    %v5246 = vpop.f32.mrb[0].mxu0
    %v5247 = vadd.f32 %v5204, %v5246
    %v5248 = vpop.f32.mrb[0].mxu0
    %v5249 = vadd.f32 %v5206, %v5248
    %5250 = vdwg.mxu0
    %5251 = vmatprep.subr.bf16.mxu0 %v3905
    %5252 = vmatpush1.bf16.msra.mxu0 %v3904
    %5253 = vmatprep.subr.bf16.mxu0 %v3909
    %5254 = vmatpush1.bf16.msra.mxu0 %v3908
    %5255 = vmatprep.subr.bf16.mxu0 %v3913
    %5256 = vmatpush1.bf16.msra.mxu0 %v3912
    %5257 = vmatprep.subr.bf16.mxu0 %v3917
    %5258 = vmatpush1.bf16.msra.mxu0 %v3916
    %5259 = vmatprep.subr.bf16.mxu0 %v3921
    %5260 = vmatpush1.bf16.msra.mxu0 %v3920
    %5261 = vmatprep.subr.bf16.mxu0 %v3925
    %5262 = vmatpush1.bf16.msra.mxu0 %v3924
    %5263 = vmatprep.subr.bf16.mxu0 %v3929
    %5264 = vmatpush1.bf16.msra.mxu0 %v3928
    %5265 = vmatprep.subr.bf16.mxu0 %v3933
    %5266 = vmatpush1.bf16.msra.mxu0 %v3932
    %5267 = vmatprep.subr.bf16.mxu0 %v3937
    %5268 = vmatpush1.bf16.msra.mxu0 %v3936
    %5269 = vmatprep.subr.bf16.mxu0 %v3941
    %5270 = vmatpush1.bf16.msra.mxu0 %v3940
    %5271 = vmatprep.subr.bf16.mxu0 %v3945
    %5272 = vmatpush1.bf16.msra.mxu0 %v3944
    %5273 = vmatprep.subr.bf16.mxu0 %v3949
    %5274 = vmatpush1.bf16.msra.mxu0 %v3948
    %5275 = vmatprep.subr.bf16.mxu0 %v3953
    %5276 = vmatpush1.bf16.msra.mxu0 %v3952
    %5277 = vmatprep.subr.bf16.mxu0 %v3957
    %5278 = vmatpush1.bf16.msra.mxu0 %v3956
    %5279 = vmatprep.subr.bf16.mxu0 %v3961
    %5280 = vmatpush1.bf16.msra.mxu0 %v3960
    %5281 = vmatprep.subr.bf16.mxu0 %v3965
    %5282 = vmatpush1.bf16.msra.mxu0 %v3964
    %5283 = vmatprep.mubr.bf16.mxu0 %v995
    %5284 = vmatmul.mubr.bf16.gmra.mrb[0].mxu0 %v994
    %v5285 = vpop.f32.mrb[0].mxu0
    %v5286 = vadd.f32 %v5243, %v5285
    %v5287 = vpop.f32.mrb[0].mxu0
    %v5288 = vadd.f32 %v5245, %v5287
    %v5289 = vpop.f32.mrb[0].mxu0
    %v5290 = vadd.f32 %v5247, %v5289
    %v5291 = vpop.f32.mrb[0].mxu0
    %v5292 = vadd.f32 %v5249, %v5291
    %5293 = vdwg.mxu0
    %5294 = vmatprep.subr.bf16.mxu0 %v3969
    %5295 = vmatpush1.bf16.msra.mxu0 %v3968
    %5296 = vmatprep.subr.bf16.mxu0 %v3973
    %5297 = vmatpush1.bf16.msra.mxu0 %v3972
    %5298 = vmatprep.subr.bf16.mxu0 %v3977
    %5299 = vmatpush1.bf16.msra.mxu0 %v3976
    %5300 = vmatprep.subr.bf16.mxu0 %v3981
    %5301 = vmatpush1.bf16.msra.mxu0 %v3980
    %5302 = vmatprep.subr.bf16.mxu0 %v3985
    %5303 = vmatpush1.bf16.msra.mxu0 %v3984
    %5304 = vmatprep.subr.bf16.mxu0 %v3989
    %5305 = vmatpush1.bf16.msra.mxu0 %v3988
    %5306 = vmatprep.subr.bf16.mxu0 %v3993
    %5307 = vmatpush1.bf16.msra.mxu0 %v3992
    %5308 = vmatprep.subr.bf16.mxu0 %v3997
    %5309 = vmatpush1.bf16.msra.mxu0 %v3996
    %5310 = vmatprep.subr.bf16.mxu0 %v4001
    %5311 = vmatpush1.bf16.msra.mxu0 %v4000
    %5312 = vmatprep.subr.bf16.mxu0 %v4005
    %5313 = vmatpush1.bf16.msra.mxu0 %v4004
    %5314 = vmatprep.subr.bf16.mxu0 %v4009
    %5315 = vmatpush1.bf16.msra.mxu0 %v4008
    %5316 = vmatprep.subr.bf16.mxu0 %v4013
    %5317 = vmatpush1.bf16.msra.mxu0 %v4012
    %5318 = vmatprep.subr.bf16.mxu0 %v4017
    %5319 = vmatpush1.bf16.msra.mxu0 %v4016
    %5320 = vmatprep.subr.bf16.mxu0 %v4021
    %5321 = vmatpush1.bf16.msra.mxu0 %v4020
    %5322 = vmatprep.subr.bf16.mxu0 %v4025
    %5323 = vmatpush1.bf16.msra.mxu0 %v4024
    %5324 = vmatprep.subr.bf16.mxu0 %v4029
    %5325 = vmatpush1.bf16.msra.mxu0 %v4028
    %5326 = vmatprep.mubr.bf16.mxu0 %v997
    %5327 = vmatmul.mubr.bf16.gmra.mrb[0].mxu0 %v996
    %v5328 = vpop.f32.mrb[0].mxu0
    %v5329 = vadd.f32 %v5286, %v5328
    %v5330 = vpop.f32.mrb[0].mxu0
    %v5331 = vadd.f32 %v5288, %v5330
    %v5332 = vpop.f32.mrb[0].mxu0
    %v5333 = vadd.f32 %v5290, %v5332
    %v5334 = vpop.f32.mrb[0].mxu0
    %v5335 = vadd.f32 %v5292, %v5334
    %5336 = vdwg.mxu0
    %5337 = vmatprep.subr.bf16.mxu0 %v4033
    %5338 = vmatpush1.bf16.msra.mxu0 %v4032
    %5339 = vmatprep.subr.bf16.mxu0 %v4037
    %5340 = vmatpush1.bf16.msra.mxu0 %v4036
    %5341 = vmatprep.subr.bf16.mxu0 %v4041
    %5342 = vmatpush1.bf16.msra.mxu0 %v4040
    %5343 = vmatprep.subr.bf16.mxu0 %v4045
    %5344 = vmatpush1.bf16.msra.mxu0 %v4044
    %5345 = vmatprep.subr.bf16.mxu0 %v4049
    %5346 = vmatpush1.bf16.msra.mxu0 %v4048
    %5347 = vmatprep.subr.bf16.mxu0 %v4053
    %5348 = vmatpush1.bf16.msra.mxu0 %v4052
    %5349 = vmatprep.subr.bf16.mxu0 %v4057
    %5350 = vmatpush1.bf16.msra.mxu0 %v4056
    %5351 = vmatprep.subr.bf16.mxu0 %v4061
    %5352 = vmatpush1.bf16.msra.mxu0 %v4060
    %5353 = vmatprep.subr.bf16.mxu0 %v4065
    %5354 = vmatpush1.bf16.msra.mxu0 %v4064
    %5355 = vmatprep.subr.bf16.mxu0 %v4069
    %5356 = vmatpush1.bf16.msra.mxu0 %v4068
    %5357 = vmatprep.subr.bf16.mxu0 %v4073
    %5358 = vmatpush1.bf16.msra.mxu0 %v4072
    %5359 = vmatprep.subr.bf16.mxu0 %v4077
    %5360 = vmatpush1.bf16.msra.mxu0 %v4076
    %5361 = vmatprep.subr.bf16.mxu0 %v4081
    %5362 = vmatpush1.bf16.msra.mxu0 %v4080
    %5363 = vmatprep.subr.bf16.mxu0 %v4085
    %5364 = vmatpush1.bf16.msra.mxu0 %v4084
    %5365 = vmatprep.subr.bf16.mxu0 %v4089
    %5366 = vmatpush1.bf16.msra.mxu0 %v4088
    %5367 = vmatprep.subr.bf16.mxu0 %v4093
    %5368 = vmatpush1.bf16.msra.mxu0 %v4092
    %5369 = vmatprep.mubr.bf16.mxu0 %v999
    %5370 = vmatmul.mubr.bf16.gmra.mrb[0].mxu0 %v998
    %v5371 = vpop.f32.mrb[0].mxu0
    %v5372 = vadd.f32 %v5329, %v5371
    %v5373 = vpop.f32.mrb[0].mxu0
    %v5374 = vadd.f32 %v5331, %v5373
    %v5375 = vpop.f32.mrb[0].mxu0
    %v5376 = vadd.f32 %v5333, %v5375
    %v5377 = vpop.f32.mrb[0].mxu0
    %v5378 = vadd.f32 %v5335, %v5377
    %5379 = vdwg.mxu0
    %5380 = vmatprep.subr.bf16.mxu0 %v3331
    %5381 = vmatpush1.bf16.msra.mxu0 %v3330
    %5382 = vmatprep.subr.bf16.mxu0 %v3335
    %5383 = vmatpush1.bf16.msra.mxu0 %v3334
    %5384 = vmatprep.subr.bf16.mxu0 %v3339
    %5385 = vmatpush1.bf16.msra.mxu0 %v3338
    %5386 = vmatprep.subr.bf16.mxu0 %v3343
    %5387 = vmatpush1.bf16.msra.mxu0 %v3342
    %5388 = vmatprep.subr.bf16.mxu0 %v3347
    %5389 = vmatpush1.bf16.msra.mxu0 %v3346
    %5390 = vmatprep.subr.bf16.mxu0 %v3351
    %5391 = vmatpush1.bf16.msra.mxu0 %v3350
    %5392 = vmatprep.subr.bf16.mxu0 %v3355
    %5393 = vmatpush1.bf16.msra.mxu0 %v3354
    %5394 = vmatprep.subr.bf16.mxu0 %v3359
    %5395 = vmatpush1.bf16.msra.mxu0 %v3358
    %5396 = vmatprep.subr.bf16.mxu0 %v3363
    %5397 = vmatpush1.bf16.msra.mxu0 %v3362
    %5398 = vmatprep.subr.bf16.mxu0 %v3367
    %5399 = vmatpush1.bf16.msra.mxu0 %v3366
    %5400 = vmatprep.subr.bf16.mxu0 %v3371
    %5401 = vmatpush1.bf16.msra.mxu0 %v3370
    %5402 = vmatprep.subr.bf16.mxu0 %v3375
    %5403 = vmatpush1.bf16.msra.mxu0 %v3374
    %5404 = vmatprep.subr.bf16.mxu0 %v3379
    %5405 = vmatpush1.bf16.msra.mxu0 %v3378
    %5406 = vmatprep.subr.bf16.mxu0 %v3383
    %5407 = vmatpush1.bf16.msra.mxu0 %v3382
    %5408 = vmatprep.subr.bf16.mxu0 %v3387
    %5409 = vmatpush1.bf16.msra.mxu0 %v3386
    %5410 = vmatprep.subr.bf16.mxu0 %v3391
    %5411 = vmatpush1.bf16.msra.mxu0 %v3390
    %5412 = vmatprep.mubr.bf16.mxu0 %v977
    %5413 = vmatmul.mubr.bf16.gmra.mrb[0].mxu0 %v976
    %v5414 = vpop.f32.mrb[0].mxu0
    %v5415 = vadd.f32 %v895, %v5414
    %v5416 = vpop.f32.mrb[0].mxu0
    %v5417 = vadd.f32 %v899, %v5416
    %v5418 = vpop.f32.mrb[0].mxu0
    %v5419 = vadd.f32 %v895, %v5418
    %v5420 = vpop.f32.mrb[0].mxu0
    %v5421 = vadd.f32 %v899, %v5420
    %5422 = vdwg.mxu0
    %5423 = vmatprep.subr.bf16.mxu0 %v3395
    %5424 = vmatpush1.bf16.msra.mxu0 %v3394
    %5425 = vmatprep.subr.bf16.mxu0 %v3399
    %5426 = vmatpush1.bf16.msra.mxu0 %v3398
    %5427 = vmatprep.subr.bf16.mxu0 %v3403
    %5428 = vmatpush1.bf16.msra.mxu0 %v3402
    %5429 = vmatprep.subr.bf16.mxu0 %v3407
    %5430 = vmatpush1.bf16.msra.mxu0 %v3406
    %5431 = vmatprep.subr.bf16.mxu0 %v3411
    %5432 = vmatpush1.bf16.msra.mxu0 %v3410
    %5433 = vmatprep.subr.bf16.mxu0 %v3415
    %5434 = vmatpush1.bf16.msra.mxu0 %v3414
    %5435 = vmatprep.subr.bf16.mxu0 %v3419
    %5436 = vmatpush1.bf16.msra.mxu0 %v3418
    %5437 = vmatprep.subr.bf16.mxu0 %v3423
    %5438 = vmatpush1.bf16.msra.mxu0 %v3422
    %5439 = vmatprep.subr.bf16.mxu0 %v3427
    %5440 = vmatpush1.bf16.msra.mxu0 %v3426
    %5441 = vmatprep.subr.bf16.mxu0 %v3431
    %5442 = vmatpush1.bf16.msra.mxu0 %v3430
    %5443 = vmatprep.subr.bf16.mxu0 %v3435
    %5444 = vmatpush1.bf16.msra.mxu0 %v3434
    %5445 = vmatprep.subr.bf16.mxu0 %v3439
    %5446 = vmatpush1.bf16.msra.mxu0 %v3438
    %5447 = vmatprep.subr.bf16.mxu0 %v3443
    %5448 = vmatpush1.bf16.msra.mxu0 %v3442
    %5449 = vmatprep.subr.bf16.mxu0 %v3447
    %5450 = vmatpush1.bf16.msra.mxu0 %v3446
    %5451 = vmatprep.subr.bf16.mxu0 %v3451
    %5452 = vmatpush1.bf16.msra.mxu0 %v3450
    %5453 = vmatprep.subr.bf16.mxu0 %v3455
    %5454 = vmatpush1.bf16.msra.mxu0 %v3454
    %5455 = vmatprep.mubr.bf16.mxu0 %v979
    %5456 = vmatmul.mubr.bf16.gmra.mrb[0].mxu0 %v978
    %v5457 = vpop.f32.mrb[0].mxu0
    %v5458 = vadd.f32 %v5415, %v5457
    %v5459 = vpop.f32.mrb[0].mxu0
    %v5460 = vadd.f32 %v5417, %v5459
    %v5461 = vpop.f32.mrb[0].mxu0
    %v5462 = vadd.f32 %v5419, %v5461
    %v5463 = vpop.f32.mrb[0].mxu0
    %v5464 = vadd.f32 %v5421, %v5463
    %5465 = vdwg.mxu0
    %5466 = vmatprep.subr.bf16.mxu0 %v3459
    %5467 = vmatpush1.bf16.msra.mxu0 %v3458
    %5468 = vmatprep.subr.bf16.mxu0 %v3463
    %5469 = vmatpush1.bf16.msra.mxu0 %v3462
    %5470 = vmatprep.subr.bf16.mxu0 %v3467
    %5471 = vmatpush1.bf16.msra.mxu0 %v3466
    %5472 = vmatprep.subr.bf16.mxu0 %v3471
    %5473 = vmatpush1.bf16.msra.mxu0 %v3470
    %5474 = vmatprep.subr.bf16.mxu0 %v3475
    %5475 = vmatpush1.bf16.msra.mxu0 %v3474
    %5476 = vmatprep.subr.bf16.mxu0 %v3479
    %5477 = vmatpush1.bf16.msra.mxu0 %v3478
    %5478 = vmatprep.subr.bf16.mxu0 %v3483
    %5479 = vmatpush1.bf16.msra.mxu0 %v3482
    %5480 = vmatprep.subr.bf16.mxu0 %v3487
    %5481 = vmatpush1.bf16.msra.mxu0 %v3486
    %5482 = vmatprep.subr.bf16.mxu0 %v3491
    %5483 = vmatpush1.bf16.msra.mxu0 %v3490
    %5484 = vmatprep.subr.bf16.mxu0 %v3495
    %5485 = vmatpush1.bf16.msra.mxu0 %v3494
    %5486 = vmatprep.subr.bf16.mxu0 %v3499
    %5487 = vmatpush1.bf16.msra.mxu0 %v3498
    %5488 = vmatprep.subr.bf16.mxu0 %v3503
    %5489 = vmatpush1.bf16.msra.mxu0 %v3502
    %5490 = vmatprep.subr.bf16.mxu0 %v3507
    %5491 = vmatpush1.bf16.msra.mxu0 %v3506
    %5492 = vmatprep.subr.bf16.mxu0 %v3511
    %5493 = vmatpush1.bf16.msra.mxu0 %v3510
    %5494 = vmatprep.subr.bf16.mxu0 %v3515
    %5495 = vmatpush1.bf16.msra.mxu0 %v3514
    %5496 = vmatprep.subr.bf16.mxu0 %v3519
    %5497 = vmatpush1.bf16.msra.mxu0 %v3518
    %5498 = vmatprep.mubr.bf16.mxu0 %v981
    %5499 = vmatmul.mubr.bf16.gmra.mrb[0].mxu0 %v980
    %v5500 = vpop.f32.mrb[0].mxu0
    %v5501 = vadd.f32 %v5458, %v5500
    %v5502 = vpop.f32.mrb[0].mxu0
    %v5503 = vadd.f32 %v5460, %v5502
    %v5504 = vpop.f32.mrb[0].mxu0
    %v5505 = vadd.f32 %v5462, %v5504
    %v5506 = vpop.f32.mrb[0].mxu0
    %v5507 = vadd.f32 %v5464, %v5506
    %5508 = vdwg.mxu0
    %5509 = vmatprep.subr.bf16.mxu0 %v3523
    %5510 = vmatpush1.bf16.msra.mxu0 %v3522
    %5511 = vmatprep.subr.bf16.mxu0 %v3527
    %5512 = vmatpush1.bf16.msra.mxu0 %v3526
    %5513 = vmatprep.subr.bf16.mxu0 %v3531
    %5514 = vmatpush1.bf16.msra.mxu0 %v3530
    %5515 = vmatprep.subr.bf16.mxu0 %v3535
    %5516 = vmatpush1.bf16.msra.mxu0 %v3534
    %5517 = vmatprep.subr.bf16.mxu0 %v3539
    %5518 = vmatpush1.bf16.msra.mxu0 %v3538
    %5519 = vmatprep.subr.bf16.mxu0 %v3543
    %5520 = vmatpush1.bf16.msra.mxu0 %v3542
    %5521 = vmatprep.subr.bf16.mxu0 %v3547
    %5522 = vmatpush1.bf16.msra.mxu0 %v3546
    %5523 = vmatprep.subr.bf16.mxu0 %v3551
    %5524 = vmatpush1.bf16.msra.mxu0 %v3550
    %5525 = vmatprep.subr.bf16.mxu0 %v3555
    %5526 = vmatpush1.bf16.msra.mxu0 %v3554
    %5527 = vmatprep.subr.bf16.mxu0 %v3559
    %5528 = vmatpush1.bf16.msra.mxu0 %v3558
    %5529 = vmatprep.subr.bf16.mxu0 %v3563
    %5530 = vmatpush1.bf16.msra.mxu0 %v3562
    %5531 = vmatprep.subr.bf16.mxu0 %v3567
    %5532 = vmatpush1.bf16.msra.mxu0 %v3566
    %5533 = vmatprep.subr.bf16.mxu0 %v3571
    %5534 = vmatpush1.bf16.msra.mxu0 %v3570
    %5535 = vmatprep.subr.bf16.mxu0 %v3575
    %5536 = vmatpush1.bf16.msra.mxu0 %v3574
    %5537 = vmatprep.subr.bf16.mxu0 %v3579
    %5538 = vmatpush1.bf16.msra.mxu0 %v3578
    %5539 = vmatprep.subr.bf16.mxu0 %v3583
    %5540 = vmatpush1.bf16.msra.mxu0 %v3582
    %5541 = vmatprep.mubr.bf16.mxu0 %v983
    %5542 = vmatmul.mubr.bf16.gmra.mrb[0].mxu0 %v982
    %v5543 = vpop.f32.mrb[0].mxu0
    %v5544 = vadd.f32 %v5501, %v5543
    %v5545 = vpop.f32.mrb[0].mxu0
    %v5546 = vadd.f32 %v5503, %v5545
    %v5547 = vpop.f32.mrb[0].mxu0
    %v5548 = vadd.f32 %v5505, %v5547
    %v5549 = vpop.f32.mrb[0].mxu0
    %v5550 = vadd.f32 %v5507, %v5549
    %5551 = vdwg.mxu0
    %5552 = vmatprep.subr.bf16.mxu0 %v3587
    %5553 = vmatpush1.bf16.msra.mxu0 %v3586
    %5554 = vmatprep.subr.bf16.mxu0 %v3591
    %5555 = vmatpush1.bf16.msra.mxu0 %v3590
    %5556 = vmatprep.subr.bf16.mxu0 %v3595
    %5557 = vmatpush1.bf16.msra.mxu0 %v3594
    %5558 = vmatprep.subr.bf16.mxu0 %v3599
    %5559 = vmatpush1.bf16.msra.mxu0 %v3598
    %5560 = vmatprep.subr.bf16.mxu0 %v3603
    %5561 = vmatpush1.bf16.msra.mxu0 %v3602
    %5562 = vmatprep.subr.bf16.mxu0 %v3607
    %5563 = vmatpush1.bf16.msra.mxu0 %v3606
    %5564 = vmatprep.subr.bf16.mxu0 %v3611
    %5565 = vmatpush1.bf16.msra.mxu0 %v3610
    %5566 = vmatprep.subr.bf16.mxu0 %v3615
    %5567 = vmatpush1.bf16.msra.mxu0 %v3614
    %5568 = vmatprep.subr.bf16.mxu0 %v3619
    %5569 = vmatpush1.bf16.msra.mxu0 %v3618
    %5570 = vmatprep.subr.bf16.mxu0 %v3623
    %5571 = vmatpush1.bf16.msra.mxu0 %v3622
    %5572 = vmatprep.subr.bf16.mxu0 %v3627
    %5573 = vmatpush1.bf16.msra.mxu0 %v3626
    %5574 = vmatprep.subr.bf16.mxu0 %v3631
    %5575 = vmatpush1.bf16.msra.mxu0 %v3630
    %5576 = vmatprep.subr.bf16.mxu0 %v3635
    %5577 = vmatpush1.bf16.msra.mxu0 %v3634
    %5578 = vmatprep.subr.bf16.mxu0 %v3639
    %5579 = vmatpush1.bf16.msra.mxu0 %v3638
    %5580 = vmatprep.subr.bf16.mxu0 %v3643
    %5581 = vmatpush1.bf16.msra.mxu0 %v3642
    %5582 = vmatprep.subr.bf16.mxu0 %v3647
    %5583 = vmatpush1.bf16.msra.mxu0 %v3646
    %5584 = vmatprep.mubr.bf16.mxu0 %v985
    %5585 = vmatmul.mubr.bf16.gmra.mrb[0].mxu0 %v984
    %v5586 = vpop.f32.mrb[0].mxu0
    %v5587 = vadd.f32 %v5544, %v5586
    %v5588 = vpop.f32.mrb[0].mxu0
    %v5589 = vadd.f32 %v5546, %v5588
    %v5590 = vpop.f32.mrb[0].mxu0
    %v5591 = vadd.f32 %v5548, %v5590
    %v5592 = vpop.f32.mrb[0].mxu0
    %v5593 = vadd.f32 %v5550, %v5592
    %5594 = vdwg.mxu0
    %5595 = vmatprep.subr.bf16.mxu0 %v3651
    %5596 = vmatpush1.bf16.msra.mxu0 %v3650
    %5597 = vmatprep.subr.bf16.mxu0 %v3655
    %5598 = vmatpush1.bf16.msra.mxu0 %v3654
    %5599 = vmatprep.subr.bf16.mxu0 %v3659
    %5600 = vmatpush1.bf16.msra.mxu0 %v3658
    %5601 = vmatprep.subr.bf16.mxu0 %v3663
    %5602 = vmatpush1.bf16.msra.mxu0 %v3662
    %5603 = vmatprep.subr.bf16.mxu0 %v3667
    %5604 = vmatpush1.bf16.msra.mxu0 %v3666
    %5605 = vmatprep.subr.bf16.mxu0 %v3671
    %5606 = vmatpush1.bf16.msra.mxu0 %v3670
    %5607 = vmatprep.subr.bf16.mxu0 %v3675
    %5608 = vmatpush1.bf16.msra.mxu0 %v3674
    %5609 = vmatprep.subr.bf16.mxu0 %v3679
    %5610 = vmatpush1.bf16.msra.mxu0 %v3678
    %5611 = vmatprep.subr.bf16.mxu0 %v3683
    %5612 = vmatpush1.bf16.msra.mxu0 %v3682
    %5613 = vmatprep.subr.bf16.mxu0 %v3687
    %5614 = vmatpush1.bf16.msra.mxu0 %v3686
    %5615 = vmatprep.subr.bf16.mxu0 %v3691
    %5616 = vmatpush1.bf16.msra.mxu0 %v3690
    %5617 = vmatprep.subr.bf16.mxu0 %v3695
    %5618 = vmatpush1.bf16.msra.mxu0 %v3694
    %5619 = vmatprep.subr.bf16.mxu0 %v3699
    %5620 = vmatpush1.bf16.msra.mxu0 %v3698
    %5621 = vmatprep.subr.bf16.mxu0 %v3703
    %5622 = vmatpush1.bf16.msra.mxu0 %v3702
    %5623 = vmatprep.subr.bf16.mxu0 %v3707
    %5624 = vmatpush1.bf16.msra.mxu0 %v3706
    %5625 = vmatprep.subr.bf16.mxu0 %v3711
    %5626 = vmatpush1.bf16.msra.mxu0 %v3710
    %5627 = vmatprep.mubr.bf16.mxu0 %v987
    %5628 = vmatmul.mubr.bf16.gmra.mrb[0].mxu0 %v986
    %v5629 = vpop.f32.mrb[0].mxu0
    %v5630 = vadd.f32 %v5587, %v5629
    %v5631 = vpop.f32.mrb[0].mxu0
    %v5632 = vadd.f32 %v5589, %v5631
    %v5633 = vpop.f32.mrb[0].mxu0
    %v5634 = vadd.f32 %v5591, %v5633
    %v5635 = vpop.f32.mrb[0].mxu0
    %v5636 = vadd.f32 %v5593, %v5635
    %5637 = vdwg.mxu0
    %5638 = vmatprep.subr.bf16.mxu0 %v3715
    %5639 = vmatpush1.bf16.msra.mxu0 %v3714
    %5640 = vmatprep.subr.bf16.mxu0 %v3719
    %5641 = vmatpush1.bf16.msra.mxu0 %v3718
    %5642 = vmatprep.subr.bf16.mxu0 %v3723
    %5643 = vmatpush1.bf16.msra.mxu0 %v3722
    %5644 = vmatprep.subr.bf16.mxu0 %v3727
    %5645 = vmatpush1.bf16.msra.mxu0 %v3726
    %5646 = vmatprep.subr.bf16.mxu0 %v3731
    %5647 = vmatpush1.bf16.msra.mxu0 %v3730
    %5648 = vmatprep.subr.bf16.mxu0 %v3735
    %5649 = vmatpush1.bf16.msra.mxu0 %v3734
    %5650 = vmatprep.subr.bf16.mxu0 %v3739
    %5651 = vmatpush1.bf16.msra.mxu0 %v3738
    %5652 = vmatprep.subr.bf16.mxu0 %v3743
    %5653 = vmatpush1.bf16.msra.mxu0 %v3742
    %5654 = vmatprep.subr.bf16.mxu0 %v3747
    %5655 = vmatpush1.bf16.msra.mxu0 %v3746
    %5656 = vmatprep.subr.bf16.mxu0 %v3751
    %5657 = vmatpush1.bf16.msra.mxu0 %v3750
    %5658 = vmatprep.subr.bf16.mxu0 %v3755
    %5659 = vmatpush1.bf16.msra.mxu0 %v3754
    %5660 = vmatprep.subr.bf16.mxu0 %v3759
    %5661 = vmatpush1.bf16.msra.mxu0 %v3758
    %5662 = vmatprep.subr.bf16.mxu0 %v3763
    %5663 = vmatpush1.bf16.msra.mxu0 %v3762
    %5664 = vmatprep.subr.bf16.mxu0 %v3767
    %5665 = vmatpush1.bf16.msra.mxu0 %v3766
    %5666 = vmatprep.subr.bf16.mxu0 %v3771
    %5667 = vmatpush1.bf16.msra.mxu0 %v3770
    %5668 = vmatprep.subr.bf16.mxu0 %v3775
    %5669 = vmatpush1.bf16.msra.mxu0 %v3774
    %5670 = vmatprep.mubr.bf16.mxu0 %v989
    %5671 = vmatmul.mubr.bf16.gmra.mrb[0].mxu0 %v988
    %v5672 = vpop.f32.mrb[0].mxu0
    %v5673 = vadd.f32 %v5630, %v5672
    %v5674 = vpop.f32.mrb[0].mxu0
    %v5675 = vadd.f32 %v5632, %v5674
    %v5676 = vpop.f32.mrb[0].mxu0
    %v5677 = vadd.f32 %v5634, %v5676
    %v5678 = vpop.f32.mrb[0].mxu0
    %v5679 = vadd.f32 %v5636, %v5678
    %5680 = vdwg.mxu0
    %5681 = vmatprep.subr.bf16.mxu0 %v3779
    %5682 = vmatpush1.bf16.msra.mxu0 %v3778
    %5683 = vmatprep.subr.bf16.mxu0 %v3783
    %5684 = vmatpush1.bf16.msra.mxu0 %v3782
    %5685 = vmatprep.subr.bf16.mxu0 %v3787
    %5686 = vmatpush1.bf16.msra.mxu0 %v3786
    %5687 = vmatprep.subr.bf16.mxu0 %v3791
    %5688 = vmatpush1.bf16.msra.mxu0 %v3790
    %5689 = vmatprep.subr.bf16.mxu0 %v3795
    %5690 = vmatpush1.bf16.msra.mxu0 %v3794
    %5691 = vmatprep.subr.bf16.mxu0 %v3799
    %5692 = vmatpush1.bf16.msra.mxu0 %v3798
    %5693 = vmatprep.subr.bf16.mxu0 %v3803
    %5694 = vmatpush1.bf16.msra.mxu0 %v3802
    %5695 = vmatprep.subr.bf16.mxu0 %v3807
    %5696 = vmatpush1.bf16.msra.mxu0 %v3806
    %5697 = vmatprep.subr.bf16.mxu0 %v3811
    %5698 = vmatpush1.bf16.msra.mxu0 %v3810
    %5699 = vmatprep.subr.bf16.mxu0 %v3815
    %5700 = vmatpush1.bf16.msra.mxu0 %v3814
    %5701 = vmatprep.subr.bf16.mxu0 %v3819
    %5702 = vmatpush1.bf16.msra.mxu0 %v3818
    %5703 = vmatprep.subr.bf16.mxu0 %v3823
    %5704 = vmatpush1.bf16.msra.mxu0 %v3822
    %5705 = vmatprep.subr.bf16.mxu0 %v3827
    %5706 = vmatpush1.bf16.msra.mxu0 %v3826
    %5707 = vmatprep.subr.bf16.mxu0 %v3831
    %5708 = vmatpush1.bf16.msra.mxu0 %v3830
    %5709 = vmatprep.subr.bf16.mxu0 %v3835
    %5710 = vmatpush1.bf16.msra.mxu0 %v3834
    %5711 = vmatprep.subr.bf16.mxu0 %v3839
    %5712 = vmatpush1.bf16.msra.mxu0 %v3838
    %5713 = vmatprep.mubr.bf16.mxu0 %v991
    %5714 = vmatmul.mubr.bf16.gmra.mrb[0].mxu0 %v990
    %v5715 = vpop.f32.mrb[0].mxu0
    %v5716 = vadd.f32 %v5673, %v5715
    %v5717 = vpop.f32.mrb[0].mxu0
    %v5718 = vadd.f32 %v5675, %v5717
    %v5719 = vpop.f32.mrb[0].mxu0
    %v5720 = vadd.f32 %v5677, %v5719
    %v5721 = vpop.f32.mrb[0].mxu0
    %v5722 = vadd.f32 %v5679, %v5721
    %5723 = vdwg.mxu0
    %5724 = vmatprep.subr.bf16.mxu0 %v3843
    %5725 = vmatpush1.bf16.msra.mxu0 %v3842
    %5726 = vmatprep.subr.bf16.mxu0 %v3847
    %5727 = vmatpush1.bf16.msra.mxu0 %v3846
    %5728 = vmatprep.subr.bf16.mxu0 %v3851
    %5729 = vmatpush1.bf16.msra.mxu0 %v3850
    %5730 = vmatprep.subr.bf16.mxu0 %v3855
    %5731 = vmatpush1.bf16.msra.mxu0 %v3854
    %5732 = vmatprep.subr.bf16.mxu0 %v3859
    %5733 = vmatpush1.bf16.msra.mxu0 %v3858
    %5734 = vmatprep.subr.bf16.mxu0 %v3863
    %5735 = vmatpush1.bf16.msra.mxu0 %v3862
    %5736 = vmatprep.subr.bf16.mxu0 %v3867
    %5737 = vmatpush1.bf16.msra.mxu0 %v3866
    %5738 = vmatprep.subr.bf16.mxu0 %v3871
    %5739 = vmatpush1.bf16.msra.mxu0 %v3870
    %5740 = vmatprep.subr.bf16.mxu0 %v3875
    %5741 = vmatpush1.bf16.msra.mxu0 %v3874
    %5742 = vmatprep.subr.bf16.mxu0 %v3879
    %5743 = vmatpush1.bf16.msra.mxu0 %v3878
    %5744 = vmatprep.subr.bf16.mxu0 %v3883
    %5745 = vmatpush1.bf16.msra.mxu0 %v3882
    %5746 = vmatprep.subr.bf16.mxu0 %v3887
    %5747 = vmatpush1.bf16.msra.mxu0 %v3886
    %5748 = vmatprep.subr.bf16.mxu0 %v3891
    %5749 = vmatpush1.bf16.msra.mxu0 %v3890
    %5750 = vmatprep.subr.bf16.mxu0 %v3895
    %5751 = vmatpush1.bf16.msra.mxu0 %v3894
    %5752 = vmatprep.subr.bf16.mxu0 %v3899
    %5753 = vmatpush1.bf16.msra.mxu0 %v3898
    %5754 = vmatprep.subr.bf16.mxu0 %v3903
    %5755 = vmatpush1.bf16.msra.mxu0 %v3902
    %5756 = vmatprep.mubr.bf16.mxu0 %v993
    %5757 = vmatmul.mubr.bf16.gmra.mrb[0].mxu0 %v992
    %v5758 = vpop.f32.mrb[0].mxu0
    %v5759 = vadd.f32 %v5716, %v5758
    %v5760 = vpop.f32.mrb[0].mxu0
    %v5761 = vadd.f32 %v5718, %v5760
    %v5762 = vpop.f32.mrb[0].mxu0
    %v5763 = vadd.f32 %v5720, %v5762
    %v5764 = vpop.f32.mrb[0].mxu0
    %v5765 = vadd.f32 %v5722, %v5764
    %5766 = vdwg.mxu0
    %5767 = vmatprep.subr.bf16.mxu0 %v3907
    %5768 = vmatpush1.bf16.msra.mxu0 %v3906
    %5769 = vmatprep.subr.bf16.mxu0 %v3911
    %5770 = vmatpush1.bf16.msra.mxu0 %v3910
    %5771 = vmatprep.subr.bf16.mxu0 %v3915
    %5772 = vmatpush1.bf16.msra.mxu0 %v3914
    %5773 = vmatprep.subr.bf16.mxu0 %v3919
    %5774 = vmatpush1.bf16.msra.mxu0 %v3918
    %5775 = vmatprep.subr.bf16.mxu0 %v3923
    %5776 = vmatpush1.bf16.msra.mxu0 %v3922
    %5777 = vmatprep.subr.bf16.mxu0 %v3927
    %5778 = vmatpush1.bf16.msra.mxu0 %v3926
    %5779 = vmatprep.subr.bf16.mxu0 %v3931
    %5780 = vmatpush1.bf16.msra.mxu0 %v3930
    %5781 = vmatprep.subr.bf16.mxu0 %v3935
    %5782 = vmatpush1.bf16.msra.mxu0 %v3934
    %5783 = vmatprep.subr.bf16.mxu0 %v3939
    %5784 = vmatpush1.bf16.msra.mxu0 %v3938
    %5785 = vmatprep.subr.bf16.mxu0 %v3943
    %5786 = vmatpush1.bf16.msra.mxu0 %v3942
    %5787 = vmatprep.subr.bf16.mxu0 %v3947
    %5788 = vmatpush1.bf16.msra.mxu0 %v3946
    %5789 = vmatprep.subr.bf16.mxu0 %v3951
    %5790 = vmatpush1.bf16.msra.mxu0 %v3950
    %5791 = vmatprep.subr.bf16.mxu0 %v3955
    %5792 = vmatpush1.bf16.msra.mxu0 %v3954
    %5793 = vmatprep.subr.bf16.mxu0 %v3959
    %5794 = vmatpush1.bf16.msra.mxu0 %v3958
    %5795 = vmatprep.subr.bf16.mxu0 %v3963
    %5796 = vmatpush1.bf16.msra.mxu0 %v3962
    %5797 = vmatprep.subr.bf16.mxu0 %v3967
    %5798 = vmatpush1.bf16.msra.mxu0 %v3966
    %5799 = vmatprep.mubr.bf16.mxu0 %v995
    %5800 = vmatmul.mubr.bf16.gmra.mrb[0].mxu0 %v994
    %v5801 = vpop.f32.mrb[0].mxu0
    %v5802 = vadd.f32 %v5759, %v5801
    %v5803 = vpop.f32.mrb[0].mxu0
    %v5804 = vadd.f32 %v5761, %v5803
    %v5805 = vpop.f32.mrb[0].mxu0
    %v5806 = vadd.f32 %v5763, %v5805
    %v5807 = vpop.f32.mrb[0].mxu0
    %v5808 = vadd.f32 %v5765, %v5807
    %5809 = vdwg.mxu0
    %5810 = vmatprep.subr.bf16.mxu0 %v3971
    %5811 = vmatpush1.bf16.msra.mxu0 %v3970
    %5812 = vmatprep.subr.bf16.mxu0 %v3975
    %5813 = vmatpush1.bf16.msra.mxu0 %v3974
    %5814 = vmatprep.subr.bf16.mxu0 %v3979
    %5815 = vmatpush1.bf16.msra.mxu0 %v3978
    %5816 = vmatprep.subr.bf16.mxu0 %v3983
    %5817 = vmatpush1.bf16.msra.mxu0 %v3982
    %5818 = vmatprep.subr.bf16.mxu0 %v3987
    %5819 = vmatpush1.bf16.msra.mxu0 %v3986
    %5820 = vmatprep.subr.bf16.mxu0 %v3991
    %5821 = vmatpush1.bf16.msra.mxu0 %v3990
    %5822 = vmatprep.subr.bf16.mxu0 %v3995
    %5823 = vmatpush1.bf16.msra.mxu0 %v3994
    %5824 = vmatprep.subr.bf16.mxu0 %v3999
    %5825 = vmatpush1.bf16.msra.mxu0 %v3998
    %5826 = vmatprep.subr.bf16.mxu0 %v4003
    %5827 = vmatpush1.bf16.msra.mxu0 %v4002
    %5828 = vmatprep.subr.bf16.mxu0 %v4007
    %5829 = vmatpush1.bf16.msra.mxu0 %v4006
    %5830 = vmatprep.subr.bf16.mxu0 %v4011
    %5831 = vmatpush1.bf16.msra.mxu0 %v4010
    %5832 = vmatprep.subr.bf16.mxu0 %v4015
    %5833 = vmatpush1.bf16.msra.mxu0 %v4014
    %5834 = vmatprep.subr.bf16.mxu0 %v4019
    %5835 = vmatpush1.bf16.msra.mxu0 %v4018
    %5836 = vmatprep.subr.bf16.mxu0 %v4023
    %5837 = vmatpush1.bf16.msra.mxu0 %v4022
    %5838 = vmatprep.subr.bf16.mxu0 %v4027
    %5839 = vmatpush1.bf16.msra.mxu0 %v4026
    %5840 = vmatprep.subr.bf16.mxu0 %v4031
    %5841 = vmatpush1.bf16.msra.mxu0 %v4030
    %5842 = vmatprep.mubr.bf16.mxu0 %v997
    %5843 = vmatmul.mubr.bf16.gmra.mrb[0].mxu0 %v996
    %v5844 = vpop.f32.mrb[0].mxu0
    %v5845 = vadd.f32 %v5802, %v5844
    %v5846 = vpop.f32.mrb[0].mxu0
    %v5847 = vadd.f32 %v5804, %v5846
    %v5848 = vpop.f32.mrb[0].mxu0
    %v5849 = vadd.f32 %v5806, %v5848
    %v5850 = vpop.f32.mrb[0].mxu0
    %v5851 = vadd.f32 %v5808, %v5850
    %5852 = vdwg.mxu0
    %5853 = vmatprep.subr.bf16.mxu0 %v4035
    %5854 = vmatpush1.bf16.msra.mxu0 %v4034
    %5855 = vmatprep.subr.bf16.mxu0 %v4039
    %5856 = vmatpush1.bf16.msra.mxu0 %v4038
    %5857 = vmatprep.subr.bf16.mxu0 %v4043
    %5858 = vmatpush1.bf16.msra.mxu0 %v4042
    %5859 = vmatprep.subr.bf16.mxu0 %v4047
    %5860 = vmatpush1.bf16.msra.mxu0 %v4046
    %5861 = vmatprep.subr.bf16.mxu0 %v4051
    %5862 = vmatpush1.bf16.msra.mxu0 %v4050
    %5863 = vmatprep.subr.bf16.mxu0 %v4055
    %5864 = vmatpush1.bf16.msra.mxu0 %v4054
    %5865 = vmatprep.subr.bf16.mxu0 %v4059
    %5866 = vmatpush1.bf16.msra.mxu0 %v4058
    %5867 = vmatprep.subr.bf16.mxu0 %v4063
    %5868 = vmatpush1.bf16.msra.mxu0 %v4062
    %5869 = vmatprep.subr.bf16.mxu0 %v4067
    %5870 = vmatpush1.bf16.msra.mxu0 %v4066
    %5871 = vmatprep.subr.bf16.mxu0 %v4071
    %5872 = vmatpush1.bf16.msra.mxu0 %v4070
    %5873 = vmatprep.subr.bf16.mxu0 %v4075
    %5874 = vmatpush1.bf16.msra.mxu0 %v4074
    %5875 = vmatprep.subr.bf16.mxu0 %v4079
    %5876 = vmatpush1.bf16.msra.mxu0 %v4078
    %5877 = vmatprep.subr.bf16.mxu0 %v4083
    %5878 = vmatpush1.bf16.msra.mxu0 %v4082
    %5879 = vmatprep.subr.bf16.mxu0 %v4087
    %5880 = vmatpush1.bf16.msra.mxu0 %v4086
    %5881 = vmatprep.subr.bf16.mxu0 %v4091
    %5882 = vmatpush1.bf16.msra.mxu0 %v4090
    %5883 = vmatprep.subr.bf16.mxu0 %v4095
    %5884 = vmatpush1.bf16.msra.mxu0 %v4094
    %5885 = vmatprep.mubr.bf16.mxu0 %v999
    %5886 = vmatmul.mubr.bf16.gmra.mrb[0].mxu0 %v998
    %v5887 = vpop.f32.mrb[0].mxu0
    %v5888 = vadd.f32 %v5845, %v5887
    %v5889 = vpop.f32.mrb[0].mxu0
    %v5890 = vadd.f32 %v5847, %v5889
    %v5891 = vpop.f32.mrb[0].mxu0
    %v5892 = vadd.f32 %v5849, %v5891
    %v5893 = vpop.f32.mrb[0].mxu0
    %v5894 = vadd.f32 %v5851, %v5893
    %5895 = vdwg.mxu0
    %v5896 = vmax.f32 %v5372, 0.0
    %v5897 = vmax.f32 %v5374, 0.0
    %v5898 = vmax.f32 %v5888, 0.0
    %v5899 = vmax.f32 %v5890, 0.0
    %v5900 = vmax.f32 %v5376, 0.0
    %v5901 = vmax.f32 %v5378, 0.0
    %v5902 = vmax.f32 %v5892, 0.0
    %v5903 = vmax.f32 %v5894, 0.0
    %v5904 = vpack.c.bf16 %v5900, %v5896
    %v5905 = vpack.c.bf16 %v5901, %v5897
    %v5906 = vpack.c.bf16 %v5902, %v5898
    %v5907 = vpack.c.bf16 %v5903, %v5899
    %v5908 = vld [vmem:[#allocation7] sm:$0xf]
    %v5909 = vld [vmem:[#allocation7 + $0x4] sm:$0xf]
    %v5910 = vld [vmem:[#allocation7 + $0x8] sm:$0xf]
    %v5911 = vld [vmem:[#allocation7 + $0xc] sm:$0xf]
    %v5912 = vld [vmem:[#allocation7 + $0x10] sm:$0xf]
    %v5913 = vld [vmem:[#allocation7 + $0x14] sm:$0xf]
    %v5914 = vld [vmem:[#allocation7 + $0x18] sm:$0xf]
    %v5915 = vld [vmem:[#allocation7 + $0x1c] sm:$0xf]
    %v5916 = vld [vmem:[#allocation7 + $0x20] sm:$0xf]
    %v5917 = vld [vmem:[#allocation7 + $0x24] sm:$0xf]
    %v5918 = vld [vmem:[#allocation7 + $0x28] sm:$0xf]
    %v5919 = vld [vmem:[#allocation7 + $0x2c] sm:$0xf]
    %v5920 = vld [vmem:[#allocation7 + $0x30] sm:$0xf]
    %v5921 = vld [vmem:[#allocation7 + $0x34] sm:$0xf]
    %v5922 = vld [vmem:[#allocation7 + $0x38] sm:$0xf]
    %v5923 = vld [vmem:[#allocation7 + $0x3c] sm:$0xf]
    %v5924 = vld [vmem:[#allocation7 + $0x40] sm:$0xf]
    %v5925 = vld [vmem:[#allocation7 + $0x44] sm:$0xf]
    %v5926 = vld [vmem:[#allocation7 + $0x48] sm:$0xf]
    %v5927 = vld [vmem:[#allocation7 + $0x4c] sm:$0xf]
    %v5928 = vld [vmem:[#allocation7 + $0x50] sm:$0xf]
    %v5929 = vld [vmem:[#allocation7 + $0x54] sm:$0xf]
    %v5930 = vld [vmem:[#allocation7 + $0x58] sm:$0xf]
    %v5931 = vld [vmem:[#allocation7 + $0x5c] sm:$0xf]
    %v5932 = vld [vmem:[#allocation7 + $0x60] sm:$0xf]
    %v5933 = vld [vmem:[#allocation7 + $0x64] sm:$0xf]
    %v5934 = vld [vmem:[#allocation7 + $0x68] sm:$0xf]
    %v5935 = vld [vmem:[#allocation7 + $0x6c] sm:$0xf]
    %v5936 = vld [vmem:[#allocation7 + $0x70] sm:$0xf]
    %v5937 = vld [vmem:[#allocation7 + $0x74] sm:$0xf]
    %v5938 = vld [vmem:[#allocation7 + $0x78] sm:$0xf]
    %v5939 = vld [vmem:[#allocation7 + $0x7c] sm:$0xf]
    %v5940 = vld [vmem:[#allocation7 + $0x80] sm:$0xf]
    %v5941 = vld [vmem:[#allocation7 + $0x84] sm:$0xf]
    %v5942 = vld [vmem:[#allocation7 + $0x88] sm:$0xf]
    %v5943 = vld [vmem:[#allocation7 + $0x8c] sm:$0xf]
    %v5944 = vld [vmem:[#allocation7 + $0x90] sm:$0xf]
    %v5945 = vld [vmem:[#allocation7 + $0x94] sm:$0xf]
    %v5946 = vld [vmem:[#allocation7 + $0x98] sm:$0xf]
    %v5947 = vld [vmem:[#allocation7 + $0x9c] sm:$0xf]
    %v5948 = vld [vmem:[#allocation7 + $0xa0] sm:$0xf]
    %v5949 = vld [vmem:[#allocation7 + $0xa4] sm:$0xf]
    %v5950 = vld [vmem:[#allocation7 + $0xa8] sm:$0xf]
    %v5951 = vld [vmem:[#allocation7 + $0xac] sm:$0xf]
    %v5952 = vld [vmem:[#allocation7 + $0xb0] sm:$0xf]
    %v5953 = vld [vmem:[#allocation7 + $0xb4] sm:$0xf]
    %v5954 = vld [vmem:[#allocation7 + $0xb8] sm:$0xf]
    %v5955 = vld [vmem:[#allocation7 + $0xbc] sm:$0xf]
    %v5956 = vld [vmem:[#allocation7 + $0xc0] sm:$0xf]
    %v5957 = vld [vmem:[#allocation7 + $0xc4] sm:$0xf]
    %v5958 = vld [vmem:[#allocation7 + $0xc8] sm:$0xf]
    %v5959 = vld [vmem:[#allocation7 + $0xcc] sm:$0xf]
    %v5960 = vld [vmem:[#allocation7 + $0xd0] sm:$0xf]
    %v5961 = vld [vmem:[#allocation7 + $0xd4] sm:$0xf]
    %v5962 = vld [vmem:[#allocation7 + $0xd8] sm:$0xf]
    %v5963 = vld [vmem:[#allocation7 + $0xdc] sm:$0xf]
    %v5964 = vld [vmem:[#allocation7 + $0xe0] sm:$0xf]
    %v5965 = vld [vmem:[#allocation7 + $0xe4] sm:$0xf]
    %v5966 = vld [vmem:[#allocation7 + $0xe8] sm:$0xf]
    %v5967 = vld [vmem:[#allocation7 + $0xec] sm:$0xf]
    %v5968 = vld [vmem:[#allocation7 + $0xf0] sm:$0xf]
    %v5969 = vld [vmem:[#allocation7 + $0xf4] sm:$0xf]
    %v5970 = vld [vmem:[#allocation7 + $0xf8] sm:$0xf]
    %v5971 = vld [vmem:[#allocation7 + $0xfc] sm:$0xf]
    %v5972 = vlaneseq
    %v5973 = vshrl.u32 %v5972, 7
    %v5974 = vsub.s32 0, %v5973
    %v5975 = vrot.slane %v89, %v5974
    %v6040 = vunpack.c.l.b16 %v5908
    %v6041 = vunpack.c.l.b16 %v5909
    %v6042 = vunpack.c.l.b16 %v5910
    %v6043 = vunpack.c.l.b16 %v5911
    %v6044 = vunpack.c.l.b16 %v5912
    %v6045 = vunpack.c.l.b16 %v5913
    %v6046 = vunpack.c.l.b16 %v5914
    %v6047 = vunpack.c.l.b16 %v5915
    %v6048 = vunpack.c.l.b16 %v5916
    %v6049 = vunpack.c.l.b16 %v5917
    %v6050 = vunpack.c.l.b16 %v5918
    %v6051 = vunpack.c.l.b16 %v5919
    %v6052 = vunpack.c.l.b16 %v5920
    %v6053 = vunpack.c.l.b16 %v5921
    %v6054 = vunpack.c.l.b16 %v5922
    %v6055 = vunpack.c.l.b16 %v5923
    %v6056 = vunpack.c.l.b16 %v5924
    %v6057 = vunpack.c.l.b16 %v5925
    %v6058 = vunpack.c.l.b16 %v5926
    %v6059 = vunpack.c.l.b16 %v5927
    %v6060 = vunpack.c.l.b16 %v5928
    %v6061 = vunpack.c.l.b16 %v5929
    %v6062 = vunpack.c.l.b16 %v5930
    %v6063 = vunpack.c.l.b16 %v5931
    %v6064 = vunpack.c.l.b16 %v5932
    %v6065 = vunpack.c.l.b16 %v5933
    %v6066 = vunpack.c.l.b16 %v5934
    %v6067 = vunpack.c.l.b16 %v5935
    %v6068 = vunpack.c.l.b16 %v5936
    %v6069 = vunpack.c.l.b16 %v5937
    %v6070 = vunpack.c.l.b16 %v5938
    %v6071 = vunpack.c.l.b16 %v5939
    %v6072 = vunpack.c.l.b16 %v5940
    %v6073 = vunpack.c.l.b16 %v5941
    %v6074 = vunpack.c.l.b16 %v5942
    %v6075 = vunpack.c.l.b16 %v5943
    %v6076 = vunpack.c.l.b16 %v5944
    %v6077 = vunpack.c.l.b16 %v5945
    %v6078 = vunpack.c.l.b16 %v5946
    %v6079 = vunpack.c.l.b16 %v5947
    %v6080 = vunpack.c.l.b16 %v5948
    %v6081 = vunpack.c.l.b16 %v5949
    %v6082 = vunpack.c.l.b16 %v5950
    %v6083 = vunpack.c.l.b16 %v5951
    %v6084 = vunpack.c.l.b16 %v5952
    %v6085 = vunpack.c.l.b16 %v5953
    %v6086 = vunpack.c.l.b16 %v5954
    %v6087 = vunpack.c.l.b16 %v5955
    %v6088 = vunpack.c.l.b16 %v5956
    %v6089 = vunpack.c.l.b16 %v5957
    %v6090 = vunpack.c.l.b16 %v5958
    %v6091 = vunpack.c.l.b16 %v5959
    %v6092 = vunpack.c.l.b16 %v5960
    %v6093 = vunpack.c.l.b16 %v5961
    %v6094 = vunpack.c.l.b16 %v5962
    %v6095 = vunpack.c.l.b16 %v5963
    %v6096 = vunpack.c.l.b16 %v5964
    %v6097 = vunpack.c.l.b16 %v5965
    %v6098 = vunpack.c.l.b16 %v5966
    %v6099 = vunpack.c.l.b16 %v5967
    %v6100 = vunpack.c.l.b16 %v5968
    %v6101 = vunpack.c.l.b16 %v5969
    %v6102 = vunpack.c.l.b16 %v5970
    %v6103 = vunpack.c.l.b16 %v5971
    %v6104 = vpack.c.b16 %v6041, %v6040
    %v6105 = vpack.c.b16 %v6043, %v6042
    %v6106 = vpack.c.b16 %v6045, %v6044
    %v6107 = vpack.c.b16 %v6047, %v6046
    %v6108 = vpack.c.b16 %v6049, %v6048
    %v6109 = vpack.c.b16 %v6051, %v6050
    %v6110 = vpack.c.b16 %v6053, %v6052
    %v6111 = vpack.c.b16 %v6055, %v6054
    %v6112 = vpack.c.b16 %v6057, %v6056
    %v6113 = vpack.c.b16 %v6059, %v6058
    %v6114 = vpack.c.b16 %v6061, %v6060
    %v6115 = vpack.c.b16 %v6063, %v6062
    %v6116 = vpack.c.b16 %v6065, %v6064
    %v6117 = vpack.c.b16 %v6067, %v6066
    %v6118 = vpack.c.b16 %v6069, %v6068
    %v6119 = vpack.c.b16 %v6071, %v6070
    %v6120 = vpack.c.b16 %v6073, %v6072
    %v6121 = vpack.c.b16 %v6075, %v6074
    %v6122 = vpack.c.b16 %v6077, %v6076
    %v6123 = vpack.c.b16 %v6079, %v6078
    %v6124 = vpack.c.b16 %v6081, %v6080
    %v6125 = vpack.c.b16 %v6083, %v6082
    %v6126 = vpack.c.b16 %v6085, %v6084
    %v6127 = vpack.c.b16 %v6087, %v6086
    %v6128 = vpack.c.b16 %v6089, %v6088
    %v6129 = vpack.c.b16 %v6091, %v6090
    %v6130 = vpack.c.b16 %v6093, %v6092
    %v6131 = vpack.c.b16 %v6095, %v6094
    %v6132 = vpack.c.b16 %v6097, %v6096
    %v6133 = vpack.c.b16 %v6099, %v6098
    %v6134 = vpack.c.b16 %v6101, %v6100
    %v6135 = vpack.c.b16 %v6103, %v6102
    %6168 = vmatprep.subr.bf16.mxu0 0
    %6169 = vmatpush1.bf16.msra.mxu0 %v6104
    %6170 = vmatprep.subr.bf16.mxu0 0
    %6171 = vmatpush1.bf16.msra.mxu0 %v6105
    %6172 = vmatprep.subr.bf16.mxu0 0
    %6173 = vmatpush1.bf16.msra.mxu0 %v6106
    %6174 = vmatprep.subr.bf16.mxu0 0
    %6175 = vmatpush1.bf16.msra.mxu0 %v6107
    %6176 = vmatprep.subr.bf16.mxu0 0
    %6177 = vmatpush1.bf16.msra.mxu0 %v6108
    %6178 = vmatprep.subr.bf16.mxu0 0
    %6179 = vmatpush1.bf16.msra.mxu0 %v6109
    %6180 = vmatprep.subr.bf16.mxu0 0
    %6181 = vmatpush1.bf16.msra.mxu0 %v6110
    %6182 = vmatprep.subr.bf16.mxu0 0
    %6183 = vmatpush1.bf16.msra.mxu0 %v6111
    %6184 = vmatprep.subr.bf16.mxu0 0
    %6185 = vmatpush1.bf16.msra.mxu0 %v6112
    %6186 = vmatprep.subr.bf16.mxu0 0
    %6187 = vmatpush1.bf16.msra.mxu0 %v6113
    %6188 = vmatprep.subr.bf16.mxu0 0
    %6189 = vmatpush1.bf16.msra.mxu0 %v6114
    %6190 = vmatprep.subr.bf16.mxu0 0
    %6191 = vmatpush1.bf16.msra.mxu0 %v6115
    %6192 = vmatprep.subr.bf16.mxu0 0
    %6193 = vmatpush1.bf16.msra.mxu0 %v6116
    %6194 = vmatprep.subr.bf16.mxu0 0
    %6195 = vmatpush1.bf16.msra.mxu0 %v6117
    %6196 = vmatprep.subr.bf16.mxu0 0
    %6197 = vmatpush1.bf16.msra.mxu0 %v6118
    %6198 = vmatprep.subr.bf16.mxu0 0
    %6199 = vmatpush1.bf16.msra.mxu0 %v6119
    %6200 = vmatprep.mubr.bf16.mxu0 %v5905
    %6201 = vmatmul.mubr.bf16.gmra.mrb[0].mxu0 %v5904
    %v6202 = vpop.f32.mrb[0].mxu0
    %v6203 = vadd.f32 %v5975, %v6202
    %v6204 = vpop.f32.mrb[0].mxu0
    %v6205 = vpop.f32.mrb[0].mxu0
    %v6206 = vadd.f32 %v5975, %v6205
    %v6207 = vpop.f32.mrb[0].mxu0
    %6208 = vdwg.mxu0
    %6209 = vmatprep.subr.bf16.mxu0 0
    %6210 = vmatpush1.bf16.msra.mxu0 %v6120
    %6211 = vmatprep.subr.bf16.mxu0 0
    %6212 = vmatpush1.bf16.msra.mxu0 %v6121
    %6213 = vmatprep.subr.bf16.mxu0 0
    %6214 = vmatpush1.bf16.msra.mxu0 %v6122
    %6215 = vmatprep.subr.bf16.mxu0 0
    %6216 = vmatpush1.bf16.msra.mxu0 %v6123
    %6217 = vmatprep.subr.bf16.mxu0 0
    %6218 = vmatpush1.bf16.msra.mxu0 %v6124
    %6219 = vmatprep.subr.bf16.mxu0 0
    %6220 = vmatpush1.bf16.msra.mxu0 %v6125
    %6221 = vmatprep.subr.bf16.mxu0 0
    %6222 = vmatpush1.bf16.msra.mxu0 %v6126
    %6223 = vmatprep.subr.bf16.mxu0 0
    %6224 = vmatpush1.bf16.msra.mxu0 %v6127
    %6225 = vmatprep.subr.bf16.mxu0 0
    %6226 = vmatpush1.bf16.msra.mxu0 %v6128
    %6227 = vmatprep.subr.bf16.mxu0 0
    %6228 = vmatpush1.bf16.msra.mxu0 %v6129
    %6229 = vmatprep.subr.bf16.mxu0 0
    %6230 = vmatpush1.bf16.msra.mxu0 %v6130
    %6231 = vmatprep.subr.bf16.mxu0 0
    %6232 = vmatpush1.bf16.msra.mxu0 %v6131
    %6233 = vmatprep.subr.bf16.mxu0 0
    %6234 = vmatpush1.bf16.msra.mxu0 %v6132
    %6235 = vmatprep.subr.bf16.mxu0 0
    %6236 = vmatpush1.bf16.msra.mxu0 %v6133
    %6237 = vmatprep.subr.bf16.mxu0 0
    %6238 = vmatpush1.bf16.msra.mxu0 %v6134
    %6239 = vmatprep.subr.bf16.mxu0 0
    %6240 = vmatpush1.bf16.msra.mxu0 %v6135
    %6241 = vmatprep.mubr.bf16.mxu0 %v5907
    %6242 = vmatmul.mubr.bf16.gmra.mrb[0].mxu0 %v5906
    %v6243 = vpop.f32.mrb[0].mxu0
    %v6244 = vadd.f32 %v6203, %v6243
    %v6245 = vpop.f32.mrb[0].mxu0
    %v6246 = vpop.f32.mrb[0].mxu0
    %v6247 = vadd.f32 %v6206, %v6246
    %v6248 = vpop.f32.mrb[0].mxu0
    %6249 = vdwg.mxu0
    %v6250 = vmax.f32 %v6244, 0.0
    %v6251 = vmax.f32 %v6247, 0.0
    %v6252 = vpack.c.bf16 %v6251, %v6250
    %v6253 = vld [vmem:[#allocation8] sm:$0xf]
    %v6254 = vld [vmem:[#allocation8 + $0x4] sm:$0xf]
    %v6255 = vld [vmem:[#allocation8 + $0x8] sm:$0xf]
    %v6256 = vld [vmem:[#allocation8 + $0xc] sm:$0xf]
    %v6257 = vld [vmem:[#allocation8 + $0x10] sm:$0xf]
    %v6258 = vld [vmem:[#allocation8 + $0x14] sm:$0xf]
    %v6259 = vld [vmem:[#allocation8 + $0x18] sm:$0xf]
    %v6260 = vld [vmem:[#allocation8 + $0x1c] sm:$0xf]
    %v6261 = vld [vmem:[#allocation8 + $0x20] sm:$0xf]
    %v6262 = vld [vmem:[#allocation8 + $0x24] sm:$0xf]
    %v6263 = vld [vmem:[#allocation8 + $0x28] sm:$0xf]
    %v6264 = vld [vmem:[#allocation8 + $0x2c] sm:$0xf]
    %v6265 = vld [vmem:[#allocation8 + $0x30] sm:$0xf]
    %v6266 = vld [vmem:[#allocation8 + $0x34] sm:$0xf]
    %v6267 = vld [vmem:[#allocation8 + $0x38] sm:$0xf]
    %v6268 = vld [vmem:[#allocation8 + $0x3c] sm:$0xf]
    %v6269 = vlaneseq
    %v6270 = vshrl.u32 %v6269, 7
    %v6271 = vsub.s32 0, %v6270
    %v6272 = vrot.slane %v90, %v6271
    %v6289 = vunpack.c.l.b16 %v6253
    %v6290 = vunpack.c.l.b16 %v6254
    %v6291 = vunpack.c.l.b16 %v6255
    %v6292 = vunpack.c.l.b16 %v6256
    %v6293 = vunpack.c.l.b16 %v6257
    %v6294 = vunpack.c.l.b16 %v6258
    %v6295 = vunpack.c.l.b16 %v6259
    %v6296 = vunpack.c.l.b16 %v6260
    %v6297 = vunpack.c.l.b16 %v6261
    %v6298 = vunpack.c.l.b16 %v6262
    %v6299 = vunpack.c.l.b16 %v6263
    %v6300 = vunpack.c.l.b16 %v6264
    %v6301 = vunpack.c.l.b16 %v6265
    %v6302 = vunpack.c.l.b16 %v6266
    %v6303 = vunpack.c.l.b16 %v6267
    %v6304 = vunpack.c.l.b16 %v6268
    %v6305 = vpack.c.b16 %v6290, %v6289
    %v6306 = vpack.c.b16 %v6292, %v6291
    %v6307 = vpack.c.b16 %v6294, %v6293
    %v6308 = vpack.c.b16 %v6296, %v6295
    %v6309 = vpack.c.b16 %v6298, %v6297
    %v6310 = vpack.c.b16 %v6300, %v6299
    %v6311 = vpack.c.b16 %v6302, %v6301
    %v6312 = vpack.c.b16 %v6304, %v6303
    %6321 = vmatprep.subr.bf16.mxu0 0
    %6322 = vmatpush1.bf16.msra.mxu0 %v6305
    %6323 = vmatprep.subr.bf16.mxu0 0
    %6324 = vmatpush1.bf16.msra.mxu0 %v6306
    %6325 = vmatprep.subr.bf16.mxu0 0
    %6326 = vmatpush1.bf16.msra.mxu0 %v6307
    %6327 = vmatprep.subr.bf16.mxu0 0
    %6328 = vmatpush1.bf16.msra.mxu0 %v6308
    %6329 = vmatprep.subr.bf16.mxu0 0
    %6330 = vmatpush1.bf16.msra.mxu0 %v6309
    %6331 = vmatprep.subr.bf16.mxu0 0
    %6332 = vmatpush1.bf16.msra.mxu0 %v6310
    %6333 = vmatprep.subr.bf16.mxu0 0
    %6334 = vmatpush1.bf16.msra.mxu0 %v6311
    %6335 = vmatprep.subr.bf16.mxu0 0
    %6336 = vmatpush1.bf16.msra.mxu0 %v6312
    %6337 = vmatprep.subr.bf16.mxu0 0
    %6338 = vmatpush1.bf16.msra.mxu0 0
    %6339 = vmatprep.subr.bf16.mxu0 0
    %6340 = vmatpush1.bf16.msra.mxu0 0
    %6341 = vmatprep.subr.bf16.mxu0 0
    %6342 = vmatpush1.bf16.msra.mxu0 0
    %6343 = vmatprep.subr.bf16.mxu0 0
    %6344 = vmatpush1.bf16.msra.mxu0 0
    %6345 = vmatprep.subr.bf16.mxu0 0
    %6346 = vmatpush1.bf16.msra.mxu0 0
    %6347 = vmatprep.subr.bf16.mxu0 0
    %6348 = vmatpush1.bf16.msra.mxu0 0
    %6349 = vmatprep.subr.bf16.mxu0 0
    %6350 = vmatpush1.bf16.msra.mxu0 0
    %6351 = vmatprep.subr.bf16.mxu0 0
    %6352 = vmatpush1.bf16.msra.mxu0 0
    %6353 = vmatprep.mubr.bf16.mxu0 0
    %6354 = vmatmul.mubr.bf16.gmra.mrb[0].mxu0 %v6252
    %v6355 = vpop.f32.mrb[0].mxu0
    %v6356 = vadd.f32 %v6272, %v6355
    %v6357 = vpop.f32.mrb[0].mxu0
    %v6358 = vpop.f32.mrb[0].mxu0
    %v6359 = vadd.f32 %v6272, %v6358
    %v6360 = vpop.f32.mrb[0].mxu0
    %6361 = vdwg.mxu0
    %6362 = vst [vmem:[#allocation11] sm:$0xff] %v6356
    %6363 = vst [vmem:[#allocation11 + $0x8] sm:$0xff] %v6359
    // Predicated region
    $region42: #{tpu_custom_call.1} parent=1 // pred_check
      _
    $region43: #{tpu_custom_call.1} parent=1 // pred_check_branch
      %6365 = sbr.rel (0) target = $region45
    $region44: #{tpu_custom_call.1} parent=1 // pred_region
      %s6367 = ssub.s32 256, 256
      %6368 = vsyncadd [#allocation4], %s6367
      %s6369 = sshll.u32 [#allocation11], 4
      %s6370 = int_to_ptr.vmem [resolvable:$true] %s6369
      %6375 = dma.vmem_to_hbm [thread:$0]  %s6370, 256, %s5, [#allocation4], 128, 128, 8
    $region45: #{tpu_custom_call.1} parent=1 // pred_fallthru
      _
    // Predicated region
    $region46: #{tpu_custom_call.1} parent=1 // pred_check
      _
    $region47: #{tpu_custom_call.1} parent=1 // pred_check_branch
      %6377 = sbr.rel (0) target = $region49
    $region48: #{tpu_custom_call.1} parent=1 // pred_region
      %6378 = dma.done [#allocation4], 256
    $region49: #{tpu_custom_call.1} parent=1 // pred_fallthru
      _
    %6379 = vsyncpa [#allocation3], 1
    %6380 = vsyncpa [#allocation6], 1
    %6381 = vsyncpa [#allocation9], 1
    %6382 = vsyncpa [#allocation4], 1

</llo_original>
